<compile_context>
chip_gen: v7x
topology: tpu7x:2x2x1
jax: 0.10.0
libtpu: 0.0.40
codegen_flags: <defaults>
</compile_context>

<pallas_src>
import functools

import jax
import jax.numpy as jnp
from jax.experimental import pallas as pl
from jax.experimental.pallas import tpu as pltpu

_VMEM_LIMIT = 48 * 1024 * 1024  # safe on v7x (64 MiB physical) and v5e/v6e


def _pick_tile(dim, target, align):
    """Largest block size <= target that divides `dim` and is `align`-aligned,
    or the full dim when dim <= target / no aligned divisor exists."""
    if dim <= target:
        return dim
    t = (target // align) * align
    while t >= align:
        if dim % t == 0:
            return t
        t -= align
    return dim


# ----------------------------------------------------------------------------
# Tiled linear:  y = act(x @ w + b)
# ----------------------------------------------------------------------------
def _linear_kernel(x_ref, w_ref, b_ref, o_ref, acc_ref, *, activation):
    @pl.when(pl.program_id(2) == 0)
    def _():
        acc_ref[...] = jnp.zeros_like(acc_ref)

    acc_ref[...] += jnp.dot(x_ref[...], w_ref[...],
                            preferred_element_type=jnp.float32)

    @pl.when(pl.program_id(2) == pl.num_programs(2) - 1)
    def _():
        y = acc_ref[...] + b_ref[...].astype(jnp.float32)
        if activation == "relu":
            y = jnp.maximum(y, 0.0)
        o_ref[...] = y.astype(o_ref.dtype)


def linear(x, w, b, activation=None):
    """x: (M, K), w: (K, N), b: (N,) -> (M, N)."""
    M, K = x.shape
    N = w.shape[1]
    tm = _pick_tile(M, 256, 8)
    tk = _pick_tile(K, 512, 128)
    tn = _pick_tile(N, 512, 128)
    return pl.pallas_call(
        functools.partial(_linear_kernel, activation=activation),
        out_shape=jax.ShapeDtypeStruct((M, N), x.dtype),
        grid=(M // tm, N // tn, K // tk),
        in_specs=[
            pl.BlockSpec((tm, tk), lambda i, j, k: (i, k)),
            pl.BlockSpec((tk, tn), lambda i, j, k: (k, j)),
            pl.BlockSpec((1, tn), lambda i, j, k: (0, j)),
        ],
        out_specs=pl.BlockSpec((tm, tn), lambda i, j, k: (i, j)),
        scratch_shapes=[pltpu.VMEM((tm, tn), jnp.float32)],
        compiler_params=pltpu.CompilerParams(
            dimension_semantics=("parallel", "parallel", "arbitrary"),
            vmem_limit_bytes=_VMEM_LIMIT),
    )(x, w, b.reshape(1, N))


# ----------------------------------------------------------------------------
# Shared LayerNorm epilogue (f32 stats)
# ----------------------------------------------------------------------------
def _ln_epilogue(y, g_ref, b_ref, eps):
    mu = jnp.mean(y, axis=-1, keepdims=True)
    var = jnp.mean((y - mu) ** 2, axis=-1, keepdims=True)
    yn = (y - mu) * jax.lax.rsqrt(var + eps)
    return yn * g_ref[...].astype(jnp.float32) + b_ref[...].astype(jnp.float32)


# ----------------------------------------------------------------------------
# Fused output-projection + residual add + LayerNorm:  LN(res + o @ w + b)
# ----------------------------------------------------------------------------
def _proj_add_ln_kernel(o_ref, w_ref, b_ref, r_ref, g_ref, be_ref, out_ref, *, eps):
    y = jnp.dot(o_ref[...], w_ref[...], preferred_element_type=jnp.float32)
    y = y + b_ref[...].astype(jnp.float32) + r_ref[...].astype(jnp.float32)
    out_ref[...] = _ln_epilogue(y, g_ref, be_ref, eps).astype(out_ref.dtype)


def proj_add_layernorm(o, w, b, res, gamma, beta, eps=1e-5):
    """o: (M, D), w: (D, D), res: (M, D) -> LN(res + o @ w + b)."""
    M, K = o.shape
    N = w.shape[1]
    tm = _pick_tile(M, 256, 8)
    return pl.pallas_call(
        functools.partial(_proj_add_ln_kernel, eps=eps),
        out_shape=jax.ShapeDtypeStruct((M, N), o.dtype),
        grid=(M // tm,),
        in_specs=[
            pl.BlockSpec((tm, K), lambda i: (i, 0)),
            pl.BlockSpec((K, N), lambda i: (0, 0)),
            pl.BlockSpec((1, N), lambda i: (0, 0)),
            pl.BlockSpec((tm, N), lambda i: (i, 0)),
            pl.BlockSpec((1, N), lambda i: (0, 0)),
            pl.BlockSpec((1, N), lambda i: (0, 0)),
        ],
        out_specs=pl.BlockSpec((tm, N), lambda i: (i, 0)),
        compiler_params=pltpu.CompilerParams(
            dimension_semantics=("parallel",),
            vmem_limit_bytes=_VMEM_LIMIT),
    )(o, w, b.reshape(1, N), res, gamma.reshape(1, N), beta.reshape(1, N))


# ----------------------------------------------------------------------------
# Fused FFN + residual add + LayerNorm:  LN(x + relu(x@w1+b1) @ w2 + b2)
# (the (tm, d_ff) intermediate stays in VMEM, never hits HBM)
# ----------------------------------------------------------------------------
def _ffn_add_ln_kernel(x_ref, w1_ref, b1_ref, w2_ref, b2_ref, g_ref, be_ref,
                       out_ref, *, eps):
    x = x_ref[...]
    h = jnp.dot(x, w1_ref[...], preferred_element_type=jnp.float32)
    h = jnp.maximum(h + b1_ref[...].astype(jnp.float32), 0.0)
    y = jnp.dot(h.astype(x.dtype), w2_ref[...],
                preferred_element_type=jnp.float32)
    y = y + b2_ref[...].astype(jnp.float32) + x.astype(jnp.float32)
    out_ref[...] = _ln_epilogue(y, g_ref, be_ref, eps).astype(out_ref.dtype)


def ffn_add_layernorm(x, w1, b1, w2, b2, gamma, beta, eps=1e-5):
    M, D = x.shape
    DFF = w1.shape[1]
    tm = _pick_tile(M, 256, 8)
    return pl.pallas_call(
        functools.partial(_ffn_add_ln_kernel, eps=eps),
        out_shape=jax.ShapeDtypeStruct((M, D), x.dtype),
        grid=(M // tm,),
        in_specs=[
            pl.BlockSpec((tm, D), lambda i: (i, 0)),
            pl.BlockSpec((D, DFF), lambda i: (0, 0)),
            pl.BlockSpec((1, DFF), lambda i: (0, 0)),
            pl.BlockSpec((DFF, D), lambda i: (0, 0)),
            pl.BlockSpec((1, D), lambda i: (0, 0)),
            pl.BlockSpec((1, D), lambda i: (0, 0)),
            pl.BlockSpec((1, D), lambda i: (0, 0)),
        ],
        out_specs=pl.BlockSpec((tm, D), lambda i: (i, 0)),
        compiler_params=pltpu.CompilerParams(
            dimension_semantics=("parallel",),
            vmem_limit_bytes=_VMEM_LIMIT),
    )(x, w1, b1.reshape(1, DFF), w2, b2.reshape(1, D),
      gamma.reshape(1, D), beta.reshape(1, D))


# ----------------------------------------------------------------------------
# Plain LayerNorm (final decoder norm), row-tiled
# ----------------------------------------------------------------------------
def _ln_kernel(x_ref, g_ref, b_ref, o_ref, *, eps):
    y = x_ref[...].astype(jnp.float32)
    o_ref[...] = _ln_epilogue(y, g_ref, b_ref, eps).astype(o_ref.dtype)


def layernorm(x, gamma, beta, eps=1e-5):
    M, D = x.shape
    tm = _pick_tile(M, 512, 8)
    return pl.pallas_call(
        functools.partial(_ln_kernel, eps=eps),
        out_shape=jax.ShapeDtypeStruct((M, D), x.dtype),
        grid=(M // tm,),
        in_specs=[
            pl.BlockSpec((tm, D), lambda i: (i, 0)),
            pl.BlockSpec((1, D), lambda i: (0, 0)),
            pl.BlockSpec((1, D), lambda i: (0, 0)),
        ],
        out_specs=pl.BlockSpec((tm, D), lambda i: (i, 0)),
        compiler_params=pltpu.CompilerParams(
            dimension_semantics=("parallel",)),
    )(x, gamma.reshape(1, D), beta.reshape(1, D))


# ----------------------------------------------------------------------------
# Attention core: several heads per grid step, optional additive mask
# ----------------------------------------------------------------------------
def _attn_kernel(q_ref, k_ref, v_ref, *rest, scale, has_mask):
    if has_mask:
        m_ref, o_ref = rest
    else:
        (o_ref,) = rest
    # Fold softmax scale into Q (Lq*dh elems instead of Lq*Lk).
    q = q_ref[...].astype(jnp.float32) * scale
    k = k_ref[...].astype(jnp.float32)
    s = jnp.einsum("bqd,bkd->bqk", q, k,
                   preferred_element_type=jnp.float32)          # no k.T transpose
    if has_mask:
        s = s + m_ref[...].astype(jnp.float32)                  # (Lq,Lk) broadcast
    m = jnp.max(s, axis=-1, keepdims=True)
    p = jnp.exp(s - m)
    denom = jnp.sum(p, axis=-1, keepdims=True)
    inv = pl.reciprocal(denom, approx=True)                     # EUP, frees VALU
    pw = (p * inv).astype(v_ref.dtype)
    o = jnp.einsum("bqk,bkd->bqd", pw, v_ref[...],
                   preferred_element_type=jnp.float32)
    o_ref[...] = o.astype(o_ref.dtype)


def attention(q, k, v, mask):
    """q: (BH, Lq, dh), k/v: (BH, Lk, dh), mask: (Lq, Lk) additive float or None."""
    BH, Lq, dh = q.shape
    Lk = k.shape[1]
    scale = 1.0 / float(dh) ** 0.5
    has_mask = mask is not None

    # process several heads per grid step to amortize per-step overhead
    g = min(BH, 8)
    while BH % g != 0:
        g -= 1

    in_specs = [
        pl.BlockSpec((g, Lq, dh), lambda i: (i, 0, 0)),
        pl.BlockSpec((g, Lk, dh), lambda i: (i, 0, 0)),
        pl.BlockSpec((g, Lk, dh), lambda i: (i, 0, 0)),
    ]
    args = [q, k, v]
    if has_mask:
        in_specs.append(pl.BlockSpec((Lq, Lk), lambda i: (0, 0)))
        args.append(mask)

    return pl.pallas_call(
        functools.partial(_attn_kernel, scale=scale, has_mask=has_mask),
        out_shape=jax.ShapeDtypeStruct((BH, Lq, dh), q.dtype),
        grid=(BH // g,),
        in_specs=in_specs,
        out_specs=pl.BlockSpec((g, Lq, dh), lambda i: (i, 0, 0)),
        compiler_params=pltpu.CompilerParams(
            dimension_semantics=("parallel",),
            vmem_limit_bytes=_VMEM_LIMIT),
    )(*args)


# ----------------------------------------------------------------------------
# Decoder built from the Pallas primitives
# ----------------------------------------------------------------------------
def attention_heads(x_q, x_kv, p, mask, n_heads, is_self):
    """Returns the concatenated per-head outputs (B*Lq, D), before out-proj."""
    B, Lq, D = x_q.shape
    Lk = x_kv.shape[1]
    dh = D // n_heads

    if is_self:
        qkv = linear(x_q.reshape(B * Lq, D), p["wqkv"], p["bqkv"])   # fused (D,3D)
        q, k, v = qkv[:, :D], qkv[:, D:2 * D], qkv[:, 2 * D:]
    else:
        q = linear(x_q.reshape(B * Lq, D), p["wq"], p["bq"])
        kv = linear(x_kv.reshape(B * Lk, D), p["wkv"], p["bkv"])     # fused (D,2D)
        k, v = kv[:, :D], kv[:, D:]

    def split_heads(t, L):
        return (t.reshape(B, L, n_heads, dh)
                 .transpose(0, 2, 1, 3)
                 .reshape(B * n_heads, L, dh))

    o = attention(split_heads(q, Lq), split_heads(k, Lk), split_heads(v, Lk), mask)
    return (o.reshape(B, n_heads, Lq, dh)
             .transpose(0, 2, 1, 3)
             .reshape(B * Lq, D))


def decoder_layer(x, cross, p, x_mask, cross_mask, n_heads):
    B, L, D = x.shape
    x_flat = x.reshape(B * L, D)

    # self attention -> fused out-proj + residual + LN
    sa = attention_heads(x, x, p["self_attn"], x_mask, n_heads, is_self=True)
    x_flat = proj_add_layernorm(sa, p["self_attn"]["wo"], p["self_attn"]["bo"],
                                x_flat, p["ln1_g"], p["ln1_b"])

    # cross attention -> fused out-proj + residual + LN
    ca = attention_heads(x_flat.reshape(B, L, D), cross, p["cross_attn"],
                         cross_mask, n_heads, is_self=False)
    x_flat = proj_add_layernorm(ca, p["cross_attn"]["wo"], p["cross_attn"]["bo"],
                                x_flat, p["ln2_g"], p["ln2_b"])

    # fused FFN (conv1/conv2 with kernel_size=1) + residual + LN
    x_flat = ffn_add_layernorm(x_flat, p["w1"], p["b1"], p["w2"], p["b2"],
                               p["ln3_g"], p["ln3_b"])
    return x_flat.reshape(B, L, D)


def decoder_forward(x, cross, params, x_mask=None, cross_mask=None, n_heads=4):
    B, L, D = x.shape
    for lp in params["layers"]:
        x = decoder_layer(x, cross, lp, x_mask, cross_mask, n_heads)
    # final Decoder norm layer (plain LN, no zero-residual read)
    x = layernorm(x.reshape(B * L, D),
                  params["norm_g"], params["norm_b"]).reshape(B, L, D)
    return x


# ----------------------------------------------------------------------------
# Deterministic parameter init (QKV / KV projections stored pre-fused)
# ----------------------------------------------------------------------------
def init_params(key, num_layers, d_model, d_ff):
    def dense(k, fan_in, fan_out):
        kw, _ = jax.random.split(k)
        w = jax.random.normal(kw, (fan_in, fan_out), jnp.float32) * 0.02
        b = jnp.zeros((fan_out,), jnp.float32)
        return w, b

    layers = []
    keys = jax.random.split(key, num_layers + 1)
    for lk in keys[:num_layers]:
        ks = jax.random.split(lk, 8)

        wqkv, bqkv = dense(ks[0], d_model, 3 * d_model)
        wo_s, bo_s = dense(ks[1], d_model, d_model)
        wq_c, bq_c = dense(ks[2], d_model, d_model)
        wkv_c, bkv_c = dense(ks[3], d_model, 2 * d_model)
        wo_c, bo_c = dense(ks[4], d_model, d_model)
        w1, b1 = dense(ks[5], d_model, d_ff)
        w2, b2 = dense(ks[6], d_ff, d_model)

        layers.append(dict(
            self_attn=dict(wqkv=wqkv, bqkv=bqkv, wo=wo_s, bo=bo_s),
            cross_attn=dict(wq=wq_c, bq=bq_c, wkv=wkv_c, bkv=bkv_c,
                            wo=wo_c, bo=bo_c),
            w1=w1, b1=b1, w2=w2, b2=b2,
            ln1_g=jnp.ones((d_model,), jnp.float32),
            ln1_b=jnp.zeros((d_model,), jnp.float32),
            ln2_g=jnp.ones((d_model,), jnp.float32),
            ln2_b=jnp.zeros((d_model,), jnp.float32),
            ln3_g=jnp.ones((d_model,), jnp.float32),
            ln3_b=jnp.zeros((d_model,), jnp.float32),
        ))
    return dict(
        layers=layers,
        norm_g=jnp.ones((d_model,), jnp.float32),
        norm_b=jnp.zeros((d_model,), jnp.float32),
    )


# ----------------------------------------------------------------------------
if __name__ == "__main__":
    B, L, S, D, H, DFF, NLAYERS = 2, 8, 8, 32, 4, 64, 2

    key = jax.random.PRNGKey(0)
    kx, kc, kp = jax.random.split(key, 3)
    x = jax.random.normal(kx, (B, L, D), jnp.float32)       # decoder input
    cross = jax.random.normal(kc, (B, S, D), jnp.float32)   # encoder memory
    params = init_params(kp, NLAYERS, D, DFF)

    # causal additive mask for decoder self-attention; cross_mask = None
    causal = jnp.where(jnp.triu(jnp.ones((L, L), bool), k=1), -1e9, 0.0
                       ).astype(jnp.float32)

    fwd = jax.jit(lambda x, c, p, m: decoder_forward(x, c, p, x_mask=m,
                                                     cross_mask=None,
                                                     n_heads=H))
    out = fwd(x, cross, params, causal)
    jax.block_until_ready(out)
    assert out.shape == (B, L, D)
    print("KERNEL_OK")
</pallas_src>

<mosaic_0001>
module attributes {stable_mosaic.version = 11 : i64} {
  func.func @_linear_kernel(%arg0: i32, %arg1: i32, %arg2: i32, %arg3: memref<16x32xf32, #tpu.memory_space<vmem>>, %arg4: memref<32x96xf32, #tpu.memory_space<vmem>>, %arg5: memref<1x96xf32, #tpu.memory_space<vmem>>, %arg6: memref<16x96xf32, #tpu.memory_space<vmem>>, %arg7: memref<16x96xf32, #tpu.memory_space<vmem>>) attributes {dimension_semantics = [#tpu.dimension_semantics<parallel>, #tpu.dimension_semantics<parallel>, #tpu.dimension_semantics<arbitrary>], iteration_bounds = array<i64: 1, 1, 1>, scalar_prefetch = 0 : i64, scratch_operands = 1 : i64, tpu.core_type = #tpu.core_type<tc>, window_params = [{transform_indices = @transform_0, window_bounds = array<i64: 16, 32>}, {transform_indices = @transform_1, window_bounds = array<i64: 32, 96>}, {transform_indices = @transform_2, window_bounds = array<i64: 1, 96>}, {transform_indices = @transform_3, window_bounds = array<i64: 16, 96>}]} {
    %c0_i32 = arith.constant 0 : i32
    %0 = arith.cmpi eq, %arg2, %c0_i32 : i32
    %1 = arith.extui %0 : i1 to i32
    %c0_i32_0 = arith.constant 0 : i32
    %2 = arith.cmpi ne, %1, %c0_i32_0 : i32
    scf.if %2 {
      %cst_10 = arith.constant 0.000000e+00 : f32
      %12 = vector.broadcast %cst_10 : f32 to vector<16x96xf32>
      %c0_11 = arith.constant 0 : index
      %c0_12 = arith.constant 0 : index
      %13 = vector.load %arg7[%c0_11, %c0_12] : memref<16x96xf32, #tpu.memory_space<vmem>>, vector<16x96xf32>
      tpu.vector_store %arg7[%c0_11, %c0_12], %12 {strides = array<i32>} : memref<16x96xf32, #tpu.memory_space<vmem>>, vector<16x96xf32>,
    } else {
    }
    %c0 = arith.constant 0 : index
    %c0_1 = arith.constant 0 : index
    %3 = vector.load %arg7[%c0, %c0_1] : memref<16x96xf32, #tpu.memory_space<vmem>>, vector<16x96xf32>
    %c0_2 = arith.constant 0 : index
    %c0_3 = arith.constant 0 : index
    %4 = vector.load %arg3[%c0_2, %c0_3] : memref<16x32xf32, #tpu.memory_space<vmem>>, vector<16x32xf32>
    %c0_4 = arith.constant 0 : index
    %c0_5 = arith.constant 0 : index
    %5 = vector.load %arg4[%c0_4, %c0_5] : memref<32x96xf32, #tpu.memory_space<vmem>>, vector<32x96xf32>
    %cst = arith.constant dense<0.000000e+00> : vector<16x96xf32>
    %6 = tpu.matmul %4, %5, %cst {dimension_numbers = #tpu.dot_dimension_numbers<[1], [0], [0], [1], [0, 0, 1, 1], [], []>} : vector<16x32xf32>, vector<32x96xf32>, vector<16x96xf32> -> vector<16x96xf32>
    %7 = arith.addf %3, %6 : vector<16x96xf32>
    %c0_6 = arith.constant 0 : index
    %c0_7 = arith.constant 0 : index
    %8 = vector.load %arg7[%c0_6, %c0_7] : memref<16x96xf32, #tpu.memory_space<vmem>>, vector<16x96xf32>
    tpu.vector_store %arg7[%c0_6, %c0_7], %7 {strides = array<i32>} : memref<16x96xf32, #tpu.memory_space<vmem>>, vector<16x96xf32>,
    %c0_i32_8 = arith.constant 0 : i32
    %9 = arith.cmpi eq, %arg2, %c0_i32_8 : i32
    %10 = arith.extui %9 : i1 to i32
    %c0_i32_9 = arith.constant 0 : i32
    %11 = arith.cmpi ne, %10, %c0_i32_9 : i32
    scf.if %11 {
      %c0_10 = arith.constant 0 : index
      %c0_11 = arith.constant 0 : index
      %12 = vector.load %arg7[%c0_10, %c0_11] : memref<16x96xf32, #tpu.memory_space<vmem>>, vector<16x96xf32>
      %c0_12 = arith.constant 0 : index
      %c0_13 = arith.constant 0 : index
      %13 = vector.load %arg5[%c0_12, %c0_13] : memref<1x96xf32, #tpu.memory_space<vmem>>, vector<1x96xf32>
      %14 = vector.broadcast %13 : vector<1x96xf32> to vector<16x96xf32>
      %15 = arith.addf %12, %14 : vector<16x96xf32>
      %c0_14 = arith.constant 0 : index
      %c0_15 = arith.constant 0 : index
      %16 = vector.load %arg6[%c0_14, %c0_15] : memref<16x96xf32, #tpu.memory_space<vmem>>, vector<16x96xf32>
      tpu.vector_store %arg6[%c0_14, %c0_15], %15 {strides = array<i32>} : memref<16x96xf32, #tpu.memory_space<vmem>>, vector<16x96xf32>,
    } else {
    }
    return
  }
  func.func @transform_0(%arg0: i32, %arg1: i32, %arg2: i32) -> (i32, i32) {
    %c0_i32 = arith.constant 0 : i32
    return %arg0, %arg2 : i32, i32
  }
  func.func @transform_1(%arg0: i32, %arg1: i32, %arg2: i32) -> (i32, i32) {
    %c0_i32 = arith.constant 0 : i32
    return %arg2, %arg1 : i32, i32
  }
  func.func @transform_2(%arg0: i32, %arg1: i32, %arg2: i32) -> (i32, i32) {
    %c0_i32 = arith.constant 0 : i32
    %c0_i32_0 = arith.constant 0 : i32
    return %c0_i32, %arg1 : i32, i32
  }
  func.func @transform_3(%arg0: i32, %arg1: i32, %arg2: i32) -> (i32, i32) {
    %c0_i32 = arith.constant 0 : i32
    return %arg0, %arg1 : i32, i32
  }
}

module attributes {stable_mosaic.version = 11 : i64} {
  func.func @_attn_kernel(%arg0: i32, %arg1: memref<8x8x8xf32, #tpu.memory_space<vmem>>, %arg2: memref<8x8x8xf32, #tpu.memory_space<vmem>>, %arg3: memref<8x8x8xf32, #tpu.memory_space<vmem>>, %arg4: memref<8x8xf32, #tpu.memory_space<vmem>>, %arg5: memref<8x8x8xf32, #tpu.memory_space<vmem>>) attributes {dimension_semantics = [#tpu.dimension_semantics<parallel>], iteration_bounds = array<i64: 1>, scalar_prefetch = 0 : i64, scratch_operands = 0 : i64, tpu.core_type = #tpu.core_type<tc>, window_params = [{transform_indices = @transform_0, window_bounds = array<i64: 8, 8, 8>}, {transform_indices = @transform_1, window_bounds = array<i64: 8, 8, 8>}, {transform_indices = @transform_2, window_bounds = array<i64: 8, 8, 8>}, {pipeline_mode = #tpu.pipeline_mode<synchronous>, transform_indices = @transform_3, window_bounds = array<i64: 8, 8>}, {transform_indices = @transform_4, window_bounds = array<i64: 8, 8, 8>}]} {
    %c0 = arith.constant 0 : index
    %c0_0 = arith.constant 0 : index
    %c0_1 = arith.constant 0 : index
    %0 = vector.load %arg1[%c0, %c0_0, %c0_1] : memref<8x8x8xf32, #tpu.memory_space<vmem>>, vector<8x8x8xf32>
    %cst = arith.constant 0.353553385 : f32
    %1 = vector.broadcast %cst : f32 to vector<8x8x8xf32>
    %2 = arith.mulf %0, %1 : vector<8x8x8xf32>
    %c0_2 = arith.constant 0 : index
    %c0_3 = arith.constant 0 : index
    %c0_4 = arith.constant 0 : index
    %3 = vector.load %arg2[%c0_2, %c0_3, %c0_4] : memref<8x8x8xf32, #tpu.memory_space<vmem>>, vector<8x8x8xf32>
    "tpu.trace_start"() <{level = 10 : i32, message = "bqd,bkd->bqk"}> : () -> ()
    %cst_5 = arith.constant dense<0.000000e+00> : vector<8x8x8xf32>
    %4 = tpu.matmul %2, %3, %cst_5 {dimension_numbers = #tpu.dot_dimension_numbers<[2], [2], [1], [1], [0, 0, 0, 1, 1, 1], [0], [0]>} : vector<8x8x8xf32>, vector<8x8x8xf32>, vector<8x8x8xf32> -> vector<8x8x8xf32>
    "tpu.trace_stop"() : () -> ()
    %c0_6 = arith.constant 0 : index
    %c0_7 = arith.constant 0 : index
    %5 = vector.load %arg4[%c0_6, %c0_7] : memref<8x8xf32, #tpu.memory_space<vmem>>, vector<8x8xf32>
    %6 = vector.shape_cast %5 : vector<8x8xf32> to vector<1x8x8xf32>
    %7 = vector.broadcast %6 : vector<1x8x8xf32> to vector<8x8x8xf32>
    %8 = arith.addf %4, %7 : vector<8x8x8xf32>
    %cst_8 = arith.constant dense<0xFF800000> : vector<8x8xf32>
    %9 = vector.multi_reduction <maximumf>, %8, %cst_8 [2] : vector<8x8x8xf32> to vector<8x8xf32>
    %10 = vector.shape_cast %9 : vector<8x8xf32> to vector<8x8x1xf32>
    %11 = vector.broadcast %10 : vector<8x8x1xf32> to vector<8x8x8xf32>
    %12 = arith.subf %8, %11 : vector<8x8x8xf32>
    %13 = math.exp %12 : vector<8x8x8xf32>
    %cst_9 = arith.constant dense<0.000000e+00> : vector<8x8xf32>
    %14 = vector.multi_reduction <add>, %13, %cst_9 [2] : vector<8x8x8xf32> to vector<8x8xf32>
    %15 = vector.shape_cast %14 : vector<8x8xf32> to vector<8x8x1xf32>
    %16 = tpu.reciprocal %15 {approx = true} : vector<8x8x1xf32> -> vector<8x8x1xf32>
    %17 = vector.broadcast %16 : vector<8x8x1xf32> to vector<8x8x8xf32>
    %18 = arith.mulf %13, %17 : vector<8x8x8xf32>
    %c0_10 = arith.constant 0 : index
    %c0_11 = arith.constant 0 : index
    %c0_12 = arith.constant 0 : index
    %19 = vector.load %arg3[%c0_10, %c0_11, %c0_12] : memref<8x8x8xf32, #tpu.memory_space<vmem>>, vector<8x8x8xf32>
    "tpu.trace_start"() <{level = 10 : i32, message = "bqk,bkd->bqd"}> : () -> ()
    %cst_13 = arith.constant dense<0.000000e+00> : vector<8x8x8xf32>
    %20 = tpu.matmul %18, %19, %cst_13 {dimension_numbers = #tpu.dot_dimension_numbers<[2], [1], [1], [2], [0, 0, 0, 1, 1, 2], [0], [0]>} : vector<8x8x8xf32>, vector<8x8x8xf32>, vector<8x8x8xf32> -> vector<8x8x8xf32>
    "tpu.trace_stop"() : () -> ()
    %c0_14 = arith.constant 0 : index
    %c0_15 = arith.constant 0 : index
    %c0_16 = arith.constant 0 : index
    %21 = vector.load %arg5[%c0_14, %c0_15, %c0_16] : memref<8x8x8xf32, #tpu.memory_space<vmem>>, vector<8x8x8xf32>
    tpu.vector_store %arg5[%c0_14, %c0_15, %c0_16], %20 {strides = array<i32>} : memref<8x8x8xf32, #tpu.memory_space<vmem>>, vector<8x8x8xf32>,
    return
  }
  func.func @transform_0(%arg0: i32) -> (i32, i32, i32) {
    %c0_i32 = arith.constant 0 : i32
    %c0_i32_0 = arith.constant 0 : i32
    %c0_i32_1 = arith.constant 0 : i32
    return %arg0, %c0_i32, %c0_i32_0 : i32, i32, i32
  }
  func.func @transform_1(%arg0: i32) -> (i32, i32, i32) {
    %c0_i32 = arith.constant 0 : i32
    %c0_i32_0 = arith.constant 0 : i32
    %c0_i32_1 = arith.constant 0 : i32
    return %arg0, %c0_i32, %c0_i32_0 : i32, i32, i32
  }
  func.func @transform_2(%arg0: i32) -> (i32, i32, i32) {
    %c0_i32 = arith.constant 0 : i32
    %c0_i32_0 = arith.constant 0 : i32
    %c0_i32_1 = arith.constant 0 : i32
    return %arg0, %c0_i32, %c0_i32_0 : i32, i32, i32
  }
  func.func @transform_3(%arg0: i32) -> (i32, i32) {
    %c0_i32 = arith.constant 0 : i32
    %c0_i32_0 = arith.constant 0 : i32
    %c0_i32_1 = arith.constant 0 : i32
    return %c0_i32, %c0_i32_0 : i32, i32
  }
  func.func @transform_4(%arg0: i32) -> (i32, i32, i32) {
    %c0_i32 = arith.constant 0 : i32
    %c0_i32_0 = arith.constant 0 : i32
    %c0_i32_1 = arith.constant 0 : i32
    return %arg0, %c0_i32, %c0_i32_0 : i32, i32, i32
  }
}

module attributes {stable_mosaic.version = 11 : i64} {
  func.func @_proj_add_ln_kernel(%arg0: i32, %arg1: memref<16x32xf32, #tpu.memory_space<vmem>>, %arg2: memref<32x32xf32, #tpu.memory_space<vmem>>, %arg3: memref<1x32xf32, #tpu.memory_space<vmem>>, %arg4: memref<16x32xf32, #tpu.memory_space<vmem>>, %arg5: memref<1x32xf32, #tpu.memory_space<vmem>>, %arg6: memref<1x32xf32, #tpu.memory_space<vmem>>, %arg7: memref<16x32xf32, #tpu.memory_space<vmem>>) attributes {dimension_semantics = [#tpu.dimension_semantics<parallel>], iteration_bounds = array<i64: 1>, scalar_prefetch = 0 : i64, scratch_operands = 0 : i64, tpu.core_type = #tpu.core_type<tc>, window_params = [{transform_indices = @transform_0, window_bounds = array<i64: 16, 32>}, {pipeline_mode = #tpu.pipeline_mode<synchronous>, transform_indices = @transform_1, window_bounds = array<i64: 32, 32>}, {pipeline_mode = #tpu.pipeline_mode<synchronous>, transform_indices = @transform_2, window_bounds = array<i64: 1, 32>}, {transform_indices = @transform_3, window_bounds = array<i64: 16, 32>}, {pipeline_mode = #tpu.pipeline_mode<synchronous>, transform_indices = @transform_4, window_bounds = array<i64: 1, 32>}, {pipeline_mode = #tpu.pipeline_mode<synchronous>, transform_indices = @transform_5, window_bounds = array<i64: 1, 32>}, {transform_indices = @transform_6, window_bounds = array<i64: 16, 32>}]} {
    %c0 = arith.constant 0 : index
    %c0_0 = arith.constant 0 : index
    %0 = vector.load %arg1[%c0, %c0_0] : memref<16x32xf32, #tpu.memory_space<vmem>>, vector<16x32xf32>
    %c0_1 = arith.constant 0 : index
    %c0_2 = arith.constant 0 : index
    %1 = vector.load %arg2[%c0_1, %c0_2] : memref<32x32xf32, #tpu.memory_space<vmem>>, vector<32x32xf32>
    %cst = arith.constant dense<0.000000e+00> : vector<16x32xf32>
    %2 = tpu.matmul %0, %1, %cst {dimension_numbers = #tpu.dot_dimension_numbers<[1], [0], [0], [1], [0, 0, 1, 1], [], []>} : vector<16x32xf32>, vector<32x32xf32>, vector<16x32xf32> -> vector<16x32xf32>
    %c0_3 = arith.constant 0 : index
    %c0_4 = arith.constant 0 : index
    %3 = vector.load %arg3[%c0_3, %c0_4] : memref<1x32xf32, #tpu.memory_space<vmem>>, vector<1x32xf32>
    %4 = vector.broadcast %3 : vector<1x32xf32> to vector<16x32xf32>
    %5 = arith.addf %2, %4 : vector<16x32xf32>
    %c0_5 = arith.constant 0 : index
    %c0_6 = arith.constant 0 : index
    %6 = vector.load %arg4[%c0_5, %c0_6] : memref<16x32xf32, #tpu.memory_space<vmem>>, vector<16x32xf32>
    %7 = arith.addf %5, %6 : vector<16x32xf32>
    %cst_7 = arith.constant dense<0.000000e+00> : vector<16xf32>
    %8 = vector.multi_reduction <add>, %7, %cst_7 [1] : vector<16x32xf32> to vector<16xf32>
    %9 = vector.shape_cast %8 : vector<16xf32> to vector<16x1xf32>
    %cst_8 = arith.constant 3.200000e+01 : f32
    %10 = vector.broadcast %cst_8 : f32 to vector<16x1xf32>
    %11 = arith.divf %9, %10 : vector<16x1xf32>
    %12 = vector.broadcast %11 : vector<16x1xf32> to vector<16x32xf32>
    %13 = arith.subf %7, %12 : vector<16x32xf32>
    %14 = arith.mulf %13, %13 : vector<16x32xf32>
    %cst_9 = arith.constant dense<0.000000e+00> : vector<16xf32>
    %15 = vector.multi_reduction <add>, %14, %cst_9 [1] : vector<16x32xf32> to vector<16xf32>
    %16 = vector.shape_cast %15 : vector<16xf32> to vector<16x1xf32>
    %cst_10 = arith.constant 3.200000e+01 : f32
    %17 = vector.broadcast %cst_10 : f32 to vector<16x1xf32>
    %18 = arith.divf %16, %17 : vector<16x1xf32>
    %19 = vector.broadcast %11 : vector<16x1xf32> to vector<16x32xf32>
    %20 = arith.subf %7, %19 : vector<16x32xf32>
    %cst_11 = arith.constant 9.99999974E-6 : f32
    %21 = vector.broadcast %cst_11 : f32 to vector<16x1xf32>
    %22 = arith.addf %18, %21 : vector<16x1xf32>
    %23 = math.rsqrt %22 : vector<16x1xf32>
    %24 = vector.broadcast %23 : vector<16x1xf32> to vector<16x32xf32>
    %25 = arith.mulf %20, %24 : vector<16x32xf32>
    %c0_12 = arith.constant 0 : index
    %c0_13 = arith.constant 0 : index
    %26 = vector.load %arg5[%c0_12, %c0_13] : memref<1x32xf32, #tpu.memory_space<vmem>>, vector<1x32xf32>
    %27 = vector.broadcast %26 : vector<1x32xf32> to vector<16x32xf32>
    %28 = arith.mulf %25, %27 : vector<16x32xf32>
    %c0_14 = arith.constant 0 : index
    %c0_15 = arith.constant 0 : index
    %29 = vector.load %arg6[%c0_14, %c0_15] : memref<1x32xf32, #tpu.memory_space<vmem>>, vector<1x32xf32>
    %30 = vector.broadcast %29 : vector<1x32xf32> to vector<16x32xf32>
    %31 = arith.addf %28, %30 : vector<16x32xf32>
    %c0_16 = arith.constant 0 : index
    %c0_17 = arith.constant 0 : index
    %32 = vector.load %arg7[%c0_16, %c0_17] : memref<16x32xf32, #tpu.memory_space<vmem>>, vector<16x32xf32>
    tpu.vector_store %arg7[%c0_16, %c0_17], %31 {strides = array<i32>} : memref<16x32xf32, #tpu.memory_space<vmem>>, vector<16x32xf32>,
    return
  }
  func.func @transform_0(%arg0: i32) -> (i32, i32) {
    %c0_i32 = arith.constant 0 : i32
    %c0_i32_0 = arith.constant 0 : i32
    return %arg0, %c0_i32 : i32, i32
  }
  func.func @transform_1(%arg0: i32) -> (i32, i32) {
    %c0_i32 = arith.constant 0 : i32
    %c0_i32_0 = arith.constant 0 : i32
    %c0_i32_1 = arith.constant 0 : i32
    return %c0_i32, %c0_i32_0 : i32, i32
  }
  func.func @transform_2(%arg0: i32) -> (i32, i32) {
    %c0_i32 = arith.constant 0 : i32
    %c0_i32_0 = arith.constant 0 : i32
    %c0_i32_1 = arith.constant 0 : i32
    return %c0_i32, %c0_i32_0 : i32, i32
  }
  func.func @transform_3(%arg0: i32) -> (i32, i32) {
    %c0_i32 = arith.constant 0 : i32
    %c0_i32_0 = arith.constant 0 : i32
    return %arg0, %c0_i32 : i32, i32
  }
  func.func @transform_4(%arg0: i32) -> (i32, i32) {
    %c0_i32 = arith.constant 0 : i32
    %c0_i32_0 = arith.constant 0 : i32
    %c0_i32_1 = arith.constant 0 : i32
    return %c0_i32, %c0_i32_0 : i32, i32
  }
  func.func @transform_5(%arg0: i32) -> (i32, i32) {
    %c0_i32 = arith.constant 0 : i32
    %c0_i32_0 = arith.constant 0 : i32
    %c0_i32_1 = arith.constant 0 : i32
    return %c0_i32, %c0_i32_0 : i32, i32
  }
  func.func @transform_6(%arg0: i32) -> (i32, i32) {
    %c0_i32 = arith.constant 0 : i32
    %c0_i32_0 = arith.constant 0 : i32
    return %arg0, %c0_i32 : i32, i32
  }
}

module attributes {stable_mosaic.version = 11 : i64} {
  func.func @_linear_kernel(%arg0: i32, %arg1: i32, %arg2: i32, %arg3: memref<16x32xf32, #tpu.memory_space<vmem>>, %arg4: memref<32x32xf32, #tpu.memory_space<vmem>>, %arg5: memref<1x32xf32, #tpu.memory_space<vmem>>, %arg6: memref<16x32xf32, #tpu.memory_space<vmem>>, %arg7: memref<16x32xf32, #tpu.memory_space<vmem>>) attributes {dimension_semantics = [#tpu.dimension_semantics<parallel>, #tpu.dimension_semantics<parallel>, #tpu.dimension_semantics<arbitrary>], iteration_bounds = array<i64: 1, 1, 1>, scalar_prefetch = 0 : i64, scratch_operands = 1 : i64, tpu.core_type = #tpu.core_type<tc>, window_params = [{transform_indices = @transform_0, window_bounds = array<i64: 16, 32>}, {transform_indices = @transform_1, window_bounds = array<i64: 32, 32>}, {transform_indices = @transform_2, window_bounds = array<i64: 1, 32>}, {transform_indices = @transform_3, window_bounds = array<i64: 16, 32>}]} {
    %c0_i32 = arith.constant 0 : i32
    %0 = arith.cmpi eq, %arg2, %c0_i32 : i32
    %1 = arith.extui %0 : i1 to i32
    %c0_i32_0 = arith.constant 0 : i32
    %2 = arith.cmpi ne, %1, %c0_i32_0 : i32
    scf.if %2 {
      %cst_10 = arith.constant 0.000000e+00 : f32
      %12 = vector.broadcast %cst_10 : f32 to vector<16x32xf32>
      %c0_11 = arith.constant 0 : index
      %c0_12 = arith.constant 0 : index
      %13 = vector.load %arg7[%c0_11, %c0_12] : memref<16x32xf32, #tpu.memory_space<vmem>>, vector<16x32xf32>
      tpu.vector_store %arg7[%c0_11, %c0_12], %12 {strides = array<i32>} : memref<16x32xf32, #tpu.memory_space<vmem>>, vector<16x32xf32>,
    } else {
    }
    %c0 = arith.constant 0 : index
    %c0_1 = arith.constant 0 : index
    %3 = vector.load %arg7[%c0, %c0_1] : memref<16x32xf32, #tpu.memory_space<vmem>>, vector<16x32xf32>
    %c0_2 = arith.constant 0 : index
    %c0_3 = arith.constant 0 : index
    %4 = vector.load %arg3[%c0_2, %c0_3] : memref<16x32xf32, #tpu.memory_space<vmem>>, vector<16x32xf32>
    %c0_4 = arith.constant 0 : index
    %c0_5 = arith.constant 0 : index
    %5 = vector.load %arg4[%c0_4, %c0_5] : memref<32x32xf32, #tpu.memory_space<vmem>>, vector<32x32xf32>
    %cst = arith.constant dense<0.000000e+00> : vector<16x32xf32>
    %6 = tpu.matmul %4, %5, %cst {dimension_numbers = #tpu.dot_dimension_numbers<[1], [0], [0], [1], [0, 0, 1, 1], [], []>} : vector<16x32xf32>, vector<32x32xf32>, vector<16x32xf32> -> vector<16x32xf32>
    %7 = arith.addf %3, %6 : vector<16x32xf32>
    %c0_6 = arith.constant 0 : index
    %c0_7 = arith.constant 0 : index
    %8 = vector.load %arg7[%c0_6, %c0_7] : memref<16x32xf32, #tpu.memory_space<vmem>>, vector<16x32xf32>
    tpu.vector_store %arg7[%c0_6, %c0_7], %7 {strides = array<i32>} : memref<16x32xf32, #tpu.memory_space<vmem>>, vector<16x32xf32>,
    %c0_i32_8 = arith.constant 0 : i32
    %9 = arith.cmpi eq, %arg2, %c0_i32_8 : i32
    %10 = arith.extui %9 : i1 to i32
    %c0_i32_9 = arith.constant 0 : i32
    %11 = arith.cmpi ne, %10, %c0_i32_9 : i32
    scf.if %11 {
      %c0_10 = arith.constant 0 : index
      %c0_11 = arith.constant 0 : index
      %12 = vector.load %arg7[%c0_10, %c0_11] : memref<16x32xf32, #tpu.memory_space<vmem>>, vector<16x32xf32>
      %c0_12 = arith.constant 0 : index
      %c0_13 = arith.constant 0 : index
      %13 = vector.load %arg5[%c0_12, %c0_13] : memref<1x32xf32, #tpu.memory_space<vmem>>, vector<1x32xf32>
      %14 = vector.broadcast %13 : vector<1x32xf32> to vector<16x32xf32>
      %15 = arith.addf %12, %14 : vector<16x32xf32>
      %c0_14 = arith.constant 0 : index
      %c0_15 = arith.constant 0 : index
      %16 = vector.load %arg6[%c0_14, %c0_15] : memref<16x32xf32, #tpu.memory_space<vmem>>, vector<16x32xf32>
      tpu.vector_store %arg6[%c0_14, %c0_15], %15 {strides = array<i32>} : memref<16x32xf32, #tpu.memory_space<vmem>>, vector<16x32xf32>,
    } else {
    }
    return
  }
  func.func @transform_0(%arg0: i32, %arg1: i32, %arg2: i32) -> (i32, i32) {
    %c0_i32 = arith.constant 0 : i32
    return %arg0, %arg2 : i32, i32
  }
  func.func @transform_1(%arg0: i32, %arg1: i32, %arg2: i32) -> (i32, i32) {
    %c0_i32 = arith.constant 0 : i32
    return %arg2, %arg1 : i32, i32
  }
  func.func @transform_2(%arg0: i32, %arg1: i32, %arg2: i32) -> (i32, i32) {
    %c0_i32 = arith.constant 0 : i32
    %c0_i32_0 = arith.constant 0 : i32
    return %c0_i32, %arg1 : i32, i32
  }
  func.func @transform_3(%arg0: i32, %arg1: i32, %arg2: i32) -> (i32, i32) {
    %c0_i32 = arith.constant 0 : i32
    return %arg0, %arg1 : i32, i32
  }
}

module attributes {stable_mosaic.version = 11 : i64} {
  func.func @_ffn_add_ln_kernel(%arg0: i32, %arg1: memref<16x32xf32, #tpu.memory_space<vmem>>, %arg2: memref<32x64xf32, #tpu.memory_space<vmem>>, %arg3: memref<1x64xf32, #tpu.memory_space<vmem>>, %arg4: memref<64x32xf32, #tpu.memory_space<vmem>>, %arg5: memref<1x32xf32, #tpu.memory_space<vmem>>, %arg6: memref<1x32xf32, #tpu.memory_space<vmem>>, %arg7: memref<1x32xf32, #tpu.memory_space<vmem>>, %arg8: memref<16x32xf32, #tpu.memory_space<vmem>>) attributes {dimension_semantics = [#tpu.dimension_semantics<parallel>], iteration_bounds = array<i64: 1>, scalar_prefetch = 0 : i64, scratch_operands = 0 : i64, tpu.core_type = #tpu.core_type<tc>, window_params = [{transform_indices = @transform_0, window_bounds = array<i64: 16, 32>}, {pipeline_mode = #tpu.pipeline_mode<synchronous>, transform_indices = @transform_1, window_bounds = array<i64: 32, 64>}, {pipeline_mode = #tpu.pipeline_mode<synchronous>, transform_indices = @transform_2, window_bounds = array<i64: 1, 64>}, {pipeline_mode = #tpu.pipeline_mode<synchronous>, transform_indices = @transform_3, window_bounds = array<i64: 64, 32>}, {pipeline_mode = #tpu.pipeline_mode<synchronous>, transform_indices = @transform_4, window_bounds = array<i64: 1, 32>}, {pipeline_mode = #tpu.pipeline_mode<synchronous>, transform_indices = @transform_5, window_bounds = array<i64: 1, 32>}, {pipeline_mode = #tpu.pipeline_mode<synchronous>, transform_indices = @transform_6, window_bounds = array<i64: 1, 32>}, {transform_indices = @transform_7, window_bounds = array<i64: 16, 32>}]} {
    %c0 = arith.constant 0 : index
    %c0_0 = arith.constant 0 : index
    %0 = vector.load %arg1[%c0, %c0_0] : memref<16x32xf32, #tpu.memory_space<vmem>>, vector<16x32xf32>
    %c0_1 = arith.constant 0 : index
    %c0_2 = arith.constant 0 : index
    %1 = vector.load %arg2[%c0_1, %c0_2] : memref<32x64xf32, #tpu.memory_space<vmem>>, vector<32x64xf32>
    %cst = arith.constant dense<0.000000e+00> : vector<16x64xf32>
    %2 = tpu.matmul %0, %1, %cst {dimension_numbers = #tpu.dot_dimension_numbers<[1], [0], [0], [1], [0, 0, 1, 1], [], []>} : vector<16x32xf32>, vector<32x64xf32>, vector<16x64xf32> -> vector<16x64xf32>
    %c0_3 = arith.constant 0 : index
    %c0_4 = arith.constant 0 : index
    %3 = vector.load %arg3[%c0_3, %c0_4] : memref<1x64xf32, #tpu.memory_space<vmem>>, vector<1x64xf32>
    %4 = vector.broadcast %3 : vector<1x64xf32> to vector<16x64xf32>
    %5 = arith.addf %2, %4 : vector<16x64xf32>
    %cst_5 = arith.constant 0.000000e+00 : f32
    %6 = vector.broadcast %cst_5 : f32 to vector<16x64xf32>
    %7 = arith.maximumf %5, %6 : vector<16x64xf32>
    %c0_6 = arith.constant 0 : index
    %c0_7 = arith.constant 0 : index
    %8 = vector.load %arg4[%c0_6, %c0_7] : memref<64x32xf32, #tpu.memory_space<vmem>>, vector<64x32xf32>
    %cst_8 = arith.constant dense<0.000000e+00> : vector<16x32xf32>
    %9 = tpu.matmul %7, %8, %cst_8 {dimension_numbers = #tpu.dot_dimension_numbers<[1], [0], [0], [1], [0, 0, 1, 1], [], []>} : vector<16x64xf32>, vector<64x32xf32>, vector<16x32xf32> -> vector<16x32xf32>
    %c0_9 = arith.constant 0 : index
    %c0_10 = arith.constant 0 : index
    %10 = vector.load %arg5[%c0_9, %c0_10] : memref<1x32xf32, #tpu.memory_space<vmem>>, vector<1x32xf32>
    %11 = vector.broadcast %10 : vector<1x32xf32> to vector<16x32xf32>
    %12 = arith.addf %9, %11 : vector<16x32xf32>
    %13 = arith.addf %12, %0 : vector<16x32xf32>
    %cst_11 = arith.constant dense<0.000000e+00> : vector<16xf32>
    %14 = vector.multi_reduction <add>, %13, %cst_11 [1] : vector<16x32xf32> to vector<16xf32>
    %15 = vector.shape_cast %14 : vector<16xf32> to vector<16x1xf32>
    %cst_12 = arith.constant 3.200000e+01 : f32
    %16 = vector.broadcast %cst_12 : f32 to vector<16x1xf32>
    %17 = arith.divf %15, %16 : vector<16x1xf32>
    %18 = vector.broadcast %17 : vector<16x1xf32> to vector<16x32xf32>
    %19 = arith.subf %13, %18 : vector<16x32xf32>
    %20 = arith.mulf %19, %19 : vector<16x32xf32>
    %cst_13 = arith.constant dense<0.000000e+00> : vector<16xf32>
    %21 = vector.multi_reduction <add>, %20, %cst_13 [1] : vector<16x32xf32> to vector<16xf32>
    %22 = vector.shape_cast %21 : vector<16xf32> to vector<16x1xf32>
    %cst_14 = arith.constant 3.200000e+01 : f32
    %23 = vector.broadcast %cst_14 : f32 to vector<16x1xf32>
    %24 = arith.divf %22, %23 : vector<16x1xf32>
    %25 = vector.broadcast %17 : vector<16x1xf32> to vector<16x32xf32>
    %26 = arith.subf %13, %25 : vector<16x32xf32>
    %cst_15 = arith.constant 9.99999974E-6 : f32
    %27 = vector.broadcast %cst_15 : f32 to vector<16x1xf32>
    %28 = arith.addf %24, %27 : vector<16x1xf32>
    %29 = math.rsqrt %28 : vector<16x1xf32>
    %30 = vector.broadcast %29 : vector<16x1xf32> to vector<16x32xf32>
    %31 = arith.mulf %26, %30 : vector<16x32xf32>
    %c0_16 = arith.constant 0 : index
    %c0_17 = arith.constant 0 : index
    %32 = vector.load %arg6[%c0_16, %c0_17] : memref<1x32xf32, #tpu.memory_space<vmem>>, vector<1x32xf32>
    %33 = vector.broadcast %32 : vector<1x32xf32> to vector<16x32xf32>
    %34 = arith.mulf %31, %33 : vector<16x32xf32>
    %c0_18 = arith.constant 0 : index
    %c0_19 = arith.constant 0 : index
    %35 = vector.load %arg7[%c0_18, %c0_19] : memref<1x32xf32, #tpu.memory_space<vmem>>, vector<1x32xf32>
    %36 = vector.broadcast %35 : vector<1x32xf32> to vector<16x32xf32>
    %37 = arith.addf %34, %36 : vector<16x32xf32>
    %c0_20 = arith.constant 0 : index
    %c0_21 = arith.constant 0 : index
    %38 = vector.load %arg8[%c0_20, %c0_21] : memref<16x32xf32, #tpu.memory_space<vmem>>, vector<16x32xf32>
    tpu.vector_store %arg8[%c0_20, %c0_21], %37 {strides = array<i32>} : memref<16x32xf32, #tpu.memory_space<vmem>>, vector<16x32xf32>,
    return
  }
  func.func @transform_0(%arg0: i32) -> (i32, i32) {
    %c0_i32 = arith.constant 0 : i32
    %c0_i32_0 = arith.constant 0 : i32
    return %arg0, %c0_i32 : i32, i32
  }
  func.func @transform_1(%arg0: i32) -> (i32, i32) {
    %c0_i32 = arith.constant 0 : i32
    %c0_i32_0 = arith.constant 0 : i32
    %c0_i32_1 = arith.constant 0 : i32
    return %c0_i32, %c0_i32_0 : i32, i32
  }
  func.func @transform_2(%arg0: i32) -> (i32, i32) {
    %c0_i32 = arith.constant 0 : i32
    %c0_i32_0 = arith.constant 0 : i32
    %c0_i32_1 = arith.constant 0 : i32
    return %c0_i32, %c0_i32_0 : i32, i32
  }
  func.func @transform_3(%arg0: i32) -> (i32, i32) {
    %c0_i32 = arith.constant 0 : i32
    %c0_i32_0 = arith.constant 0 : i32
    %c0_i32_1 = arith.constant 0 : i32
    return %c0_i32, %c0_i32_0 : i32, i32
  }
  func.func @transform_4(%arg0: i32) -> (i32, i32) {
    %c0_i32 = arith.constant 0 : i32
    %c0_i32_0 = arith.constant 0 : i32
    %c0_i32_1 = arith.constant 0 : i32
    return %c0_i32, %c0_i32_0 : i32, i32
  }
  func.func @transform_5(%arg0: i32) -> (i32, i32) {
    %c0_i32 = arith.constant 0 : i32
    %c0_i32_0 = arith.constant 0 : i32
    %c0_i32_1 = arith.constant 0 : i32
    return %c0_i32, %c0_i32_0 : i32, i32
  }
  func.func @transform_6(%arg0: i32) -> (i32, i32) {
    %c0_i32 = arith.constant 0 : i32
    %c0_i32_0 = arith.constant 0 : i32
    %c0_i32_1 = arith.constant 0 : i32
    return %c0_i32, %c0_i32_0 : i32, i32
  }
  func.func @transform_7(%arg0: i32) -> (i32, i32) {
    %c0_i32 = arith.constant 0 : i32
    %c0_i32_0 = arith.constant 0 : i32
    return %arg0, %c0_i32 : i32, i32
  }
}

module attributes {stable_mosaic.version = 11 : i64} {
  func.func @_linear_kernel(%arg0: i32, %arg1: i32, %arg2: i32, %arg3: memref<16x32xf32, #tpu.memory_space<vmem>>, %arg4: memref<32x64xf32, #tpu.memory_space<vmem>>, %arg5: memref<1x64xf32, #tpu.memory_space<vmem>>, %arg6: memref<16x64xf32, #tpu.memory_space<vmem>>, %arg7: memref<16x64xf32, #tpu.memory_space<vmem>>) attributes {dimension_semantics = [#tpu.dimension_semantics<parallel>, #tpu.dimension_semantics<parallel>, #tpu.dimension_semantics<arbitrary>], iteration_bounds = array<i64: 1, 1, 1>, scalar_prefetch = 0 : i64, scratch_operands = 1 : i64, tpu.core_type = #tpu.core_type<tc>, window_params = [{transform_indices = @transform_0, window_bounds = array<i64: 16, 32>}, {transform_indices = @transform_1, window_bounds = array<i64: 32, 64>}, {transform_indices = @transform_2, window_bounds = array<i64: 1, 64>}, {transform_indices = @transform_3, window_bounds = array<i64: 16, 64>}]} {
    %c0_i32 = arith.constant 0 : i32
    %0 = arith.cmpi eq, %arg2, %c0_i32 : i32
    %1 = arith.extui %0 : i1 to i32
    %c0_i32_0 = arith.constant 0 : i32
    %2 = arith.cmpi ne, %1, %c0_i32_0 : i32
    scf.if %2 {
      %cst_10 = arith.constant 0.000000e+00 : f32
      %12 = vector.broadcast %cst_10 : f32 to vector<16x64xf32>
      %c0_11 = arith.constant 0 : index
      %c0_12 = arith.constant 0 : index
      %13 = vector.load %arg7[%c0_11, %c0_12] : memref<16x64xf32, #tpu.memory_space<vmem>>, vector<16x64xf32>
      tpu.vector_store %arg7[%c0_11, %c0_12], %12 {strides = array<i32>} : memref<16x64xf32, #tpu.memory_space<vmem>>, vector<16x64xf32>,
    } else {
    }
    %c0 = arith.constant 0 : index
    %c0_1 = arith.constant 0 : index
    %3 = vector.load %arg7[%c0, %c0_1] : memref<16x64xf32, #tpu.memory_space<vmem>>, vector<16x64xf32>
    %c0_2 = arith.constant 0 : index
    %c0_3 = arith.constant 0 : index
    %4 = vector.load %arg3[%c0_2, %c0_3] : memref<16x32xf32, #tpu.memory_space<vmem>>, vector<16x32xf32>
    %c0_4 = arith.constant 0 : index
    %c0_5 = arith.constant 0 : index
    %5 = vector.load %arg4[%c0_4, %c0_5] : memref<32x64xf32, #tpu.memory_space<vmem>>, vector<32x64xf32>
    %cst = arith.constant dense<0.000000e+00> : vector<16x64xf32>
    %6 = tpu.matmul %4, %5, %cst {dimension_numbers = #tpu.dot_dimension_numbers<[1], [0], [0], [1], [0, 0, 1, 1], [], []>} : vector<16x32xf32>, vector<32x64xf32>, vector<16x64xf32> -> vector<16x64xf32>
    %7 = arith.addf %3, %6 : vector<16x64xf32>
    %c0_6 = arith.constant 0 : index
    %c0_7 = arith.constant 0 : index
    %8 = vector.load %arg7[%c0_6, %c0_7] : memref<16x64xf32, #tpu.memory_space<vmem>>, vector<16x64xf32>
    tpu.vector_store %arg7[%c0_6, %c0_7], %7 {strides = array<i32>} : memref<16x64xf32, #tpu.memory_space<vmem>>, vector<16x64xf32>,
    %c0_i32_8 = arith.constant 0 : i32
    %9 = arith.cmpi eq, %arg2, %c0_i32_8 : i32
    %10 = arith.extui %9 : i1 to i32
    %c0_i32_9 = arith.constant 0 : i32
    %11 = arith.cmpi ne, %10, %c0_i32_9 : i32
    scf.if %11 {
      %c0_10 = arith.constant 0 : index
      %c0_11 = arith.constant 0 : index
      %12 = vector.load %arg7[%c0_10, %c0_11] : memref<16x64xf32, #tpu.memory_space<vmem>>, vector<16x64xf32>
      %c0_12 = arith.constant 0 : index
      %c0_13 = arith.constant 0 : index
      %13 = vector.load %arg5[%c0_12, %c0_13] : memref<1x64xf32, #tpu.memory_space<vmem>>, vector<1x64xf32>
      %14 = vector.broadcast %13 : vector<1x64xf32> to vector<16x64xf32>
      %15 = arith.addf %12, %14 : vector<16x64xf32>
      %c0_14 = arith.constant 0 : index
      %c0_15 = arith.constant 0 : index
      %16 = vector.load %arg6[%c0_14, %c0_15] : memref<16x64xf32, #tpu.memory_space<vmem>>, vector<16x64xf32>
      tpu.vector_store %arg6[%c0_14, %c0_15], %15 {strides = array<i32>} : memref<16x64xf32, #tpu.memory_space<vmem>>, vector<16x64xf32>,
    } else {
    }
    return
  }
  func.func @transform_0(%arg0: i32, %arg1: i32, %arg2: i32) -> (i32, i32) {
    %c0_i32 = arith.constant 0 : i32
    return %arg0, %arg2 : i32, i32
  }
  func.func @transform_1(%arg0: i32, %arg1: i32, %arg2: i32) -> (i32, i32) {
    %c0_i32 = arith.constant 0 : i32
    return %arg2, %arg1 : i32, i32
  }
  func.func @transform_2(%arg0: i32, %arg1: i32, %arg2: i32) -> (i32, i32) {
    %c0_i32 = arith.constant 0 : i32
    %c0_i32_0 = arith.constant 0 : i32
    return %c0_i32, %arg1 : i32, i32
  }
  func.func @transform_3(%arg0: i32, %arg1: i32, %arg2: i32) -> (i32, i32) {
    %c0_i32 = arith.constant 0 : i32
    return %arg0, %arg1 : i32, i32
  }
}

module attributes {stable_mosaic.version = 11 : i64} {
  func.func @_attn_kernel(%arg0: i32, %arg1: memref<8x8x8xf32, #tpu.memory_space<vmem>>, %arg2: memref<8x8x8xf32, #tpu.memory_space<vmem>>, %arg3: memref<8x8x8xf32, #tpu.memory_space<vmem>>, %arg4: memref<8x8x8xf32, #tpu.memory_space<vmem>>) attributes {dimension_semantics = [#tpu.dimension_semantics<parallel>], iteration_bounds = array<i64: 1>, scalar_prefetch = 0 : i64, scratch_operands = 0 : i64, tpu.core_type = #tpu.core_type<tc>, window_params = [{transform_indices = @transform_0, window_bounds = array<i64: 8, 8, 8>}, {transform_indices = @transform_1, window_bounds = array<i64: 8, 8, 8>}, {transform_indices = @transform_2, window_bounds = array<i64: 8, 8, 8>}, {transform_indices = @transform_3, window_bounds = array<i64: 8, 8, 8>}]} {
    %c0 = arith.constant 0 : index
    %c0_0 = arith.constant 0 : index
    %c0_1 = arith.constant 0 : index
    %0 = vector.load %arg1[%c0, %c0_0, %c0_1] : memref<8x8x8xf32, #tpu.memory_space<vmem>>, vector<8x8x8xf32>
    %cst = arith.constant 0.353553385 : f32
    %1 = vector.broadcast %cst : f32 to vector<8x8x8xf32>
    %2 = arith.mulf %0, %1 : vector<8x8x8xf32>
    %c0_2 = arith.constant 0 : index
    %c0_3 = arith.constant 0 : index
    %c0_4 = arith.constant 0 : index
    %3 = vector.load %arg2[%c0_2, %c0_3, %c0_4] : memref<8x8x8xf32, #tpu.memory_space<vmem>>, vector<8x8x8xf32>
    "tpu.trace_start"() <{level = 10 : i32, message = "bqd,bkd->bqk"}> : () -> ()
    %cst_5 = arith.constant dense<0.000000e+00> : vector<8x8x8xf32>
    %4 = tpu.matmul %2, %3, %cst_5 {dimension_numbers = #tpu.dot_dimension_numbers<[2], [2], [1], [1], [0, 0, 0, 1, 1, 1], [0], [0]>} : vector<8x8x8xf32>, vector<8x8x8xf32>, vector<8x8x8xf32> -> vector<8x8x8xf32>
    "tpu.trace_stop"() : () -> ()
    %cst_6 = arith.constant dense<0xFF800000> : vector<8x8xf32>
    %5 = vector.multi_reduction <maximumf>, %4, %cst_6 [2] : vector<8x8x8xf32> to vector<8x8xf32>
    %6 = vector.shape_cast %5 : vector<8x8xf32> to vector<8x8x1xf32>
    %7 = vector.broadcast %6 : vector<8x8x1xf32> to vector<8x8x8xf32>
    %8 = arith.subf %4, %7 : vector<8x8x8xf32>
    %9 = math.exp %8 : vector<8x8x8xf32>
    %cst_7 = arith.constant dense<0.000000e+00> : vector<8x8xf32>
    %10 = vector.multi_reduction <add>, %9, %cst_7 [2] : vector<8x8x8xf32> to vector<8x8xf32>
    %11 = vector.shape_cast %10 : vector<8x8xf32> to vector<8x8x1xf32>
    %12 = tpu.reciprocal %11 {approx = true} : vector<8x8x1xf32> -> vector<8x8x1xf32>
    %13 = vector.broadcast %12 : vector<8x8x1xf32> to vector<8x8x8xf32>
    %14 = arith.mulf %9, %13 : vector<8x8x8xf32>
    %c0_8 = arith.constant 0 : index
    %c0_9 = arith.constant 0 : index
    %c0_10 = arith.constant 0 : index
    %15 = vector.load %arg3[%c0_8, %c0_9, %c0_10] : memref<8x8x8xf32, #tpu.memory_space<vmem>>, vector<8x8x8xf32>
    "tpu.trace_start"() <{level = 10 : i32, message = "bqk,bkd->bqd"}> : () -> ()
    %cst_11 = arith.constant dense<0.000000e+00> : vector<8x8x8xf32>
    %16 = tpu.matmul %14, %15, %cst_11 {dimension_numbers = #tpu.dot_dimension_numbers<[2], [1], [1], [2], [0, 0, 0, 1, 1, 2], [0], [0]>} : vector<8x8x8xf32>, vector<8x8x8xf32>, vector<8x8x8xf32> -> vector<8x8x8xf32>
    "tpu.trace_stop"() : () -> ()
    %c0_12 = arith.constant 0 : index
    %c0_13 = arith.constant 0 : index
    %c0_14 = arith.constant 0 : index
    %17 = vector.load %arg4[%c0_12, %c0_13, %c0_14] : memref<8x8x8xf32, #tpu.memory_space<vmem>>, vector<8x8x8xf32>
    tpu.vector_store %arg4[%c0_12, %c0_13, %c0_14], %16 {strides = array<i32>} : memref<8x8x8xf32, #tpu.memory_space<vmem>>, vector<8x8x8xf32>,
    return
  }
  func.func @transform_0(%arg0: i32) -> (i32, i32, i32) {
    %c0_i32 = arith.constant 0 : i32
    %c0_i32_0 = arith.constant 0 : i32
    %c0_i32_1 = arith.constant 0 : i32
    return %arg0, %c0_i32, %c0_i32_0 : i32, i32, i32
  }
  func.func @transform_1(%arg0: i32) -> (i32, i32, i32) {
    %c0_i32 = arith.constant 0 : i32
    %c0_i32_0 = arith.constant 0 : i32
    %c0_i32_1 = arith.constant 0 : i32
    return %arg0, %c0_i32, %c0_i32_0 : i32, i32, i32
  }
  func.func @transform_2(%arg0: i32) -> (i32, i32, i32) {
    %c0_i32 = arith.constant 0 : i32
    %c0_i32_0 = arith.constant 0 : i32
    %c0_i32_1 = arith.constant 0 : i32
    return %arg0, %c0_i32, %c0_i32_0 : i32, i32, i32
  }
  func.func @transform_3(%arg0: i32) -> (i32, i32, i32) {
    %c0_i32 = arith.constant 0 : i32
    %c0_i32_0 = arith.constant 0 : i32
    %c0_i32_1 = arith.constant 0 : i32
    return %arg0, %c0_i32, %c0_i32_0 : i32, i32, i32
  }
}

module attributes {stable_mosaic.version = 11 : i64} {
  func.func @_ln_kernel(%arg0: i32, %arg1: memref<16x32xf32, #tpu.memory_space<vmem>>, %arg2: memref<1x32xf32, #tpu.memory_space<vmem>>, %arg3: memref<1x32xf32, #tpu.memory_space<vmem>>, %arg4: memref<16x32xf32, #tpu.memory_space<vmem>>) attributes {dimension_semantics = [#tpu.dimension_semantics<parallel>], iteration_bounds = array<i64: 1>, scalar_prefetch = 0 : i64, scratch_operands = 0 : i64, tpu.core_type = #tpu.core_type<tc>, window_params = [{transform_indices = @transform_0, window_bounds = array<i64: 16, 32>}, {pipeline_mode = #tpu.pipeline_mode<synchronous>, transform_indices = @transform_1, window_bounds = array<i64: 1, 32>}, {pipeline_mode = #tpu.pipeline_mode<synchronous>, transform_indices = @transform_2, window_bounds = array<i64: 1, 32>}, {transform_indices = @transform_3, window_bounds = array<i64: 16, 32>}]} {
    %c0 = arith.constant 0 : index
    %c0_0 = arith.constant 0 : index
    %0 = vector.load %arg1[%c0, %c0_0] : memref<16x32xf32, #tpu.memory_space<vmem>>, vector<16x32xf32>
    %cst = arith.constant dense<0.000000e+00> : vector<16xf32>
    %1 = vector.multi_reduction <add>, %0, %cst [1] : vector<16x32xf32> to vector<16xf32>
    %2 = vector.shape_cast %1 : vector<16xf32> to vector<16x1xf32>
    %cst_1 = arith.constant 3.200000e+01 : f32
    %3 = vector.broadcast %cst_1 : f32 to vector<16x1xf32>
    %4 = arith.divf %2, %3 : vector<16x1xf32>
    %5 = vector.broadcast %4 : vector<16x1xf32> to vector<16x32xf32>
    %6 = arith.subf %0, %5 : vector<16x32xf32>
    %7 = arith.mulf %6, %6 : vector<16x32xf32>
    %cst_2 = arith.constant dense<0.000000e+00> : vector<16xf32>
    %8 = vector.multi_reduction <add>, %7, %cst_2 [1] : vector<16x32xf32> to vector<16xf32>
    %9 = vector.shape_cast %8 : vector<16xf32> to vector<16x1xf32>
    %cst_3 = arith.constant 3.200000e+01 : f32
    %10 = vector.broadcast %cst_3 : f32 to vector<16x1xf32>
    %11 = arith.divf %9, %10 : vector<16x1xf32>
    %12 = vector.broadcast %4 : vector<16x1xf32> to vector<16x32xf32>
    %13 = arith.subf %0, %12 : vector<16x32xf32>
    %cst_4 = arith.constant 9.99999974E-6 : f32
    %14 = vector.broadcast %cst_4 : f32 to vector<16x1xf32>
    %15 = arith.addf %11, %14 : vector<16x1xf32>
    %16 = math.rsqrt %15 : vector<16x1xf32>
    %17 = vector.broadcast %16 : vector<16x1xf32> to vector<16x32xf32>
    %18 = arith.mulf %13, %17 : vector<16x32xf32>
    %c0_5 = arith.constant 0 : index
    %c0_6 = arith.constant 0 : index
    %19 = vector.load %arg2[%c0_5, %c0_6] : memref<1x32xf32, #tpu.memory_space<vmem>>, vector<1x32xf32>
    %20 = vector.broadcast %19 : vector<1x32xf32> to vector<16x32xf32>
    %21 = arith.mulf %18, %20 : vector<16x32xf32>
    %c0_7 = arith.constant 0 : index
    %c0_8 = arith.constant 0 : index
    %22 = vector.load %arg3[%c0_7, %c0_8] : memref<1x32xf32, #tpu.memory_space<vmem>>, vector<1x32xf32>
    %23 = vector.broadcast %22 : vector<1x32xf32> to vector<16x32xf32>
    %24 = arith.addf %21, %23 : vector<16x32xf32>
    %c0_9 = arith.constant 0 : index
    %c0_10 = arith.constant 0 : index
    %25 = vector.load %arg4[%c0_9, %c0_10] : memref<16x32xf32, #tpu.memory_space<vmem>>, vector<16x32xf32>
    tpu.vector_store %arg4[%c0_9, %c0_10], %24 {strides = array<i32>} : memref<16x32xf32, #tpu.memory_space<vmem>>, vector<16x32xf32>,
    return
  }
  func.func @transform_0(%arg0: i32) -> (i32, i32) {
    %c0_i32 = arith.constant 0 : i32
    %c0_i32_0 = arith.constant 0 : i32
    return %arg0, %c0_i32 : i32, i32
  }
  func.func @transform_1(%arg0: i32) -> (i32, i32) {
    %c0_i32 = arith.constant 0 : i32
    %c0_i32_0 = arith.constant 0 : i32
    %c0_i32_1 = arith.constant 0 : i32
    return %c0_i32, %c0_i32_0 : i32, i32
  }
  func.func @transform_2(%arg0: i32) -> (i32, i32) {
    %c0_i32 = arith.constant 0 : i32
    %c0_i32_0 = arith.constant 0 : i32
    %c0_i32_1 = arith.constant 0 : i32
    return %c0_i32, %c0_i32_0 : i32, i32
  }
  func.func @transform_3(%arg0: i32) -> (i32, i32) {
    %c0_i32 = arith.constant 0 : i32
    %c0_i32_0 = arith.constant 0 : i32
    return %arg0, %c0_i32 : i32, i32
  }
}

</mosaic_0001>

<llo_original>
// kernel: _lambda_.17
$region0: #{_lambda_.17}
  #allocation0 [shape = 'u32[]', space=smem, size = 0x4, offset = 0x4, fixed_abs, tag = 'smem constant byte address 0x4 - core index']
  #allocation1 [shape = 'u32[144,128]{1,0:T(1,128)}', space=vmem, size = 0x12000, scoped, tag = 'internal scratch']
  #allocation2 [shape = 'f32[16,96]{1,0:T(8,128)}', space=vmem, size = 0x2000, scoped, tag = 'scratch operand']
  %s0 = inlined_call_operand.vmem [shape: f32[16,32], index: 0, kind: input, shape index: {}]
  %s1 = inlined_call_operand.vmem [shape: f32[32,96], index: 1, kind: input, shape index: {}]
  %s2 = inlined_call_operand.vmem [shape: f32[1,96], index: 2, kind: input, shape index: {}]
  %s3 = inlined_call_operand.vmem [shape: f32[16,96], index: 3, kind: output, shape index: {}]
  %s4 = sld [smem:[#allocation0]]
  $region30: #{_lambda_.17} parent=0
    _
  %s6 = ssub.s32 1, %s4
  %s7 = scalar_select 0, %s6, %s4
  // Predicated region
  $region2: #{_lambda_.17} parent=0 // pred_check
    _
  $region3: #{_lambda_.17} parent=0 // pred_check_branch
    %9 = sbr.rel (0) target = $region5
  $region4: #{_lambda_.17} parent=0 // pred_region
    _
  $region5: #{_lambda_.17} parent=0 // pred_fallthru
    _
  // Predicated region
  $region6: #{_lambda_.17} parent=0 // pred_check
    _
  $region7: #{_lambda_.17} parent=0 // pred_check_branch
    %11 = sbr.rel (0) target = $region9
  $region8: #{_lambda_.17} parent=0 // pred_region
    _
  $region9: #{_lambda_.17} parent=0 // pred_fallthru
    _
  // Predicated region
  $region10: #{_lambda_.17} parent=0 // pred_check
    _
  $region11: #{_lambda_.17} parent=0 // pred_check_branch
    %13 = sbr.rel (0) target = $region13
  $region12: #{_lambda_.17} parent=0 // pred_region
    _
  $region13: #{_lambda_.17} parent=0 // pred_fallthru
    _
  %p14 = scmp.eq.s32.totalorder 0, 0
  // Predicated region
  $region14: #{_lambda_.17} parent=0 // pred_check
    %p15 = pneg %p14
  $region15: #{_lambda_.17} parent=0 // pred_check_branch
    %17 = sbr.rel (%p15) target = $region17
  $region16: #{_lambda_.17} parent=0 // pred_region
    %vm18 = vcmask 785408
    %19 = vst.msk [vmem:[#allocation2] sm:$0xff] %vm18, 0.0
    %20 = vst.msk [vmem:[#allocation2 + $0x8] sm:$0xff] %vm18, 0.0
  $region17: #{_lambda_.17} parent=0 // pred_fallthru
    _
  %v21 = vld [vmem:[#allocation2] sm:$0xff]
  %v22 = vld [vmem:[#allocation2 + $0x8] sm:$0xff]
  %v23 = vld [vmem:[%s0] sm:$0xff]
  %v24 = vld [vmem:[%s0 + $0x8] sm:$0xff]
  %v25 = vld [vmem:[%s1] sm:$0xff]
  %v26 = vld [vmem:[%s1 + $0x8] sm:$0xff]
  %v27 = vld [vmem:[%s1 + $0x10] sm:$0xff]
  %v28 = vld [vmem:[%s1 + $0x18] sm:$0xff]
  %vm29 = vcmask 261120
  %v31 = vsel %vm29, %v23, 0
  %v34 = vsel %vm29, %v24, 0
  %36 = vmatprep.subr.mxu0 0.0
  %37 = vmatpush1.msra.mxu0 %v25
  %38 = vmatprep.subr.mxu0 0.0
  %39 = vmatpush1.msra.mxu0 %v26
  %40 = vmatprep.subr.mxu0 0.0
  %41 = vmatpush1.msra.mxu0 %v27
  %42 = vmatprep.subr.mxu0 0.0
  %43 = vmatpush1.msra.mxu0 %v28
  %44 = vmatprep.subr.mxu0 0.0
  %45 = vmatpush1.msra.mxu0 0.0
  %46 = vmatprep.subr.mxu0 0.0
  %47 = vmatpush1.msra.mxu0 0.0
  %48 = vmatprep.subr.mxu0 0.0
  %49 = vmatpush1.msra.mxu0 0.0
  %50 = vmatprep.subr.mxu0 0.0
  %51 = vmatpush1.msra.mxu0 0.0
  %52 = vmatprep.subr.mxu0 0.0
  %53 = vmatpush1.msra.mxu0 0.0
  %54 = vmatprep.subr.mxu0 0.0
  %55 = vmatpush1.msra.mxu0 0.0
  %56 = vmatprep.subr.mxu0 0.0
  %57 = vmatpush1.msra.mxu0 0.0
  %58 = vmatprep.subr.mxu0 0.0
  %59 = vmatpush1.msra.mxu0 0.0
  %60 = vmatprep.subr.mxu0 0.0
  %61 = vmatpush1.msra.mxu0 0.0
  %62 = vmatprep.subr.mxu0 0.0
  %63 = vmatpush1.msra.mxu0 0.0
  %64 = vmatprep.subr.mxu0 0.0
  %65 = vmatpush1.msra.mxu0 0.0
  %66 = vmatprep.subr.mxu0 0.0
  %67 = vmatpush1.msra.mxu0 0.0
  %68 = vmatprep.subr.mxu0 0.0
  %69 = vmatpush1.msra.mxu0 0.0
  %70 = vmatprep.subr.mxu0 0.0
  %71 = vmatpush1.msra.mxu0 0.0
  %72 = vmatprep.subr.mxu0 0.0
  %73 = vmatpush1.msra.mxu0 0.0
  %74 = vmatprep.subr.mxu0 0.0
  %75 = vmatpush1.msra.mxu0 0.0
  %76 = vmatprep.subr.mxu0 0.0
  %77 = vmatpush1.msra.mxu0 0.0
  %78 = vmatprep.subr.mxu0 0.0
  %79 = vmatpush1.msra.mxu0 0.0
  %80 = vmatprep.subr.mxu0 0.0
  %81 = vmatpush1.msra.mxu0 0.0
  %82 = vmatprep.subr.mxu0 0.0
  %83 = vmatpush1.msra.mxu0 0.0
  %84 = vmatprep.subr.mxu0 0.0
  %85 = vmatpush1.msra.mxu0 0.0
  %86 = vmatprep.subr.mxu0 0.0
  %87 = vmatpush1.msra.mxu0 0.0
  %88 = vmatprep.subr.mxu0 0.0
  %89 = vmatpush1.msra.mxu0 0.0
  %90 = vmatprep.subr.mxu0 0.0
  %91 = vmatpush1.msra.mxu0 0.0
  %92 = vmatprep.subr.mxu0 0.0
  %93 = vmatpush1.msra.mxu0 0.0
  %94 = vmatprep.subr.mxu0 0.0
  %95 = vmatpush1.msra.mxu0 0.0
  %96 = vmatprep.subr.mxu0 0.0
  %97 = vmatpush1.msra.mxu0 0.0
  %98 = vmatprep.subr.mxu0 0.0
  %99 = vmatpush1.msra.mxu0 0.0
  %100 = vmatprep.mubr.f32.mxu0 0.0
  %101 = vmatmul.mubr.f32.gmra.mrb[0].mxu0 %v31
  %v102 = vpop.f32.mrb[0].mxu0
  %v103 = vadd.f32 0.0, %v102
  %v104 = vpop.f32.mrb[0].mxu0
  %105 = vmatprep.mubr.f32.mxu0 0.0
  %106 = vmatmul.mubr.f32.gmra.mrb[0].mxu0 %v34
  %v107 = vpop.f32.mrb[0].mxu0
  %v108 = vadd.f32 0.0, %v107
  %v109 = vpop.f32.mrb[0].mxu0
  %110 = vdwg.mxu0
  %v111 = vadd.f32 %v21, %v103
  %v112 = vadd.f32 %v22, %v108
  %vm113 = vcmask 785408
  %114 = vst.msk [vmem:[#allocation2] sm:$0xff] %vm113, %v111
  %115 = vst.msk [vmem:[#allocation2 + $0x8] sm:$0xff] %vm113, %v112
  // Predicated region
  $region18: #{_lambda_.17} parent=0 // pred_check
    %p116 = pneg %p14
  $region19: #{_lambda_.17} parent=0 // pred_check_branch
    %118 = sbr.rel (%p116) target = $region21
  $region20: #{_lambda_.17} parent=0 // pred_region
    %v119 = vld [vmem:[#allocation2] sm:$0xff]
    %v120 = vld [vmem:[#allocation2 + $0x8] sm:$0xff]
    %v121 = vld [vmem:[%s2] sm:$0x1]
    %v123 = vlaneseq
    %v124 = vshrl.u32 %v123, 7
    %v125 = vsub.s32 0, %v124
    %v126 = vrot.slane %v121, %v125
    %v128 = vadd.f32 %v119, %v126
    %v129 = vadd.f32 %v120, %v126
    %130 = vst.msk [vmem:[%s3] sm:$0xff] %vm113, %v128
    %131 = vst.msk [vmem:[%s3 + $0x8] sm:$0xff] %vm113, %v129
  $region21: #{_lambda_.17} parent=0 // pred_fallthru
    _
  // Predicated region
  $region22: #{_lambda_.17} parent=0 // pred_check
    _
  $region23: #{_lambda_.17} parent=0 // pred_check_branch
    %133 = sbr.rel (0) target = $region25
  $region24: #{_lambda_.17} parent=0 // pred_region
    _
  $region25: #{_lambda_.17} parent=0 // pred_fallthru
    _
  // Predicated region
  $region26: #{_lambda_.17} parent=0 // pred_check
    _
  $region27: #{_lambda_.17} parent=0 // pred_check_branch
    %135 = sbr.rel (0) target = $region29
  $region28: #{_lambda_.17} parent=0 // pred_region
    _
  $region29: #{_lambda_.17} parent=0 // pred_fallthru
    _

// kernel: _lambda_.20
$region0: #{_lambda_.20}
  #allocation0 [shape = 'u32[]', space=smem, size = 0x4, offset = 0x4, fixed_abs, tag = 'smem constant byte address 0x4 - core index']
  #allocation1 [shape = 'u32[144,128]{1,0:T(1,128)}', space=vmem, size = 0x12000, scoped, tag = 'internal scratch']
  #allocation2 [shape = 'f32[16,32]{1,0:T(8,128)}', space=vmem, size = 0x2000, scoped, tag = 'scratch operand']
  %s0 = inlined_call_operand.vmem [shape: f32[16,32], index: 0, kind: input, shape index: {}]
  %s1 = inlined_call_operand.vmem [shape: f32[32,32], index: 1, kind: input, shape index: {}]
  %s2 = inlined_call_operand.vmem [shape: f32[1,32], index: 2, kind: input, shape index: {}]
  %s3 = inlined_call_operand.vmem [shape: f32[16,32], index: 3, kind: output, shape index: {}]
  %s4 = sld [smem:[#allocation0]]
  $region30: #{_lambda_.20} parent=0
    _
  %s6 = ssub.s32 1, %s4
  %s7 = scalar_select 0, %s6, %s4
  // Predicated region
  $region2: #{_lambda_.20} parent=0 // pred_check
    _
  $region3: #{_lambda_.20} parent=0 // pred_check_branch
    %9 = sbr.rel (0) target = $region5
  $region4: #{_lambda_.20} parent=0 // pred_region
    _
  $region5: #{_lambda_.20} parent=0 // pred_fallthru
    _
  // Predicated region
  $region6: #{_lambda_.20} parent=0 // pred_check
    _
  $region7: #{_lambda_.20} parent=0 // pred_check_branch
    %11 = sbr.rel (0) target = $region9
  $region8: #{_lambda_.20} parent=0 // pred_region
    _
  $region9: #{_lambda_.20} parent=0 // pred_fallthru
    _
  // Predicated region
  $region10: #{_lambda_.20} parent=0 // pred_check
    _
  $region11: #{_lambda_.20} parent=0 // pred_check_branch
    %13 = sbr.rel (0) target = $region13
  $region12: #{_lambda_.20} parent=0 // pred_region
    _
  $region13: #{_lambda_.20} parent=0 // pred_fallthru
    _
  %p14 = scmp.eq.s32.totalorder 0, 0
  // Predicated region
  $region14: #{_lambda_.20} parent=0 // pred_check
    %p15 = pneg %p14
  $region15: #{_lambda_.20} parent=0 // pred_check_branch
    %17 = sbr.rel (%p15) target = $region17
  $region16: #{_lambda_.20} parent=0 // pred_region
    %vm18 = vcmask 261120
    %19 = vst.msk [vmem:[#allocation2] sm:$0xff] %vm18, 0.0
    %20 = vst.msk [vmem:[#allocation2 + $0x8] sm:$0xff] %vm18, 0.0
  $region17: #{_lambda_.20} parent=0 // pred_fallthru
    _
  %v21 = vld [vmem:[#allocation2] sm:$0xff]
  %v22 = vld [vmem:[#allocation2 + $0x8] sm:$0xff]
  %v23 = vld [vmem:[%s0] sm:$0xff]
  %v24 = vld [vmem:[%s0 + $0x8] sm:$0xff]
  %v25 = vld [vmem:[%s1] sm:$0xff]
  %v26 = vld [vmem:[%s1 + $0x8] sm:$0xff]
  %v27 = vld [vmem:[%s1 + $0x10] sm:$0xff]
  %v28 = vld [vmem:[%s1 + $0x18] sm:$0xff]
  %vm29 = vcmask 261120
  %v31 = vsel %vm29, %v23, 0
  %v34 = vsel %vm29, %v24, 0
  %36 = vmatprep.subr.mxu0 0.0
  %37 = vmatpush1.msra.mxu0 %v25
  %38 = vmatprep.subr.mxu0 0.0
  %39 = vmatpush1.msra.mxu0 %v26
  %40 = vmatprep.subr.mxu0 0.0
  %41 = vmatpush1.msra.mxu0 %v27
  %42 = vmatprep.subr.mxu0 0.0
  %43 = vmatpush1.msra.mxu0 %v28
  %44 = vmatprep.subr.mxu0 0.0
  %45 = vmatpush1.msra.mxu0 0.0
  %46 = vmatprep.subr.mxu0 0.0
  %47 = vmatpush1.msra.mxu0 0.0
  %48 = vmatprep.subr.mxu0 0.0
  %49 = vmatpush1.msra.mxu0 0.0
  %50 = vmatprep.subr.mxu0 0.0
  %51 = vmatpush1.msra.mxu0 0.0
  %52 = vmatprep.subr.mxu0 0.0
  %53 = vmatpush1.msra.mxu0 0.0
  %54 = vmatprep.subr.mxu0 0.0
  %55 = vmatpush1.msra.mxu0 0.0
  %56 = vmatprep.subr.mxu0 0.0
  %57 = vmatpush1.msra.mxu0 0.0
  %58 = vmatprep.subr.mxu0 0.0
  %59 = vmatpush1.msra.mxu0 0.0
  %60 = vmatprep.subr.mxu0 0.0
  %61 = vmatpush1.msra.mxu0 0.0
  %62 = vmatprep.subr.mxu0 0.0
  %63 = vmatpush1.msra.mxu0 0.0
  %64 = vmatprep.subr.mxu0 0.0
  %65 = vmatpush1.msra.mxu0 0.0
  %66 = vmatprep.subr.mxu0 0.0
  %67 = vmatpush1.msra.mxu0 0.0
  %68 = vmatprep.subr.mxu0 0.0
  %69 = vmatpush1.msra.mxu0 0.0
  %70 = vmatprep.subr.mxu0 0.0
  %71 = vmatpush1.msra.mxu0 0.0
  %72 = vmatprep.subr.mxu0 0.0
  %73 = vmatpush1.msra.mxu0 0.0
  %74 = vmatprep.subr.mxu0 0.0
  %75 = vmatpush1.msra.mxu0 0.0
  %76 = vmatprep.subr.mxu0 0.0
  %77 = vmatpush1.msra.mxu0 0.0
  %78 = vmatprep.subr.mxu0 0.0
  %79 = vmatpush1.msra.mxu0 0.0
  %80 = vmatprep.subr.mxu0 0.0
  %81 = vmatpush1.msra.mxu0 0.0
  %82 = vmatprep.subr.mxu0 0.0
  %83 = vmatpush1.msra.mxu0 0.0
  %84 = vmatprep.subr.mxu0 0.0
  %85 = vmatpush1.msra.mxu0 0.0
  %86 = vmatprep.subr.mxu0 0.0
  %87 = vmatpush1.msra.mxu0 0.0
  %88 = vmatprep.subr.mxu0 0.0
  %89 = vmatpush1.msra.mxu0 0.0
  %90 = vmatprep.subr.mxu0 0.0
  %91 = vmatpush1.msra.mxu0 0.0
  %92 = vmatprep.subr.mxu0 0.0
  %93 = vmatpush1.msra.mxu0 0.0
  %94 = vmatprep.subr.mxu0 0.0
  %95 = vmatpush1.msra.mxu0 0.0
  %96 = vmatprep.subr.mxu0 0.0
  %97 = vmatpush1.msra.mxu0 0.0
  %98 = vmatprep.subr.mxu0 0.0
  %99 = vmatpush1.msra.mxu0 0.0
  %100 = vmatprep.mubr.f32.mxu0 0.0
  %101 = vmatmul.mubr.f32.gmra.mrb[0].mxu0 %v31
  %v102 = vpop.f32.mrb[0].mxu0
  %v103 = vadd.f32 0.0, %v102
  %v104 = vpop.f32.mrb[0].mxu0
  %105 = vmatprep.mubr.f32.mxu0 0.0
  %106 = vmatmul.mubr.f32.gmra.mrb[0].mxu0 %v34
  %v107 = vpop.f32.mrb[0].mxu0
  %v108 = vadd.f32 0.0, %v107
  %v109 = vpop.f32.mrb[0].mxu0
  %110 = vdwg.mxu0
  %v111 = vadd.f32 %v21, %v103
  %v112 = vadd.f32 %v22, %v108
  %113 = vst.msk [vmem:[#allocation2] sm:$0xff] %vm29, %v111
  %114 = vst.msk [vmem:[#allocation2 + $0x8] sm:$0xff] %vm29, %v112
  // Predicated region
  $region18: #{_lambda_.20} parent=0 // pred_check
    %p115 = pneg %p14
  $region19: #{_lambda_.20} parent=0 // pred_check_branch
    %117 = sbr.rel (%p115) target = $region21
  $region20: #{_lambda_.20} parent=0 // pred_region
    %v118 = vld [vmem:[#allocation2] sm:$0xff]
    %v119 = vld [vmem:[#allocation2 + $0x8] sm:$0xff]
    %v120 = vld [vmem:[%s2] sm:$0x1]
    %v122 = vlaneseq
    %v123 = vshrl.u32 %v122, 7
    %v124 = vsub.s32 0, %v123
    %v125 = vrot.slane %v120, %v124
    %v127 = vadd.f32 %v118, %v125
    %v128 = vadd.f32 %v119, %v125
    %129 = vst.msk [vmem:[%s3] sm:$0xff] %vm29, %v127
    %130 = vst.msk [vmem:[%s3 + $0x8] sm:$0xff] %vm29, %v128
  $region21: #{_lambda_.20} parent=0 // pred_fallthru
    _
  // Predicated region
  $region22: #{_lambda_.20} parent=0 // pred_check
    _
  $region23: #{_lambda_.20} parent=0 // pred_check_branch
    %132 = sbr.rel (0) target = $region25
  $region24: #{_lambda_.20} parent=0 // pred_region
    _
  $region25: #{_lambda_.20} parent=0 // pred_fallthru
    _
  // Predicated region
  $region26: #{_lambda_.20} parent=0 // pred_check
    _
  $region27: #{_lambda_.20} parent=0 // pred_check_branch
    %134 = sbr.rel (0) target = $region29
  $region28: #{_lambda_.20} parent=0 // pred_region
    _
  $region29: #{_lambda_.20} parent=0 // pred_fallthru
    _

// kernel: _lambda_.18
$region0: #{_lambda_.18}
  #allocation0 [shape = 'u32[]', space=smem, size = 0x4, offset = 0x4, fixed_abs, tag = 'smem constant byte address 0x4 - core index']
  #allocation1 [shape = 'u32[144,128]{1,0:T(1,128)}', space=vmem, size = 0x12000, scoped, tag = 'internal scratch']
  %s0 = inlined_call_operand.vmem [shape: f32[8,8,8], index: 0, kind: input, shape index: {}]
  %s1 = inlined_call_operand.vmem [shape: f32[8,8,8], index: 1, kind: input, shape index: {}]
  %s2 = inlined_call_operand.vmem [shape: f32[8,8,8], index: 2, kind: input, shape index: {}]
  %s3 = inlined_call_operand.vmem [shape: f32[8,8], index: 3, kind: input, shape index: {}]
  %s4 = inlined_call_operand.vmem [shape: f32[8,8,8], index: 4, kind: output, shape index: {}]
  %s5 = sld [smem:[#allocation0]]
  $region26: #{_lambda_.18} parent=0
    _
  %s7 = ssub.s32 1, %s5
  %s8 = scalar_select 0, %s7, %s5
  // Predicated region
  $region2: #{_lambda_.18} parent=0 // pred_check
    _
  $region3: #{_lambda_.18} parent=0 // pred_check_branch
    %10 = sbr.rel (0) target = $region5
  $region4: #{_lambda_.18} parent=0 // pred_region
    _
  $region5: #{_lambda_.18} parent=0 // pred_fallthru
    _
  // Predicated region
  $region6: #{_lambda_.18} parent=0 // pred_check
    _
  $region7: #{_lambda_.18} parent=0 // pred_check_branch
    %12 = sbr.rel (0) target = $region9
  $region8: #{_lambda_.18} parent=0 // pred_region
    _
  $region9: #{_lambda_.18} parent=0 // pred_fallthru
    _
  // Predicated region
  $region10: #{_lambda_.18} parent=0 // pred_check
    _
  $region11: #{_lambda_.18} parent=0 // pred_check_branch
    %14 = sbr.rel (0) target = $region13
  $region12: #{_lambda_.18} parent=0 // pred_region
    _
  $region13: #{_lambda_.18} parent=0 // pred_fallthru
    _
  // Predicated region
  $region14: #{_lambda_.18} parent=0 // pred_check
    _
  $region15: #{_lambda_.18} parent=0 // pred_check_branch
    %16 = sbr.rel (0) target = $region17
  $region16: #{_lambda_.18} parent=0 // pred_region
    _
  $region17: #{_lambda_.18} parent=0 // pred_fallthru
    _
  %v17 = vld [vmem:[%s0] sm:$0xff]
  %v18 = vld [vmem:[%s0 + $0x8] sm:$0xff]
  %v19 = vld [vmem:[%s0 + $0x10] sm:$0xff]
  %v20 = vld [vmem:[%s0 + $0x18] sm:$0xff]
  %v21 = vld [vmem:[%s0 + $0x20] sm:$0xff]
  %v22 = vld [vmem:[%s0 + $0x28] sm:$0xff]
  %v23 = vld [vmem:[%s0 + $0x30] sm:$0xff]
  %v24 = vld [vmem:[%s0 + $0x38] sm:$0xff]
  %v25 = vmul.f32 %v17, 0.35355338
  %v26 = vmul.f32 %v18, 0.35355338
  %v27 = vmul.f32 %v19, 0.35355338
  %v28 = vmul.f32 %v20, 0.35355338
  %v29 = vmul.f32 %v21, 0.35355338
  %v30 = vmul.f32 %v22, 0.35355338
  %v31 = vmul.f32 %v23, 0.35355338
  %v32 = vmul.f32 %v24, 0.35355338
  %v33 = vld [vmem:[%s1] sm:$0xff]
  %v34 = vld [vmem:[%s1 + $0x8] sm:$0xff]
  %v35 = vld [vmem:[%s1 + $0x10] sm:$0xff]
  %v36 = vld [vmem:[%s1 + $0x18] sm:$0xff]
  %v37 = vld [vmem:[%s1 + $0x20] sm:$0xff]
  %v38 = vld [vmem:[%s1 + $0x28] sm:$0xff]
  %v39 = vld [vmem:[%s1 + $0x30] sm:$0xff]
  %v40 = vld [vmem:[%s1 + $0x38] sm:$0xff]
  %v41 = vld [vmem:[%s3] sm:$0xff]
  %vm42 = vcmask 64512
  %v44 = vsel %vm42, %v25, 0
  %v47 = vsel %vm42, %v33, 0
  %49 = vmatprep.subr.mxu0 0.0
  %50 = vmatpush1.xpose.msra.mxu0 %v47
  %51 = vmatprep.subr.mxu0 0.0
  %52 = vmatpush1.xpose.msra.mxu0 0.0
  %53 = vmatprep.subr.mxu0 0.0
  %54 = vmatpush1.xpose.msra.mxu0 0.0
  %55 = vmatprep.subr.mxu0 0.0
  %56 = vmatpush1.xpose.msra.mxu0 0.0
  %57 = vmatprep.subr.mxu0 0.0
  %58 = vmatpush1.xpose.msra.mxu0 0.0
  %59 = vmatprep.subr.mxu0 0.0
  %60 = vmatpush1.xpose.msra.mxu0 0.0
  %61 = vmatprep.subr.mxu0 0.0
  %62 = vmatpush1.xpose.msra.mxu0 0.0
  %63 = vmatprep.subr.mxu0 0.0
  %64 = vmatpush1.xpose.msra.mxu0 0.0
  %65 = vmatprep.subr.mxu0 0.0
  %66 = vmatpush1.xpose.msra.mxu0 0.0
  %67 = vmatprep.subr.mxu0 0.0
  %68 = vmatpush1.xpose.msra.mxu0 0.0
  %69 = vmatprep.subr.mxu0 0.0
  %70 = vmatpush1.xpose.msra.mxu0 0.0
  %71 = vmatprep.subr.mxu0 0.0
  %72 = vmatpush1.xpose.msra.mxu0 0.0
  %73 = vmatprep.subr.mxu0 0.0
  %74 = vmatpush1.xpose.msra.mxu0 0.0
  %75 = vmatprep.subr.mxu0 0.0
  %76 = vmatpush1.xpose.msra.mxu0 0.0
  %77 = vmatprep.subr.mxu0 0.0
  %78 = vmatpush1.xpose.msra.mxu0 0.0
  %79 = vmatprep.subr.mxu0 0.0
  %80 = vmatpush1.xpose.msra.mxu0 0.0
  %81 = vmatprep.subr.mxu0 0.0
  %82 = vmatpush1.xpose.msra.mxu0 0.0
  %83 = vmatprep.subr.mxu0 0.0
  %84 = vmatpush1.xpose.msra.mxu0 0.0
  %85 = vmatprep.subr.mxu0 0.0
  %86 = vmatpush1.xpose.msra.mxu0 0.0
  %87 = vmatprep.subr.mxu0 0.0
  %88 = vmatpush1.xpose.msra.mxu0 0.0
  %89 = vmatprep.subr.mxu0 0.0
  %90 = vmatpush1.xpose.msra.mxu0 0.0
  %91 = vmatprep.subr.mxu0 0.0
  %92 = vmatpush1.xpose.msra.mxu0 0.0
  %93 = vmatprep.subr.mxu0 0.0
  %94 = vmatpush1.xpose.msra.mxu0 0.0
  %95 = vmatprep.subr.mxu0 0.0
  %96 = vmatpush1.xpose.msra.mxu0 0.0
  %97 = vmatprep.subr.mxu0 0.0
  %98 = vmatpush1.xpose.msra.mxu0 0.0
  %99 = vmatprep.subr.mxu0 0.0
  %100 = vmatpush1.xpose.msra.mxu0 0.0
  %101 = vmatprep.subr.mxu0 0.0
  %102 = vmatpush1.xpose.msra.mxu0 0.0
  %103 = vmatprep.subr.mxu0 0.0
  %104 = vmatpush1.xpose.msra.mxu0 0.0
  %105 = vmatprep.subr.mxu0 0.0
  %106 = vmatpush1.xpose.msra.mxu0 0.0
  %107 = vmatprep.subr.mxu0 0.0
  %108 = vmatpush1.xpose.msra.mxu0 0.0
  %109 = vmatprep.subr.mxu0 0.0
  %110 = vmatpush1.xpose.msra.mxu0 0.0
  %111 = vmatprep.subr.mxu0 0.0
  %112 = vmatpush1.xpose.msra.mxu0 0.0
  %113 = vmatprep.mubr.f32.mxu0 0.0
  %114 = vmatmul.mubr.f32.gmra.mrb[0].mxu0 %v44
  %v115 = vpop.f32.mrb[0].mxu0
  %v116 = vadd.f32 %v41, %v115
  %v117 = vpop.f32.mrb[0].mxu0
  %118 = vdwg.mxu0
  %v120 = vsel %vm42, %v26, 0
  %v123 = vsel %vm42, %v34, 0
  %125 = vmatprep.subr.mxu0 0.0
  %126 = vmatpush1.xpose.msra.mxu0 %v123
  %127 = vmatprep.subr.mxu0 0.0
  %128 = vmatpush1.xpose.msra.mxu0 0.0
  %129 = vmatprep.subr.mxu0 0.0
  %130 = vmatpush1.xpose.msra.mxu0 0.0
  %131 = vmatprep.subr.mxu0 0.0
  %132 = vmatpush1.xpose.msra.mxu0 0.0
  %133 = vmatprep.subr.mxu0 0.0
  %134 = vmatpush1.xpose.msra.mxu0 0.0
  %135 = vmatprep.subr.mxu0 0.0
  %136 = vmatpush1.xpose.msra.mxu0 0.0
  %137 = vmatprep.subr.mxu0 0.0
  %138 = vmatpush1.xpose.msra.mxu0 0.0
  %139 = vmatprep.subr.mxu0 0.0
  %140 = vmatpush1.xpose.msra.mxu0 0.0
  %141 = vmatprep.subr.mxu0 0.0
  %142 = vmatpush1.xpose.msra.mxu0 0.0
  %143 = vmatprep.subr.mxu0 0.0
  %144 = vmatpush1.xpose.msra.mxu0 0.0
  %145 = vmatprep.subr.mxu0 0.0
  %146 = vmatpush1.xpose.msra.mxu0 0.0
  %147 = vmatprep.subr.mxu0 0.0
  %148 = vmatpush1.xpose.msra.mxu0 0.0
  %149 = vmatprep.subr.mxu0 0.0
  %150 = vmatpush1.xpose.msra.mxu0 0.0
  %151 = vmatprep.subr.mxu0 0.0
  %152 = vmatpush1.xpose.msra.mxu0 0.0
  %153 = vmatprep.subr.mxu0 0.0
  %154 = vmatpush1.xpose.msra.mxu0 0.0
  %155 = vmatprep.subr.mxu0 0.0
  %156 = vmatpush1.xpose.msra.mxu0 0.0
  %157 = vmatprep.subr.mxu0 0.0
  %158 = vmatpush1.xpose.msra.mxu0 0.0
  %159 = vmatprep.subr.mxu0 0.0
  %160 = vmatpush1.xpose.msra.mxu0 0.0
  %161 = vmatprep.subr.mxu0 0.0
  %162 = vmatpush1.xpose.msra.mxu0 0.0
  %163 = vmatprep.subr.mxu0 0.0
  %164 = vmatpush1.xpose.msra.mxu0 0.0
  %165 = vmatprep.subr.mxu0 0.0
  %166 = vmatpush1.xpose.msra.mxu0 0.0
  %167 = vmatprep.subr.mxu0 0.0
  %168 = vmatpush1.xpose.msra.mxu0 0.0
  %169 = vmatprep.subr.mxu0 0.0
  %170 = vmatpush1.xpose.msra.mxu0 0.0
  %171 = vmatprep.subr.mxu0 0.0
  %172 = vmatpush1.xpose.msra.mxu0 0.0
  %173 = vmatprep.subr.mxu0 0.0
  %174 = vmatpush1.xpose.msra.mxu0 0.0
  %175 = vmatprep.subr.mxu0 0.0
  %176 = vmatpush1.xpose.msra.mxu0 0.0
  %177 = vmatprep.subr.mxu0 0.0
  %178 = vmatpush1.xpose.msra.mxu0 0.0
  %179 = vmatprep.subr.mxu0 0.0
  %180 = vmatpush1.xpose.msra.mxu0 0.0
  %181 = vmatprep.subr.mxu0 0.0
  %182 = vmatpush1.xpose.msra.mxu0 0.0
  %183 = vmatprep.subr.mxu0 0.0
  %184 = vmatpush1.xpose.msra.mxu0 0.0
  %185 = vmatprep.subr.mxu0 0.0
  %186 = vmatpush1.xpose.msra.mxu0 0.0
  %187 = vmatprep.subr.mxu0 0.0
  %188 = vmatpush1.xpose.msra.mxu0 0.0
  %189 = vmatprep.mubr.f32.mxu0 0.0
  %190 = vmatmul.mubr.f32.gmra.mrb[0].mxu0 %v120
  %v191 = vpop.f32.mrb[0].mxu0
  %v192 = vadd.f32 %v41, %v191
  %v193 = vpop.f32.mrb[0].mxu0
  %194 = vdwg.mxu0
  %v196 = vsel %vm42, %v27, 0
  %v199 = vsel %vm42, %v35, 0
  %201 = vmatprep.subr.mxu0 0.0
  %202 = vmatpush1.xpose.msra.mxu0 %v199
  %203 = vmatprep.subr.mxu0 0.0
  %204 = vmatpush1.xpose.msra.mxu0 0.0
  %205 = vmatprep.subr.mxu0 0.0
  %206 = vmatpush1.xpose.msra.mxu0 0.0
  %207 = vmatprep.subr.mxu0 0.0
  %208 = vmatpush1.xpose.msra.mxu0 0.0
  %209 = vmatprep.subr.mxu0 0.0
  %210 = vmatpush1.xpose.msra.mxu0 0.0
  %211 = vmatprep.subr.mxu0 0.0
  %212 = vmatpush1.xpose.msra.mxu0 0.0
  %213 = vmatprep.subr.mxu0 0.0
  %214 = vmatpush1.xpose.msra.mxu0 0.0
  %215 = vmatprep.subr.mxu0 0.0
  %216 = vmatpush1.xpose.msra.mxu0 0.0
  %217 = vmatprep.subr.mxu0 0.0
  %218 = vmatpush1.xpose.msra.mxu0 0.0
  %219 = vmatprep.subr.mxu0 0.0
  %220 = vmatpush1.xpose.msra.mxu0 0.0
  %221 = vmatprep.subr.mxu0 0.0
  %222 = vmatpush1.xpose.msra.mxu0 0.0
  %223 = vmatprep.subr.mxu0 0.0
  %224 = vmatpush1.xpose.msra.mxu0 0.0
  %225 = vmatprep.subr.mxu0 0.0
  %226 = vmatpush1.xpose.msra.mxu0 0.0
  %227 = vmatprep.subr.mxu0 0.0
  %228 = vmatpush1.xpose.msra.mxu0 0.0
  %229 = vmatprep.subr.mxu0 0.0
  %230 = vmatpush1.xpose.msra.mxu0 0.0
  %231 = vmatprep.subr.mxu0 0.0
  %232 = vmatpush1.xpose.msra.mxu0 0.0
  %233 = vmatprep.subr.mxu0 0.0
  %234 = vmatpush1.xpose.msra.mxu0 0.0
  %235 = vmatprep.subr.mxu0 0.0
  %236 = vmatpush1.xpose.msra.mxu0 0.0
  %237 = vmatprep.subr.mxu0 0.0
  %238 = vmatpush1.xpose.msra.mxu0 0.0
  %239 = vmatprep.subr.mxu0 0.0
  %240 = vmatpush1.xpose.msra.mxu0 0.0
  %241 = vmatprep.subr.mxu0 0.0
  %242 = vmatpush1.xpose.msra.mxu0 0.0
  %243 = vmatprep.subr.mxu0 0.0
  %244 = vmatpush1.xpose.msra.mxu0 0.0
  %245 = vmatprep.subr.mxu0 0.0
  %246 = vmatpush1.xpose.msra.mxu0 0.0
  %247 = vmatprep.subr.mxu0 0.0
  %248 = vmatpush1.xpose.msra.mxu0 0.0
  %249 = vmatprep.subr.mxu0 0.0
  %250 = vmatpush1.xpose.msra.mxu0 0.0
  %251 = vmatprep.subr.mxu0 0.0
  %252 = vmatpush1.xpose.msra.mxu0 0.0
  %253 = vmatprep.subr.mxu0 0.0
  %254 = vmatpush1.xpose.msra.mxu0 0.0
  %255 = vmatprep.subr.mxu0 0.0
  %256 = vmatpush1.xpose.msra.mxu0 0.0
  %257 = vmatprep.subr.mxu0 0.0
  %258 = vmatpush1.xpose.msra.mxu0 0.0
  %259 = vmatprep.subr.mxu0 0.0
  %260 = vmatpush1.xpose.msra.mxu0 0.0
  %261 = vmatprep.subr.mxu0 0.0
  %262 = vmatpush1.xpose.msra.mxu0 0.0
  %263 = vmatprep.subr.mxu0 0.0
  %264 = vmatpush1.xpose.msra.mxu0 0.0
  %265 = vmatprep.mubr.f32.mxu0 0.0
  %266 = vmatmul.mubr.f32.gmra.mrb[0].mxu0 %v196
  %v267 = vpop.f32.mrb[0].mxu0
  %v268 = vadd.f32 %v41, %v267
  %v269 = vpop.f32.mrb[0].mxu0
  %270 = vdwg.mxu0
  %v272 = vsel %vm42, %v28, 0
  %v275 = vsel %vm42, %v36, 0
  %277 = vmatprep.subr.mxu0 0.0
  %278 = vmatpush1.xpose.msra.mxu0 %v275
  %279 = vmatprep.subr.mxu0 0.0
  %280 = vmatpush1.xpose.msra.mxu0 0.0
  %281 = vmatprep.subr.mxu0 0.0
  %282 = vmatpush1.xpose.msra.mxu0 0.0
  %283 = vmatprep.subr.mxu0 0.0
  %284 = vmatpush1.xpose.msra.mxu0 0.0
  %285 = vmatprep.subr.mxu0 0.0
  %286 = vmatpush1.xpose.msra.mxu0 0.0
  %287 = vmatprep.subr.mxu0 0.0
  %288 = vmatpush1.xpose.msra.mxu0 0.0
  %289 = vmatprep.subr.mxu0 0.0
  %290 = vmatpush1.xpose.msra.mxu0 0.0
  %291 = vmatprep.subr.mxu0 0.0
  %292 = vmatpush1.xpose.msra.mxu0 0.0
  %293 = vmatprep.subr.mxu0 0.0
  %294 = vmatpush1.xpose.msra.mxu0 0.0
  %295 = vmatprep.subr.mxu0 0.0
  %296 = vmatpush1.xpose.msra.mxu0 0.0
  %297 = vmatprep.subr.mxu0 0.0
  %298 = vmatpush1.xpose.msra.mxu0 0.0
  %299 = vmatprep.subr.mxu0 0.0
  %300 = vmatpush1.xpose.msra.mxu0 0.0
  %301 = vmatprep.subr.mxu0 0.0
  %302 = vmatpush1.xpose.msra.mxu0 0.0
  %303 = vmatprep.subr.mxu0 0.0
  %304 = vmatpush1.xpose.msra.mxu0 0.0
  %305 = vmatprep.subr.mxu0 0.0
  %306 = vmatpush1.xpose.msra.mxu0 0.0
  %307 = vmatprep.subr.mxu0 0.0
  %308 = vmatpush1.xpose.msra.mxu0 0.0
  %309 = vmatprep.subr.mxu0 0.0
  %310 = vmatpush1.xpose.msra.mxu0 0.0
  %311 = vmatprep.subr.mxu0 0.0
  %312 = vmatpush1.xpose.msra.mxu0 0.0
  %313 = vmatprep.subr.mxu0 0.0
  %314 = vmatpush1.xpose.msra.mxu0 0.0
  %315 = vmatprep.subr.mxu0 0.0
  %316 = vmatpush1.xpose.msra.mxu0 0.0
  %317 = vmatprep.subr.mxu0 0.0
  %318 = vmatpush1.xpose.msra.mxu0 0.0
  %319 = vmatprep.subr.mxu0 0.0
  %320 = vmatpush1.xpose.msra.mxu0 0.0
  %321 = vmatprep.subr.mxu0 0.0
  %322 = vmatpush1.xpose.msra.mxu0 0.0
  %323 = vmatprep.subr.mxu0 0.0
  %324 = vmatpush1.xpose.msra.mxu0 0.0
  %325 = vmatprep.subr.mxu0 0.0
  %326 = vmatpush1.xpose.msra.mxu0 0.0
  %327 = vmatprep.subr.mxu0 0.0
  %328 = vmatpush1.xpose.msra.mxu0 0.0
  %329 = vmatprep.subr.mxu0 0.0
  %330 = vmatpush1.xpose.msra.mxu0 0.0
  %331 = vmatprep.subr.mxu0 0.0
  %332 = vmatpush1.xpose.msra.mxu0 0.0
  %333 = vmatprep.subr.mxu0 0.0
  %334 = vmatpush1.xpose.msra.mxu0 0.0
  %335 = vmatprep.subr.mxu0 0.0
  %336 = vmatpush1.xpose.msra.mxu0 0.0
  %337 = vmatprep.subr.mxu0 0.0
  %338 = vmatpush1.xpose.msra.mxu0 0.0
  %339 = vmatprep.subr.mxu0 0.0
  %340 = vmatpush1.xpose.msra.mxu0 0.0
  %341 = vmatprep.mubr.f32.mxu0 0.0
  %342 = vmatmul.mubr.f32.gmra.mrb[0].mxu0 %v272
  %v343 = vpop.f32.mrb[0].mxu0
  %v344 = vadd.f32 %v41, %v343
  %v345 = vpop.f32.mrb[0].mxu0
  %346 = vdwg.mxu0
  %v348 = vsel %vm42, %v29, 0
  %v351 = vsel %vm42, %v37, 0
  %353 = vmatprep.subr.mxu0 0.0
  %354 = vmatpush1.xpose.msra.mxu0 %v351
  %355 = vmatprep.subr.mxu0 0.0
  %356 = vmatpush1.xpose.msra.mxu0 0.0
  %357 = vmatprep.subr.mxu0 0.0
  %358 = vmatpush1.xpose.msra.mxu0 0.0
  %359 = vmatprep.subr.mxu0 0.0
  %360 = vmatpush1.xpose.msra.mxu0 0.0
  %361 = vmatprep.subr.mxu0 0.0
  %362 = vmatpush1.xpose.msra.mxu0 0.0
  %363 = vmatprep.subr.mxu0 0.0
  %364 = vmatpush1.xpose.msra.mxu0 0.0
  %365 = vmatprep.subr.mxu0 0.0
  %366 = vmatpush1.xpose.msra.mxu0 0.0
  %367 = vmatprep.subr.mxu0 0.0
  %368 = vmatpush1.xpose.msra.mxu0 0.0
  %369 = vmatprep.subr.mxu0 0.0
  %370 = vmatpush1.xpose.msra.mxu0 0.0
  %371 = vmatprep.subr.mxu0 0.0
  %372 = vmatpush1.xpose.msra.mxu0 0.0
  %373 = vmatprep.subr.mxu0 0.0
  %374 = vmatpush1.xpose.msra.mxu0 0.0
  %375 = vmatprep.subr.mxu0 0.0
  %376 = vmatpush1.xpose.msra.mxu0 0.0
  %377 = vmatprep.subr.mxu0 0.0
  %378 = vmatpush1.xpose.msra.mxu0 0.0
  %379 = vmatprep.subr.mxu0 0.0
  %380 = vmatpush1.xpose.msra.mxu0 0.0
  %381 = vmatprep.subr.mxu0 0.0
  %382 = vmatpush1.xpose.msra.mxu0 0.0
  %383 = vmatprep.subr.mxu0 0.0
  %384 = vmatpush1.xpose.msra.mxu0 0.0
  %385 = vmatprep.subr.mxu0 0.0
  %386 = vmatpush1.xpose.msra.mxu0 0.0
  %387 = vmatprep.subr.mxu0 0.0
  %388 = vmatpush1.xpose.msra.mxu0 0.0
  %389 = vmatprep.subr.mxu0 0.0
  %390 = vmatpush1.xpose.msra.mxu0 0.0
  %391 = vmatprep.subr.mxu0 0.0
  %392 = vmatpush1.xpose.msra.mxu0 0.0
  %393 = vmatprep.subr.mxu0 0.0
  %394 = vmatpush1.xpose.msra.mxu0 0.0
  %395 = vmatprep.subr.mxu0 0.0
  %396 = vmatpush1.xpose.msra.mxu0 0.0
  %397 = vmatprep.subr.mxu0 0.0
  %398 = vmatpush1.xpose.msra.mxu0 0.0
  %399 = vmatprep.subr.mxu0 0.0
  %400 = vmatpush1.xpose.msra.mxu0 0.0
  %401 = vmatprep.subr.mxu0 0.0
  %402 = vmatpush1.xpose.msra.mxu0 0.0
  %403 = vmatprep.subr.mxu0 0.0
  %404 = vmatpush1.xpose.msra.mxu0 0.0
  %405 = vmatprep.subr.mxu0 0.0
  %406 = vmatpush1.xpose.msra.mxu0 0.0
  %407 = vmatprep.subr.mxu0 0.0
  %408 = vmatpush1.xpose.msra.mxu0 0.0
  %409 = vmatprep.subr.mxu0 0.0
  %410 = vmatpush1.xpose.msra.mxu0 0.0
  %411 = vmatprep.subr.mxu0 0.0
  %412 = vmatpush1.xpose.msra.mxu0 0.0
  %413 = vmatprep.subr.mxu0 0.0
  %414 = vmatpush1.xpose.msra.mxu0 0.0
  %415 = vmatprep.subr.mxu0 0.0
  %416 = vmatpush1.xpose.msra.mxu0 0.0
  %417 = vmatprep.mubr.f32.mxu0 0.0
  %418 = vmatmul.mubr.f32.gmra.mrb[0].mxu0 %v348
  %v419 = vpop.f32.mrb[0].mxu0
  %v420 = vadd.f32 %v41, %v419
  %v421 = vpop.f32.mrb[0].mxu0
  %422 = vdwg.mxu0
  %v424 = vsel %vm42, %v30, 0
  %v427 = vsel %vm42, %v38, 0
  %429 = vmatprep.subr.mxu0 0.0
  %430 = vmatpush1.xpose.msra.mxu0 %v427
  %431 = vmatprep.subr.mxu0 0.0
  %432 = vmatpush1.xpose.msra.mxu0 0.0
  %433 = vmatprep.subr.mxu0 0.0
  %434 = vmatpush1.xpose.msra.mxu0 0.0
  %435 = vmatprep.subr.mxu0 0.0
  %436 = vmatpush1.xpose.msra.mxu0 0.0
  %437 = vmatprep.subr.mxu0 0.0
  %438 = vmatpush1.xpose.msra.mxu0 0.0
  %439 = vmatprep.subr.mxu0 0.0
  %440 = vmatpush1.xpose.msra.mxu0 0.0
  %441 = vmatprep.subr.mxu0 0.0
  %442 = vmatpush1.xpose.msra.mxu0 0.0
  %443 = vmatprep.subr.mxu0 0.0
  %444 = vmatpush1.xpose.msra.mxu0 0.0
  %445 = vmatprep.subr.mxu0 0.0
  %446 = vmatpush1.xpose.msra.mxu0 0.0
  %447 = vmatprep.subr.mxu0 0.0
  %448 = vmatpush1.xpose.msra.mxu0 0.0
  %449 = vmatprep.subr.mxu0 0.0
  %450 = vmatpush1.xpose.msra.mxu0 0.0
  %451 = vmatprep.subr.mxu0 0.0
  %452 = vmatpush1.xpose.msra.mxu0 0.0
  %453 = vmatprep.subr.mxu0 0.0
  %454 = vmatpush1.xpose.msra.mxu0 0.0
  %455 = vmatprep.subr.mxu0 0.0
  %456 = vmatpush1.xpose.msra.mxu0 0.0
  %457 = vmatprep.subr.mxu0 0.0
  %458 = vmatpush1.xpose.msra.mxu0 0.0
  %459 = vmatprep.subr.mxu0 0.0
  %460 = vmatpush1.xpose.msra.mxu0 0.0
  %461 = vmatprep.subr.mxu0 0.0
  %462 = vmatpush1.xpose.msra.mxu0 0.0
  %463 = vmatprep.subr.mxu0 0.0
  %464 = vmatpush1.xpose.msra.mxu0 0.0
  %465 = vmatprep.subr.mxu0 0.0
  %466 = vmatpush1.xpose.msra.mxu0 0.0
  %467 = vmatprep.subr.mxu0 0.0
  %468 = vmatpush1.xpose.msra.mxu0 0.0
  %469 = vmatprep.subr.mxu0 0.0
  %470 = vmatpush1.xpose.msra.mxu0 0.0
  %471 = vmatprep.subr.mxu0 0.0
  %472 = vmatpush1.xpose.msra.mxu0 0.0
  %473 = vmatprep.subr.mxu0 0.0
  %474 = vmatpush1.xpose.msra.mxu0 0.0
  %475 = vmatprep.subr.mxu0 0.0
  %476 = vmatpush1.xpose.msra.mxu0 0.0
  %477 = vmatprep.subr.mxu0 0.0
  %478 = vmatpush1.xpose.msra.mxu0 0.0
  %479 = vmatprep.subr.mxu0 0.0
  %480 = vmatpush1.xpose.msra.mxu0 0.0
  %481 = vmatprep.subr.mxu0 0.0
  %482 = vmatpush1.xpose.msra.mxu0 0.0
  %483 = vmatprep.subr.mxu0 0.0
  %484 = vmatpush1.xpose.msra.mxu0 0.0
  %485 = vmatprep.subr.mxu0 0.0
  %486 = vmatpush1.xpose.msra.mxu0 0.0
  %487 = vmatprep.subr.mxu0 0.0
  %488 = vmatpush1.xpose.msra.mxu0 0.0
  %489 = vmatprep.subr.mxu0 0.0
  %490 = vmatpush1.xpose.msra.mxu0 0.0
  %491 = vmatprep.subr.mxu0 0.0
  %492 = vmatpush1.xpose.msra.mxu0 0.0
  %493 = vmatprep.mubr.f32.mxu0 0.0
  %494 = vmatmul.mubr.f32.gmra.mrb[0].mxu0 %v424
  %v495 = vpop.f32.mrb[0].mxu0
  %v496 = vadd.f32 %v41, %v495
  %v497 = vpop.f32.mrb[0].mxu0
  %498 = vdwg.mxu0
  %v500 = vsel %vm42, %v31, 0
  %v503 = vsel %vm42, %v39, 0
  %505 = vmatprep.subr.mxu0 0.0
  %506 = vmatpush1.xpose.msra.mxu0 %v503
  %507 = vmatprep.subr.mxu0 0.0
  %508 = vmatpush1.xpose.msra.mxu0 0.0
  %509 = vmatprep.subr.mxu0 0.0
  %510 = vmatpush1.xpose.msra.mxu0 0.0
  %511 = vmatprep.subr.mxu0 0.0
  %512 = vmatpush1.xpose.msra.mxu0 0.0
  %513 = vmatprep.subr.mxu0 0.0
  %514 = vmatpush1.xpose.msra.mxu0 0.0
  %515 = vmatprep.subr.mxu0 0.0
  %516 = vmatpush1.xpose.msra.mxu0 0.0
  %517 = vmatprep.subr.mxu0 0.0
  %518 = vmatpush1.xpose.msra.mxu0 0.0
  %519 = vmatprep.subr.mxu0 0.0
  %520 = vmatpush1.xpose.msra.mxu0 0.0
  %521 = vmatprep.subr.mxu0 0.0
  %522 = vmatpush1.xpose.msra.mxu0 0.0
  %523 = vmatprep.subr.mxu0 0.0
  %524 = vmatpush1.xpose.msra.mxu0 0.0
  %525 = vmatprep.subr.mxu0 0.0
  %526 = vmatpush1.xpose.msra.mxu0 0.0
  %527 = vmatprep.subr.mxu0 0.0
  %528 = vmatpush1.xpose.msra.mxu0 0.0
  %529 = vmatprep.subr.mxu0 0.0
  %530 = vmatpush1.xpose.msra.mxu0 0.0
  %531 = vmatprep.subr.mxu0 0.0
  %532 = vmatpush1.xpose.msra.mxu0 0.0
  %533 = vmatprep.subr.mxu0 0.0
  %534 = vmatpush1.xpose.msra.mxu0 0.0
  %535 = vmatprep.subr.mxu0 0.0
  %536 = vmatpush1.xpose.msra.mxu0 0.0
  %537 = vmatprep.subr.mxu0 0.0
  %538 = vmatpush1.xpose.msra.mxu0 0.0
  %539 = vmatprep.subr.mxu0 0.0
  %540 = vmatpush1.xpose.msra.mxu0 0.0
  %541 = vmatprep.subr.mxu0 0.0
  %542 = vmatpush1.xpose.msra.mxu0 0.0
  %543 = vmatprep.subr.mxu0 0.0
  %544 = vmatpush1.xpose.msra.mxu0 0.0
  %545 = vmatprep.subr.mxu0 0.0
  %546 = vmatpush1.xpose.msra.mxu0 0.0
  %547 = vmatprep.subr.mxu0 0.0
  %548 = vmatpush1.xpose.msra.mxu0 0.0
  %549 = vmatprep.subr.mxu0 0.0
  %550 = vmatpush1.xpose.msra.mxu0 0.0
  %551 = vmatprep.subr.mxu0 0.0
  %552 = vmatpush1.xpose.msra.mxu0 0.0
  %553 = vmatprep.subr.mxu0 0.0
  %554 = vmatpush1.xpose.msra.mxu0 0.0
  %555 = vmatprep.subr.mxu0 0.0
  %556 = vmatpush1.xpose.msra.mxu0 0.0
  %557 = vmatprep.subr.mxu0 0.0
  %558 = vmatpush1.xpose.msra.mxu0 0.0
  %559 = vmatprep.subr.mxu0 0.0
  %560 = vmatpush1.xpose.msra.mxu0 0.0
  %561 = vmatprep.subr.mxu0 0.0
  %562 = vmatpush1.xpose.msra.mxu0 0.0
  %563 = vmatprep.subr.mxu0 0.0
  %564 = vmatpush1.xpose.msra.mxu0 0.0
  %565 = vmatprep.subr.mxu0 0.0
  %566 = vmatpush1.xpose.msra.mxu0 0.0
  %567 = vmatprep.subr.mxu0 0.0
  %568 = vmatpush1.xpose.msra.mxu0 0.0
  %569 = vmatprep.mubr.f32.mxu0 0.0
  %570 = vmatmul.mubr.f32.gmra.mrb[0].mxu0 %v500
  %v571 = vpop.f32.mrb[0].mxu0
  %v572 = vadd.f32 %v41, %v571
  %v573 = vpop.f32.mrb[0].mxu0
  %574 = vdwg.mxu0
  %v576 = vsel %vm42, %v32, 0
  %v579 = vsel %vm42, %v40, 0
  %581 = vmatprep.subr.mxu0 0.0
  %582 = vmatpush1.xpose.msra.mxu0 %v579
  %583 = vmatprep.subr.mxu0 0.0
  %584 = vmatpush1.xpose.msra.mxu0 0.0
  %585 = vmatprep.subr.mxu0 0.0
  %586 = vmatpush1.xpose.msra.mxu0 0.0
  %587 = vmatprep.subr.mxu0 0.0
  %588 = vmatpush1.xpose.msra.mxu0 0.0
  %589 = vmatprep.subr.mxu0 0.0
  %590 = vmatpush1.xpose.msra.mxu0 0.0
  %591 = vmatprep.subr.mxu0 0.0
  %592 = vmatpush1.xpose.msra.mxu0 0.0
  %593 = vmatprep.subr.mxu0 0.0
  %594 = vmatpush1.xpose.msra.mxu0 0.0
  %595 = vmatprep.subr.mxu0 0.0
  %596 = vmatpush1.xpose.msra.mxu0 0.0
  %597 = vmatprep.subr.mxu0 0.0
  %598 = vmatpush1.xpose.msra.mxu0 0.0
  %599 = vmatprep.subr.mxu0 0.0
  %600 = vmatpush1.xpose.msra.mxu0 0.0
  %601 = vmatprep.subr.mxu0 0.0
  %602 = vmatpush1.xpose.msra.mxu0 0.0
  %603 = vmatprep.subr.mxu0 0.0
  %604 = vmatpush1.xpose.msra.mxu0 0.0
  %605 = vmatprep.subr.mxu0 0.0
  %606 = vmatpush1.xpose.msra.mxu0 0.0
  %607 = vmatprep.subr.mxu0 0.0
  %608 = vmatpush1.xpose.msra.mxu0 0.0
  %609 = vmatprep.subr.mxu0 0.0
  %610 = vmatpush1.xpose.msra.mxu0 0.0
  %611 = vmatprep.subr.mxu0 0.0
  %612 = vmatpush1.xpose.msra.mxu0 0.0
  %613 = vmatprep.subr.mxu0 0.0
  %614 = vmatpush1.xpose.msra.mxu0 0.0
  %615 = vmatprep.subr.mxu0 0.0
  %616 = vmatpush1.xpose.msra.mxu0 0.0
  %617 = vmatprep.subr.mxu0 0.0
  %618 = vmatpush1.xpose.msra.mxu0 0.0
  %619 = vmatprep.subr.mxu0 0.0
  %620 = vmatpush1.xpose.msra.mxu0 0.0
  %621 = vmatprep.subr.mxu0 0.0
  %622 = vmatpush1.xpose.msra.mxu0 0.0
  %623 = vmatprep.subr.mxu0 0.0
  %624 = vmatpush1.xpose.msra.mxu0 0.0
  %625 = vmatprep.subr.mxu0 0.0
  %626 = vmatpush1.xpose.msra.mxu0 0.0
  %627 = vmatprep.subr.mxu0 0.0
  %628 = vmatpush1.xpose.msra.mxu0 0.0
  %629 = vmatprep.subr.mxu0 0.0
  %630 = vmatpush1.xpose.msra.mxu0 0.0
  %631 = vmatprep.subr.mxu0 0.0
  %632 = vmatpush1.xpose.msra.mxu0 0.0
  %633 = vmatprep.subr.mxu0 0.0
  %634 = vmatpush1.xpose.msra.mxu0 0.0
  %635 = vmatprep.subr.mxu0 0.0
  %636 = vmatpush1.xpose.msra.mxu0 0.0
  %637 = vmatprep.subr.mxu0 0.0
  %638 = vmatpush1.xpose.msra.mxu0 0.0
  %639 = vmatprep.subr.mxu0 0.0
  %640 = vmatpush1.xpose.msra.mxu0 0.0
  %641 = vmatprep.subr.mxu0 0.0
  %642 = vmatpush1.xpose.msra.mxu0 0.0
  %643 = vmatprep.subr.mxu0 0.0
  %644 = vmatpush1.xpose.msra.mxu0 0.0
  %645 = vmatprep.mubr.f32.mxu0 0.0
  %646 = vmatmul.mubr.f32.gmra.mrb[0].mxu0 %v576
  %v647 = vpop.f32.mrb[0].mxu0
  %v648 = vadd.f32 %v41, %v647
  %v649 = vpop.f32.mrb[0].mxu0
  %650 = vdwg.mxu0
  %v651 = vsel %vm42, %v116, -inf
  %652 = vmax.xlane.f32.xlu0 %v651
  %v653 = vpop.xlane.xlu0 %652
  %v654 = vsel %vm42, %v192, -inf
  %655 = vmax.xlane.f32.xlu0 %v654
  %v656 = vpop.xlane.xlu0 %655
  %v657 = vsel %vm42, %v268, -inf
  %658 = vmax.xlane.f32.xlu0 %v657
  %v659 = vpop.xlane.xlu0 %658
  %v660 = vsel %vm42, %v344, -inf
  %661 = vmax.xlane.f32.xlu0 %v660
  %v662 = vpop.xlane.xlu0 %661
  %v663 = vsel %vm42, %v420, -inf
  %664 = vmax.xlane.f32.xlu0 %v663
  %v665 = vpop.xlane.xlu0 %664
  %v666 = vsel %vm42, %v496, -inf
  %667 = vmax.xlane.f32.xlu0 %v666
  %v668 = vpop.xlane.xlu0 %667
  %v669 = vsel %vm42, %v572, -inf
  %670 = vmax.xlane.f32.xlu0 %v669
  %v671 = vpop.xlane.xlu0 %670
  %v672 = vsel %vm42, %v648, -inf
  %673 = vmax.xlane.f32.xlu0 %v672
  %v674 = vpop.xlane.xlu0 %673
  %v675 = vsub.f32 %v116, %v653
  %v676 = vsub.f32 %v192, %v656
  %v677 = vsub.f32 %v268, %v659
  %v678 = vsub.f32 %v344, %v662
  %v679 = vsub.f32 %v420, %v665
  %v680 = vsub.f32 %v496, %v668
  %v681 = vsub.f32 %v572, %v671
  %v682 = vsub.f32 %v648, %v674
  %v683 = vmul.f32 %v675, 1.442695
  %v684 = vpow.pop %v683
  %v685 = vmul.f32 %v676, 1.442695
  %v686 = vpow.pop %v685
  %v687 = vmul.f32 %v677, 1.442695
  %v688 = vpow.pop %v687
  %v689 = vmul.f32 %v678, 1.442695
  %v690 = vpow.pop %v689
  %v691 = vmul.f32 %v679, 1.442695
  %v692 = vpow.pop %v691
  %v693 = vmul.f32 %v680, 1.442695
  %v694 = vpow.pop %v693
  %v695 = vmul.f32 %v681, 1.442695
  %v696 = vpow.pop %v695
  %v697 = vmul.f32 %v682, 1.442695
  %v698 = vpow.pop %v697
  %v699 = vsel %vm42, %v684, 0.0
  %700 = vadd.xlane.f32.xlu0 %v699
  %v701 = vpop.xlane.xlu0 %700
  %v702 = vsel %vm42, %v686, 0.0
  %703 = vadd.xlane.f32.xlu0 %v702
  %v704 = vpop.xlane.xlu0 %703
  %v705 = vsel %vm42, %v688, 0.0
  %706 = vadd.xlane.f32.xlu0 %v705
  %v707 = vpop.xlane.xlu0 %706
  %v708 = vsel %vm42, %v690, 0.0
  %709 = vadd.xlane.f32.xlu0 %v708
  %v710 = vpop.xlane.xlu0 %709
  %v711 = vsel %vm42, %v692, 0.0
  %712 = vadd.xlane.f32.xlu0 %v711
  %v713 = vpop.xlane.xlu0 %712
  %v714 = vsel %vm42, %v694, 0.0
  %715 = vadd.xlane.f32.xlu0 %v714
  %v716 = vpop.xlane.xlu0 %715
  %v717 = vsel %vm42, %v696, 0.0
  %718 = vadd.xlane.f32.xlu0 %v717
  %v719 = vpop.xlane.xlu0 %718
  %v720 = vsel %vm42, %v698, 0.0
  %721 = vadd.xlane.f32.xlu0 %v720
  %v722 = vpop.xlane.xlu0 %721
  %v723 = vrcp.pop %v701
  %v724 = vrcp.pop %v704
  %v725 = vrcp.pop %v707
  %v726 = vrcp.pop %v710
  %v727 = vrcp.pop %v713
  %v728 = vrcp.pop %v716
  %v729 = vrcp.pop %v719
  %v730 = vrcp.pop %v722
  %v731 = vmul.f32 %v684, %v723
  %v732 = vmul.f32 %v686, %v724
  %v733 = vmul.f32 %v688, %v725
  %v734 = vmul.f32 %v690, %v726
  %v735 = vmul.f32 %v692, %v727
  %v736 = vmul.f32 %v694, %v728
  %v737 = vmul.f32 %v696, %v729
  %v738 = vmul.f32 %v698, %v730
  %v739 = vld [vmem:[%s2] sm:$0xff]
  %v740 = vld [vmem:[%s2 + $0x8] sm:$0xff]
  %v741 = vld [vmem:[%s2 + $0x10] sm:$0xff]
  %v742 = vld [vmem:[%s2 + $0x18] sm:$0xff]
  %v743 = vld [vmem:[%s2 + $0x20] sm:$0xff]
  %v744 = vld [vmem:[%s2 + $0x28] sm:$0xff]
  %v745 = vld [vmem:[%s2 + $0x30] sm:$0xff]
  %v746 = vld [vmem:[%s2 + $0x38] sm:$0xff]
  %v748 = vsel %vm42, %v731, 0
  %750 = vmatprep.subr.mxu0 0.0
  %751 = vmatpush1.msra.mxu0 %v739
  %752 = vmatprep.subr.mxu0 0.0
  %753 = vmatpush1.msra.mxu0 0.0
  %754 = vmatprep.subr.mxu0 0.0
  %755 = vmatpush1.msra.mxu0 0.0
  %756 = vmatprep.subr.mxu0 0.0
  %757 = vmatpush1.msra.mxu0 0.0
  %758 = vmatprep.subr.mxu0 0.0
  %759 = vmatpush1.msra.mxu0 0.0
  %760 = vmatprep.subr.mxu0 0.0
  %761 = vmatpush1.msra.mxu0 0.0
  %762 = vmatprep.subr.mxu0 0.0
  %763 = vmatpush1.msra.mxu0 0.0
  %764 = vmatprep.subr.mxu0 0.0
  %765 = vmatpush1.msra.mxu0 0.0
  %766 = vmatprep.subr.mxu0 0.0
  %767 = vmatpush1.msra.mxu0 0.0
  %768 = vmatprep.subr.mxu0 0.0
  %769 = vmatpush1.msra.mxu0 0.0
  %770 = vmatprep.subr.mxu0 0.0
  %771 = vmatpush1.msra.mxu0 0.0
  %772 = vmatprep.subr.mxu0 0.0
  %773 = vmatpush1.msra.mxu0 0.0
  %774 = vmatprep.subr.mxu0 0.0
  %775 = vmatpush1.msra.mxu0 0.0
  %776 = vmatprep.subr.mxu0 0.0
  %777 = vmatpush1.msra.mxu0 0.0
  %778 = vmatprep.subr.mxu0 0.0
  %779 = vmatpush1.msra.mxu0 0.0
  %780 = vmatprep.subr.mxu0 0.0
  %781 = vmatpush1.msra.mxu0 0.0
  %782 = vmatprep.subr.mxu0 0.0
  %783 = vmatpush1.msra.mxu0 0.0
  %784 = vmatprep.subr.mxu0 0.0
  %785 = vmatpush1.msra.mxu0 0.0
  %786 = vmatprep.subr.mxu0 0.0
  %787 = vmatpush1.msra.mxu0 0.0
  %788 = vmatprep.subr.mxu0 0.0
  %789 = vmatpush1.msra.mxu0 0.0
  %790 = vmatprep.subr.mxu0 0.0
  %791 = vmatpush1.msra.mxu0 0.0
  %792 = vmatprep.subr.mxu0 0.0
  %793 = vmatpush1.msra.mxu0 0.0
  %794 = vmatprep.subr.mxu0 0.0
  %795 = vmatpush1.msra.mxu0 0.0
  %796 = vmatprep.subr.mxu0 0.0
  %797 = vmatpush1.msra.mxu0 0.0
  %798 = vmatprep.subr.mxu0 0.0
  %799 = vmatpush1.msra.mxu0 0.0
  %800 = vmatprep.subr.mxu0 0.0
  %801 = vmatpush1.msra.mxu0 0.0
  %802 = vmatprep.subr.mxu0 0.0
  %803 = vmatpush1.msra.mxu0 0.0
  %804 = vmatprep.subr.mxu0 0.0
  %805 = vmatpush1.msra.mxu0 0.0
  %806 = vmatprep.subr.mxu0 0.0
  %807 = vmatpush1.msra.mxu0 0.0
  %808 = vmatprep.subr.mxu0 0.0
  %809 = vmatpush1.msra.mxu0 0.0
  %810 = vmatprep.subr.mxu0 0.0
  %811 = vmatpush1.msra.mxu0 0.0
  %812 = vmatprep.subr.mxu0 0.0
  %813 = vmatpush1.msra.mxu0 0.0
  %814 = vmatprep.mubr.f32.mxu0 0.0
  %815 = vmatmul.mubr.f32.gmra.mrb[0].mxu0 %v748
  %v816 = vpop.f32.mrb[0].mxu0
  %v817 = vadd.f32 0.0, %v816
  %v818 = vpop.f32.mrb[0].mxu0
  %819 = vdwg.mxu0
  %v821 = vsel %vm42, %v732, 0
  %823 = vmatprep.subr.mxu0 0.0
  %824 = vmatpush1.msra.mxu0 %v740
  %825 = vmatprep.subr.mxu0 0.0
  %826 = vmatpush1.msra.mxu0 0.0
  %827 = vmatprep.subr.mxu0 0.0
  %828 = vmatpush1.msra.mxu0 0.0
  %829 = vmatprep.subr.mxu0 0.0
  %830 = vmatpush1.msra.mxu0 0.0
  %831 = vmatprep.subr.mxu0 0.0
  %832 = vmatpush1.msra.mxu0 0.0
  %833 = vmatprep.subr.mxu0 0.0
  %834 = vmatpush1.msra.mxu0 0.0
  %835 = vmatprep.subr.mxu0 0.0
  %836 = vmatpush1.msra.mxu0 0.0
  %837 = vmatprep.subr.mxu0 0.0
  %838 = vmatpush1.msra.mxu0 0.0
  %839 = vmatprep.subr.mxu0 0.0
  %840 = vmatpush1.msra.mxu0 0.0
  %841 = vmatprep.subr.mxu0 0.0
  %842 = vmatpush1.msra.mxu0 0.0
  %843 = vmatprep.subr.mxu0 0.0
  %844 = vmatpush1.msra.mxu0 0.0
  %845 = vmatprep.subr.mxu0 0.0
  %846 = vmatpush1.msra.mxu0 0.0
  %847 = vmatprep.subr.mxu0 0.0
  %848 = vmatpush1.msra.mxu0 0.0
  %849 = vmatprep.subr.mxu0 0.0
  %850 = vmatpush1.msra.mxu0 0.0
  %851 = vmatprep.subr.mxu0 0.0
  %852 = vmatpush1.msra.mxu0 0.0
  %853 = vmatprep.subr.mxu0 0.0
  %854 = vmatpush1.msra.mxu0 0.0
  %855 = vmatprep.subr.mxu0 0.0
  %856 = vmatpush1.msra.mxu0 0.0
  %857 = vmatprep.subr.mxu0 0.0
  %858 = vmatpush1.msra.mxu0 0.0
  %859 = vmatprep.subr.mxu0 0.0
  %860 = vmatpush1.msra.mxu0 0.0
  %861 = vmatprep.subr.mxu0 0.0
  %862 = vmatpush1.msra.mxu0 0.0
  %863 = vmatprep.subr.mxu0 0.0
  %864 = vmatpush1.msra.mxu0 0.0
  %865 = vmatprep.subr.mxu0 0.0
  %866 = vmatpush1.msra.mxu0 0.0
  %867 = vmatprep.subr.mxu0 0.0
  %868 = vmatpush1.msra.mxu0 0.0
  %869 = vmatprep.subr.mxu0 0.0
  %870 = vmatpush1.msra.mxu0 0.0
  %871 = vmatprep.subr.mxu0 0.0
  %872 = vmatpush1.msra.mxu0 0.0
  %873 = vmatprep.subr.mxu0 0.0
  %874 = vmatpush1.msra.mxu0 0.0
  %875 = vmatprep.subr.mxu0 0.0
  %876 = vmatpush1.msra.mxu0 0.0
  %877 = vmatprep.subr.mxu0 0.0
  %878 = vmatpush1.msra.mxu0 0.0
  %879 = vmatprep.subr.mxu0 0.0
  %880 = vmatpush1.msra.mxu0 0.0
  %881 = vmatprep.subr.mxu0 0.0
  %882 = vmatpush1.msra.mxu0 0.0
  %883 = vmatprep.subr.mxu0 0.0
  %884 = vmatpush1.msra.mxu0 0.0
  %885 = vmatprep.subr.mxu0 0.0
  %886 = vmatpush1.msra.mxu0 0.0
  %887 = vmatprep.mubr.f32.mxu0 0.0
  %888 = vmatmul.mubr.f32.gmra.mrb[0].mxu0 %v821
  %v889 = vpop.f32.mrb[0].mxu0
  %v890 = vadd.f32 0.0, %v889
  %v891 = vpop.f32.mrb[0].mxu0
  %892 = vdwg.mxu0
  %v894 = vsel %vm42, %v733, 0
  %896 = vmatprep.subr.mxu0 0.0
  %897 = vmatpush1.msra.mxu0 %v741
  %898 = vmatprep.subr.mxu0 0.0
  %899 = vmatpush1.msra.mxu0 0.0
  %900 = vmatprep.subr.mxu0 0.0
  %901 = vmatpush1.msra.mxu0 0.0
  %902 = vmatprep.subr.mxu0 0.0
  %903 = vmatpush1.msra.mxu0 0.0
  %904 = vmatprep.subr.mxu0 0.0
  %905 = vmatpush1.msra.mxu0 0.0
  %906 = vmatprep.subr.mxu0 0.0
  %907 = vmatpush1.msra.mxu0 0.0
  %908 = vmatprep.subr.mxu0 0.0
  %909 = vmatpush1.msra.mxu0 0.0
  %910 = vmatprep.subr.mxu0 0.0
  %911 = vmatpush1.msra.mxu0 0.0
  %912 = vmatprep.subr.mxu0 0.0
  %913 = vmatpush1.msra.mxu0 0.0
  %914 = vmatprep.subr.mxu0 0.0
  %915 = vmatpush1.msra.mxu0 0.0
  %916 = vmatprep.subr.mxu0 0.0
  %917 = vmatpush1.msra.mxu0 0.0
  %918 = vmatprep.subr.mxu0 0.0
  %919 = vmatpush1.msra.mxu0 0.0
  %920 = vmatprep.subr.mxu0 0.0
  %921 = vmatpush1.msra.mxu0 0.0
  %922 = vmatprep.subr.mxu0 0.0
  %923 = vmatpush1.msra.mxu0 0.0
  %924 = vmatprep.subr.mxu0 0.0
  %925 = vmatpush1.msra.mxu0 0.0
  %926 = vmatprep.subr.mxu0 0.0
  %927 = vmatpush1.msra.mxu0 0.0
  %928 = vmatprep.subr.mxu0 0.0
  %929 = vmatpush1.msra.mxu0 0.0
  %930 = vmatprep.subr.mxu0 0.0
  %931 = vmatpush1.msra.mxu0 0.0
  %932 = vmatprep.subr.mxu0 0.0
  %933 = vmatpush1.msra.mxu0 0.0
  %934 = vmatprep.subr.mxu0 0.0
  %935 = vmatpush1.msra.mxu0 0.0
  %936 = vmatprep.subr.mxu0 0.0
  %937 = vmatpush1.msra.mxu0 0.0
  %938 = vmatprep.subr.mxu0 0.0
  %939 = vmatpush1.msra.mxu0 0.0
  %940 = vmatprep.subr.mxu0 0.0
  %941 = vmatpush1.msra.mxu0 0.0
  %942 = vmatprep.subr.mxu0 0.0
  %943 = vmatpush1.msra.mxu0 0.0
  %944 = vmatprep.subr.mxu0 0.0
  %945 = vmatpush1.msra.mxu0 0.0
  %946 = vmatprep.subr.mxu0 0.0
  %947 = vmatpush1.msra.mxu0 0.0
  %948 = vmatprep.subr.mxu0 0.0
  %949 = vmatpush1.msra.mxu0 0.0
  %950 = vmatprep.subr.mxu0 0.0
  %951 = vmatpush1.msra.mxu0 0.0
  %952 = vmatprep.subr.mxu0 0.0
  %953 = vmatpush1.msra.mxu0 0.0
  %954 = vmatprep.subr.mxu0 0.0
  %955 = vmatpush1.msra.mxu0 0.0
  %956 = vmatprep.subr.mxu0 0.0
  %957 = vmatpush1.msra.mxu0 0.0
  %958 = vmatprep.subr.mxu0 0.0
  %959 = vmatpush1.msra.mxu0 0.0
  %960 = vmatprep.mubr.f32.mxu0 0.0
  %961 = vmatmul.mubr.f32.gmra.mrb[0].mxu0 %v894
  %v962 = vpop.f32.mrb[0].mxu0
  %v963 = vadd.f32 0.0, %v962
  %v964 = vpop.f32.mrb[0].mxu0
  %965 = vdwg.mxu0
  %v967 = vsel %vm42, %v734, 0
  %969 = vmatprep.subr.mxu0 0.0
  %970 = vmatpush1.msra.mxu0 %v742
  %971 = vmatprep.subr.mxu0 0.0
  %972 = vmatpush1.msra.mxu0 0.0
  %973 = vmatprep.subr.mxu0 0.0
  %974 = vmatpush1.msra.mxu0 0.0
  %975 = vmatprep.subr.mxu0 0.0
  %976 = vmatpush1.msra.mxu0 0.0
  %977 = vmatprep.subr.mxu0 0.0
  %978 = vmatpush1.msra.mxu0 0.0
  %979 = vmatprep.subr.mxu0 0.0
  %980 = vmatpush1.msra.mxu0 0.0
  %981 = vmatprep.subr.mxu0 0.0
  %982 = vmatpush1.msra.mxu0 0.0
  %983 = vmatprep.subr.mxu0 0.0
  %984 = vmatpush1.msra.mxu0 0.0
  %985 = vmatprep.subr.mxu0 0.0
  %986 = vmatpush1.msra.mxu0 0.0
  %987 = vmatprep.subr.mxu0 0.0
  %988 = vmatpush1.msra.mxu0 0.0
  %989 = vmatprep.subr.mxu0 0.0
  %990 = vmatpush1.msra.mxu0 0.0
  %991 = vmatprep.subr.mxu0 0.0
  %992 = vmatpush1.msra.mxu0 0.0
  %993 = vmatprep.subr.mxu0 0.0
  %994 = vmatpush1.msra.mxu0 0.0
  %995 = vmatprep.subr.mxu0 0.0
  %996 = vmatpush1.msra.mxu0 0.0
  %997 = vmatprep.subr.mxu0 0.0
  %998 = vmatpush1.msra.mxu0 0.0
  %999 = vmatprep.subr.mxu0 0.0
  %1000 = vmatpush1.msra.mxu0 0.0
  %1001 = vmatprep.subr.mxu0 0.0
  %1002 = vmatpush1.msra.mxu0 0.0
  %1003 = vmatprep.subr.mxu0 0.0
  %1004 = vmatpush1.msra.mxu0 0.0
  %1005 = vmatprep.subr.mxu0 0.0
  %1006 = vmatpush1.msra.mxu0 0.0
  %1007 = vmatprep.subr.mxu0 0.0
  %1008 = vmatpush1.msra.mxu0 0.0
  %1009 = vmatprep.subr.mxu0 0.0
  %1010 = vmatpush1.msra.mxu0 0.0
  %1011 = vmatprep.subr.mxu0 0.0
  %1012 = vmatpush1.msra.mxu0 0.0
  %1013 = vmatprep.subr.mxu0 0.0
  %1014 = vmatpush1.msra.mxu0 0.0
  %1015 = vmatprep.subr.mxu0 0.0
  %1016 = vmatpush1.msra.mxu0 0.0
  %1017 = vmatprep.subr.mxu0 0.0
  %1018 = vmatpush1.msra.mxu0 0.0
  %1019 = vmatprep.subr.mxu0 0.0
  %1020 = vmatpush1.msra.mxu0 0.0
  %1021 = vmatprep.subr.mxu0 0.0
  %1022 = vmatpush1.msra.mxu0 0.0
  %1023 = vmatprep.subr.mxu0 0.0
  %1024 = vmatpush1.msra.mxu0 0.0
  %1025 = vmatprep.subr.mxu0 0.0
  %1026 = vmatpush1.msra.mxu0 0.0
  %1027 = vmatprep.subr.mxu0 0.0
  %1028 = vmatpush1.msra.mxu0 0.0
  %1029 = vmatprep.subr.mxu0 0.0
  %1030 = vmatpush1.msra.mxu0 0.0
  %1031 = vmatprep.subr.mxu0 0.0
  %1032 = vmatpush1.msra.mxu0 0.0
  %1033 = vmatprep.mubr.f32.mxu0 0.0
  %1034 = vmatmul.mubr.f32.gmra.mrb[0].mxu0 %v967
  %v1035 = vpop.f32.mrb[0].mxu0
  %v1036 = vadd.f32 0.0, %v1035
  %v1037 = vpop.f32.mrb[0].mxu0
  %1038 = vdwg.mxu0
  %v1040 = vsel %vm42, %v735, 0
  %1042 = vmatprep.subr.mxu0 0.0
  %1043 = vmatpush1.msra.mxu0 %v743
  %1044 = vmatprep.subr.mxu0 0.0
  %1045 = vmatpush1.msra.mxu0 0.0
  %1046 = vmatprep.subr.mxu0 0.0
  %1047 = vmatpush1.msra.mxu0 0.0
  %1048 = vmatprep.subr.mxu0 0.0
  %1049 = vmatpush1.msra.mxu0 0.0
  %1050 = vmatprep.subr.mxu0 0.0
  %1051 = vmatpush1.msra.mxu0 0.0
  %1052 = vmatprep.subr.mxu0 0.0
  %1053 = vmatpush1.msra.mxu0 0.0
  %1054 = vmatprep.subr.mxu0 0.0
  %1055 = vmatpush1.msra.mxu0 0.0
  %1056 = vmatprep.subr.mxu0 0.0
  %1057 = vmatpush1.msra.mxu0 0.0
  %1058 = vmatprep.subr.mxu0 0.0
  %1059 = vmatpush1.msra.mxu0 0.0
  %1060 = vmatprep.subr.mxu0 0.0
  %1061 = vmatpush1.msra.mxu0 0.0
  %1062 = vmatprep.subr.mxu0 0.0
  %1063 = vmatpush1.msra.mxu0 0.0
  %1064 = vmatprep.subr.mxu0 0.0
  %1065 = vmatpush1.msra.mxu0 0.0
  %1066 = vmatprep.subr.mxu0 0.0
  %1067 = vmatpush1.msra.mxu0 0.0
  %1068 = vmatprep.subr.mxu0 0.0
  %1069 = vmatpush1.msra.mxu0 0.0
  %1070 = vmatprep.subr.mxu0 0.0
  %1071 = vmatpush1.msra.mxu0 0.0
  %1072 = vmatprep.subr.mxu0 0.0
  %1073 = vmatpush1.msra.mxu0 0.0
  %1074 = vmatprep.subr.mxu0 0.0
  %1075 = vmatpush1.msra.mxu0 0.0
  %1076 = vmatprep.subr.mxu0 0.0
  %1077 = vmatpush1.msra.mxu0 0.0
  %1078 = vmatprep.subr.mxu0 0.0
  %1079 = vmatpush1.msra.mxu0 0.0
  %1080 = vmatprep.subr.mxu0 0.0
  %1081 = vmatpush1.msra.mxu0 0.0
  %1082 = vmatprep.subr.mxu0 0.0
  %1083 = vmatpush1.msra.mxu0 0.0
  %1084 = vmatprep.subr.mxu0 0.0
  %1085 = vmatpush1.msra.mxu0 0.0
  %1086 = vmatprep.subr.mxu0 0.0
  %1087 = vmatpush1.msra.mxu0 0.0
  %1088 = vmatprep.subr.mxu0 0.0
  %1089 = vmatpush1.msra.mxu0 0.0
  %1090 = vmatprep.subr.mxu0 0.0
  %1091 = vmatpush1.msra.mxu0 0.0
  %1092 = vmatprep.subr.mxu0 0.0
  %1093 = vmatpush1.msra.mxu0 0.0
  %1094 = vmatprep.subr.mxu0 0.0
  %1095 = vmatpush1.msra.mxu0 0.0
  %1096 = vmatprep.subr.mxu0 0.0
  %1097 = vmatpush1.msra.mxu0 0.0
  %1098 = vmatprep.subr.mxu0 0.0
  %1099 = vmatpush1.msra.mxu0 0.0
  %1100 = vmatprep.subr.mxu0 0.0
  %1101 = vmatpush1.msra.mxu0 0.0
  %1102 = vmatprep.subr.mxu0 0.0
  %1103 = vmatpush1.msra.mxu0 0.0
  %1104 = vmatprep.subr.mxu0 0.0
  %1105 = vmatpush1.msra.mxu0 0.0
  %1106 = vmatprep.mubr.f32.mxu0 0.0
  %1107 = vmatmul.mubr.f32.gmra.mrb[0].mxu0 %v1040
  %v1108 = vpop.f32.mrb[0].mxu0
  %v1109 = vadd.f32 0.0, %v1108
  %v1110 = vpop.f32.mrb[0].mxu0
  %1111 = vdwg.mxu0
  %v1113 = vsel %vm42, %v736, 0
  %1115 = vmatprep.subr.mxu0 0.0
  %1116 = vmatpush1.msra.mxu0 %v744
  %1117 = vmatprep.subr.mxu0 0.0
  %1118 = vmatpush1.msra.mxu0 0.0
  %1119 = vmatprep.subr.mxu0 0.0
  %1120 = vmatpush1.msra.mxu0 0.0
  %1121 = vmatprep.subr.mxu0 0.0
  %1122 = vmatpush1.msra.mxu0 0.0
  %1123 = vmatprep.subr.mxu0 0.0
  %1124 = vmatpush1.msra.mxu0 0.0
  %1125 = vmatprep.subr.mxu0 0.0
  %1126 = vmatpush1.msra.mxu0 0.0
  %1127 = vmatprep.subr.mxu0 0.0
  %1128 = vmatpush1.msra.mxu0 0.0
  %1129 = vmatprep.subr.mxu0 0.0
  %1130 = vmatpush1.msra.mxu0 0.0
  %1131 = vmatprep.subr.mxu0 0.0
  %1132 = vmatpush1.msra.mxu0 0.0
  %1133 = vmatprep.subr.mxu0 0.0
  %1134 = vmatpush1.msra.mxu0 0.0
  %1135 = vmatprep.subr.mxu0 0.0
  %1136 = vmatpush1.msra.mxu0 0.0
  %1137 = vmatprep.subr.mxu0 0.0
  %1138 = vmatpush1.msra.mxu0 0.0
  %1139 = vmatprep.subr.mxu0 0.0
  %1140 = vmatpush1.msra.mxu0 0.0
  %1141 = vmatprep.subr.mxu0 0.0
  %1142 = vmatpush1.msra.mxu0 0.0
  %1143 = vmatprep.subr.mxu0 0.0
  %1144 = vmatpush1.msra.mxu0 0.0
  %1145 = vmatprep.subr.mxu0 0.0
  %1146 = vmatpush1.msra.mxu0 0.0
  %1147 = vmatprep.subr.mxu0 0.0
  %1148 = vmatpush1.msra.mxu0 0.0
  %1149 = vmatprep.subr.mxu0 0.0
  %1150 = vmatpush1.msra.mxu0 0.0
  %1151 = vmatprep.subr.mxu0 0.0
  %1152 = vmatpush1.msra.mxu0 0.0
  %1153 = vmatprep.subr.mxu0 0.0
  %1154 = vmatpush1.msra.mxu0 0.0
  %1155 = vmatprep.subr.mxu0 0.0
  %1156 = vmatpush1.msra.mxu0 0.0
  %1157 = vmatprep.subr.mxu0 0.0
  %1158 = vmatpush1.msra.mxu0 0.0
  %1159 = vmatprep.subr.mxu0 0.0
  %1160 = vmatpush1.msra.mxu0 0.0
  %1161 = vmatprep.subr.mxu0 0.0
  %1162 = vmatpush1.msra.mxu0 0.0
  %1163 = vmatprep.subr.mxu0 0.0
  %1164 = vmatpush1.msra.mxu0 0.0
  %1165 = vmatprep.subr.mxu0 0.0
  %1166 = vmatpush1.msra.mxu0 0.0
  %1167 = vmatprep.subr.mxu0 0.0
  %1168 = vmatpush1.msra.mxu0 0.0
  %1169 = vmatprep.subr.mxu0 0.0
  %1170 = vmatpush1.msra.mxu0 0.0
  %1171 = vmatprep.subr.mxu0 0.0
  %1172 = vmatpush1.msra.mxu0 0.0
  %1173 = vmatprep.subr.mxu0 0.0
  %1174 = vmatpush1.msra.mxu0 0.0
  %1175 = vmatprep.subr.mxu0 0.0
  %1176 = vmatpush1.msra.mxu0 0.0
  %1177 = vmatprep.subr.mxu0 0.0
  %1178 = vmatpush1.msra.mxu0 0.0
  %1179 = vmatprep.mubr.f32.mxu0 0.0
  %1180 = vmatmul.mubr.f32.gmra.mrb[0].mxu0 %v1113
  %v1181 = vpop.f32.mrb[0].mxu0
  %v1182 = vadd.f32 0.0, %v1181
  %v1183 = vpop.f32.mrb[0].mxu0
  %1184 = vdwg.mxu0
  %v1186 = vsel %vm42, %v737, 0
  %1188 = vmatprep.subr.mxu0 0.0
  %1189 = vmatpush1.msra.mxu0 %v745
  %1190 = vmatprep.subr.mxu0 0.0
  %1191 = vmatpush1.msra.mxu0 0.0
  %1192 = vmatprep.subr.mxu0 0.0
  %1193 = vmatpush1.msra.mxu0 0.0
  %1194 = vmatprep.subr.mxu0 0.0
  %1195 = vmatpush1.msra.mxu0 0.0
  %1196 = vmatprep.subr.mxu0 0.0
  %1197 = vmatpush1.msra.mxu0 0.0
  %1198 = vmatprep.subr.mxu0 0.0
  %1199 = vmatpush1.msra.mxu0 0.0
  %1200 = vmatprep.subr.mxu0 0.0
  %1201 = vmatpush1.msra.mxu0 0.0
  %1202 = vmatprep.subr.mxu0 0.0
  %1203 = vmatpush1.msra.mxu0 0.0
  %1204 = vmatprep.subr.mxu0 0.0
  %1205 = vmatpush1.msra.mxu0 0.0
  %1206 = vmatprep.subr.mxu0 0.0
  %1207 = vmatpush1.msra.mxu0 0.0
  %1208 = vmatprep.subr.mxu0 0.0
  %1209 = vmatpush1.msra.mxu0 0.0
  %1210 = vmatprep.subr.mxu0 0.0
  %1211 = vmatpush1.msra.mxu0 0.0
  %1212 = vmatprep.subr.mxu0 0.0
  %1213 = vmatpush1.msra.mxu0 0.0
  %1214 = vmatprep.subr.mxu0 0.0
  %1215 = vmatpush1.msra.mxu0 0.0
  %1216 = vmatprep.subr.mxu0 0.0
  %1217 = vmatpush1.msra.mxu0 0.0
  %1218 = vmatprep.subr.mxu0 0.0
  %1219 = vmatpush1.msra.mxu0 0.0
  %1220 = vmatprep.subr.mxu0 0.0
  %1221 = vmatpush1.msra.mxu0 0.0
  %1222 = vmatprep.subr.mxu0 0.0
  %1223 = vmatpush1.msra.mxu0 0.0
  %1224 = vmatprep.subr.mxu0 0.0
  %1225 = vmatpush1.msra.mxu0 0.0
  %1226 = vmatprep.subr.mxu0 0.0
  %1227 = vmatpush1.msra.mxu0 0.0
  %1228 = vmatprep.subr.mxu0 0.0
  %1229 = vmatpush1.msra.mxu0 0.0
  %1230 = vmatprep.subr.mxu0 0.0
  %1231 = vmatpush1.msra.mxu0 0.0
  %1232 = vmatprep.subr.mxu0 0.0
  %1233 = vmatpush1.msra.mxu0 0.0
  %1234 = vmatprep.subr.mxu0 0.0
  %1235 = vmatpush1.msra.mxu0 0.0
  %1236 = vmatprep.subr.mxu0 0.0
  %1237 = vmatpush1.msra.mxu0 0.0
  %1238 = vmatprep.subr.mxu0 0.0
  %1239 = vmatpush1.msra.mxu0 0.0
  %1240 = vmatprep.subr.mxu0 0.0
  %1241 = vmatpush1.msra.mxu0 0.0
  %1242 = vmatprep.subr.mxu0 0.0
  %1243 = vmatpush1.msra.mxu0 0.0
  %1244 = vmatprep.subr.mxu0 0.0
  %1245 = vmatpush1.msra.mxu0 0.0
  %1246 = vmatprep.subr.mxu0 0.0
  %1247 = vmatpush1.msra.mxu0 0.0
  %1248 = vmatprep.subr.mxu0 0.0
  %1249 = vmatpush1.msra.mxu0 0.0
  %1250 = vmatprep.subr.mxu0 0.0
  %1251 = vmatpush1.msra.mxu0 0.0
  %1252 = vmatprep.mubr.f32.mxu0 0.0
  %1253 = vmatmul.mubr.f32.gmra.mrb[0].mxu0 %v1186
  %v1254 = vpop.f32.mrb[0].mxu0
  %v1255 = vadd.f32 0.0, %v1254
  %v1256 = vpop.f32.mrb[0].mxu0
  %1257 = vdwg.mxu0
  %v1259 = vsel %vm42, %v738, 0
  %1261 = vmatprep.subr.mxu0 0.0
  %1262 = vmatpush1.msra.mxu0 %v746
  %1263 = vmatprep.subr.mxu0 0.0
  %1264 = vmatpush1.msra.mxu0 0.0
  %1265 = vmatprep.subr.mxu0 0.0
  %1266 = vmatpush1.msra.mxu0 0.0
  %1267 = vmatprep.subr.mxu0 0.0
  %1268 = vmatpush1.msra.mxu0 0.0
  %1269 = vmatprep.subr.mxu0 0.0
  %1270 = vmatpush1.msra.mxu0 0.0
  %1271 = vmatprep.subr.mxu0 0.0
  %1272 = vmatpush1.msra.mxu0 0.0
  %1273 = vmatprep.subr.mxu0 0.0
  %1274 = vmatpush1.msra.mxu0 0.0
  %1275 = vmatprep.subr.mxu0 0.0
  %1276 = vmatpush1.msra.mxu0 0.0
  %1277 = vmatprep.subr.mxu0 0.0
  %1278 = vmatpush1.msra.mxu0 0.0
  %1279 = vmatprep.subr.mxu0 0.0
  %1280 = vmatpush1.msra.mxu0 0.0
  %1281 = vmatprep.subr.mxu0 0.0
  %1282 = vmatpush1.msra.mxu0 0.0
  %1283 = vmatprep.subr.mxu0 0.0
  %1284 = vmatpush1.msra.mxu0 0.0
  %1285 = vmatprep.subr.mxu0 0.0
  %1286 = vmatpush1.msra.mxu0 0.0
  %1287 = vmatprep.subr.mxu0 0.0
  %1288 = vmatpush1.msra.mxu0 0.0
  %1289 = vmatprep.subr.mxu0 0.0
  %1290 = vmatpush1.msra.mxu0 0.0
  %1291 = vmatprep.subr.mxu0 0.0
  %1292 = vmatpush1.msra.mxu0 0.0
  %1293 = vmatprep.subr.mxu0 0.0
  %1294 = vmatpush1.msra.mxu0 0.0
  %1295 = vmatprep.subr.mxu0 0.0
  %1296 = vmatpush1.msra.mxu0 0.0
  %1297 = vmatprep.subr.mxu0 0.0
  %1298 = vmatpush1.msra.mxu0 0.0
  %1299 = vmatprep.subr.mxu0 0.0
  %1300 = vmatpush1.msra.mxu0 0.0
  %1301 = vmatprep.subr.mxu0 0.0
  %1302 = vmatpush1.msra.mxu0 0.0
  %1303 = vmatprep.subr.mxu0 0.0
  %1304 = vmatpush1.msra.mxu0 0.0
  %1305 = vmatprep.subr.mxu0 0.0
  %1306 = vmatpush1.msra.mxu0 0.0
  %1307 = vmatprep.subr.mxu0 0.0
  %1308 = vmatpush1.msra.mxu0 0.0
  %1309 = vmatprep.subr.mxu0 0.0
  %1310 = vmatpush1.msra.mxu0 0.0
  %1311 = vmatprep.subr.mxu0 0.0
  %1312 = vmatpush1.msra.mxu0 0.0
  %1313 = vmatprep.subr.mxu0 0.0
  %1314 = vmatpush1.msra.mxu0 0.0
  %1315 = vmatprep.subr.mxu0 0.0
  %1316 = vmatpush1.msra.mxu0 0.0
  %1317 = vmatprep.subr.mxu0 0.0
  %1318 = vmatpush1.msra.mxu0 0.0
  %1319 = vmatprep.subr.mxu0 0.0
  %1320 = vmatpush1.msra.mxu0 0.0
  %1321 = vmatprep.subr.mxu0 0.0
  %1322 = vmatpush1.msra.mxu0 0.0
  %1323 = vmatprep.subr.mxu0 0.0
  %1324 = vmatpush1.msra.mxu0 0.0
  %1325 = vmatprep.mubr.f32.mxu0 0.0
  %1326 = vmatmul.mubr.f32.gmra.mrb[0].mxu0 %v1259
  %v1327 = vpop.f32.mrb[0].mxu0
  %v1328 = vadd.f32 0.0, %v1327
  %v1329 = vpop.f32.mrb[0].mxu0
  %1330 = vdwg.mxu0
  %1331 = vst.msk [vmem:[%s4] sm:$0xff] %vm42, %v817
  %1332 = vst.msk [vmem:[%s4 + $0x8] sm:$0xff] %vm42, %v890
  %1333 = vst.msk [vmem:[%s4 + $0x10] sm:$0xff] %vm42, %v963
  %1334 = vst.msk [vmem:[%s4 + $0x18] sm:$0xff] %vm42, %v1036
  %1335 = vst.msk [vmem:[%s4 + $0x20] sm:$0xff] %vm42, %v1109
  %1336 = vst.msk [vmem:[%s4 + $0x28] sm:$0xff] %vm42, %v1182
  %1337 = vst.msk [vmem:[%s4 + $0x30] sm:$0xff] %vm42, %v1255
  %1338 = vst.msk [vmem:[%s4 + $0x38] sm:$0xff] %vm42, %v1328
  // Predicated region
  $region18: #{_lambda_.18} parent=0 // pred_check
    _
  $region19: #{_lambda_.18} parent=0 // pred_check_branch
    %1340 = sbr.rel (0) target = $region21
  $region20: #{_lambda_.18} parent=0 // pred_region
    _
  $region21: #{_lambda_.18} parent=0 // pred_fallthru
    _
  // Predicated region
  $region22: #{_lambda_.18} parent=0 // pred_check
    _
  $region23: #{_lambda_.18} parent=0 // pred_check_branch
    %1342 = sbr.rel (0) target = $region25
  $region24: #{_lambda_.18} parent=0 // pred_region
    _
  $region25: #{_lambda_.18} parent=0 // pred_fallthru
    _

// kernel: _lambda_.19
$region0: #{_lambda_.19}
  #allocation0 [shape = 'u32[]', space=smem, size = 0x4, offset = 0x4, fixed_abs, tag = 'smem constant byte address 0x4 - core index']
  #allocation1 [shape = 'u32[144,128]{1,0:T(1,128)}', space=vmem, size = 0x12000, scoped, tag = 'internal scratch']
  %s0 = inlined_call_operand.vmem [shape: f32[16,32], index: 0, kind: input, shape index: {}]
  %s1 = inlined_call_operand.vmem [shape: f32[32,32], index: 1, kind: input, shape index: {}]
  %s2 = inlined_call_operand.vmem [shape: f32[1,32], index: 2, kind: input, shape index: {}]
  %s3 = inlined_call_operand.vmem [shape: f32[16,32], index: 3, kind: input, shape index: {}]
  %s4 = inlined_call_operand.vmem [shape: f32[1,32], index: 4, kind: input, shape index: {}]
  %s5 = inlined_call_operand.vmem [shape: f32[1,32], index: 5, kind: input, shape index: {}]
  %s6 = inlined_call_operand.vmem [shape: f32[16,32], index: 6, kind: output, shape index: {}]
  %s7 = sld [smem:[#allocation0]]
  $region34: #{_lambda_.19} parent=0
    _
  %s9 = ssub.s32 1, %s7
  %s10 = scalar_select 0, %s9, %s7
  // Predicated region
  $region2: #{_lambda_.19} parent=0 // pred_check
    _
  $region3: #{_lambda_.19} parent=0 // pred_check_branch
    %12 = sbr.rel (0) target = $region5
  $region4: #{_lambda_.19} parent=0 // pred_region
    _
  $region5: #{_lambda_.19} parent=0 // pred_fallthru
    _
  // Predicated region
  $region6: #{_lambda_.19} parent=0 // pred_check
    _
  $region7: #{_lambda_.19} parent=0 // pred_check_branch
    %14 = sbr.rel (0) target = $region9
  $region8: #{_lambda_.19} parent=0 // pred_region
    _
  $region9: #{_lambda_.19} parent=0 // pred_fallthru
    _
  // Predicated region
  $region10: #{_lambda_.19} parent=0 // pred_check
    _
  $region11: #{_lambda_.19} parent=0 // pred_check_branch
    %16 = sbr.rel (0) target = $region13
  $region12: #{_lambda_.19} parent=0 // pred_region
    _
  $region13: #{_lambda_.19} parent=0 // pred_fallthru
    _
  // Predicated region
  $region14: #{_lambda_.19} parent=0 // pred_check
    _
  $region15: #{_lambda_.19} parent=0 // pred_check_branch
    %18 = sbr.rel (0) target = $region17
  $region16: #{_lambda_.19} parent=0 // pred_region
    _
  $region17: #{_lambda_.19} parent=0 // pred_fallthru
    _
  // Predicated region
  $region18: #{_lambda_.19} parent=0 // pred_check
    _
  $region19: #{_lambda_.19} parent=0 // pred_check_branch
    %20 = sbr.rel (0) target = $region21
  $region20: #{_lambda_.19} parent=0 // pred_region
    _
  $region21: #{_lambda_.19} parent=0 // pred_fallthru
    _
  // Predicated region
  $region22: #{_lambda_.19} parent=0 // pred_check
    _
  $region23: #{_lambda_.19} parent=0 // pred_check_branch
    %22 = sbr.rel (0) target = $region25
  $region24: #{_lambda_.19} parent=0 // pred_region
    _
  $region25: #{_lambda_.19} parent=0 // pred_fallthru
    _
  %v23 = vld [vmem:[%s0] sm:$0xff]
  %v24 = vld [vmem:[%s0 + $0x8] sm:$0xff]
  %v25 = vld [vmem:[%s1] sm:$0xff]
  %v26 = vld [vmem:[%s1 + $0x8] sm:$0xff]
  %v27 = vld [vmem:[%s1 + $0x10] sm:$0xff]
  %v28 = vld [vmem:[%s1 + $0x18] sm:$0xff]
  %v29 = vld [vmem:[%s2] sm:$0x1]
  %v31 = vlaneseq
  %v32 = vshrl.u32 %v31, 7
  %v33 = vsub.s32 0, %v32
  %v34 = vrot.slane %v29, %v33
  %vm36 = vcmask 261120
  %v38 = vsel %vm36, %v23, 0
  %v41 = vsel %vm36, %v24, 0
  %43 = vmatprep.subr.mxu0 0.0
  %44 = vmatpush1.msra.mxu0 %v25
  %45 = vmatprep.subr.mxu0 0.0
  %46 = vmatpush1.msra.mxu0 %v26
  %47 = vmatprep.subr.mxu0 0.0
  %48 = vmatpush1.msra.mxu0 %v27
  %49 = vmatprep.subr.mxu0 0.0
  %50 = vmatpush1.msra.mxu0 %v28
  %51 = vmatprep.subr.mxu0 0.0
  %52 = vmatpush1.msra.mxu0 0.0
  %53 = vmatprep.subr.mxu0 0.0
  %54 = vmatpush1.msra.mxu0 0.0
  %55 = vmatprep.subr.mxu0 0.0
  %56 = vmatpush1.msra.mxu0 0.0
  %57 = vmatprep.subr.mxu0 0.0
  %58 = vmatpush1.msra.mxu0 0.0
  %59 = vmatprep.subr.mxu0 0.0
  %60 = vmatpush1.msra.mxu0 0.0
  %61 = vmatprep.subr.mxu0 0.0
  %62 = vmatpush1.msra.mxu0 0.0
  %63 = vmatprep.subr.mxu0 0.0
  %64 = vmatpush1.msra.mxu0 0.0
  %65 = vmatprep.subr.mxu0 0.0
  %66 = vmatpush1.msra.mxu0 0.0
  %67 = vmatprep.subr.mxu0 0.0
  %68 = vmatpush1.msra.mxu0 0.0
  %69 = vmatprep.subr.mxu0 0.0
  %70 = vmatpush1.msra.mxu0 0.0
  %71 = vmatprep.subr.mxu0 0.0
  %72 = vmatpush1.msra.mxu0 0.0
  %73 = vmatprep.subr.mxu0 0.0
  %74 = vmatpush1.msra.mxu0 0.0
  %75 = vmatprep.subr.mxu0 0.0
  %76 = vmatpush1.msra.mxu0 0.0
  %77 = vmatprep.subr.mxu0 0.0
  %78 = vmatpush1.msra.mxu0 0.0
  %79 = vmatprep.subr.mxu0 0.0
  %80 = vmatpush1.msra.mxu0 0.0
  %81 = vmatprep.subr.mxu0 0.0
  %82 = vmatpush1.msra.mxu0 0.0
  %83 = vmatprep.subr.mxu0 0.0
  %84 = vmatpush1.msra.mxu0 0.0
  %85 = vmatprep.subr.mxu0 0.0
  %86 = vmatpush1.msra.mxu0 0.0
  %87 = vmatprep.subr.mxu0 0.0
  %88 = vmatpush1.msra.mxu0 0.0
  %89 = vmatprep.subr.mxu0 0.0
  %90 = vmatpush1.msra.mxu0 0.0
  %91 = vmatprep.subr.mxu0 0.0
  %92 = vmatpush1.msra.mxu0 0.0
  %93 = vmatprep.subr.mxu0 0.0
  %94 = vmatpush1.msra.mxu0 0.0
  %95 = vmatprep.subr.mxu0 0.0
  %96 = vmatpush1.msra.mxu0 0.0
  %97 = vmatprep.subr.mxu0 0.0
  %98 = vmatpush1.msra.mxu0 0.0
  %99 = vmatprep.subr.mxu0 0.0
  %100 = vmatpush1.msra.mxu0 0.0
  %101 = vmatprep.subr.mxu0 0.0
  %102 = vmatpush1.msra.mxu0 0.0
  %103 = vmatprep.subr.mxu0 0.0
  %104 = vmatpush1.msra.mxu0 0.0
  %105 = vmatprep.subr.mxu0 0.0
  %106 = vmatpush1.msra.mxu0 0.0
  %107 = vmatprep.mubr.f32.mxu0 0.0
  %108 = vmatmul.mubr.f32.gmra.mrb[0].mxu0 %v38
  %v109 = vpop.f32.mrb[0].mxu0
  %v110 = vadd.f32 %v34, %v109
  %v111 = vpop.f32.mrb[0].mxu0
  %112 = vmatprep.mubr.f32.mxu0 0.0
  %113 = vmatmul.mubr.f32.gmra.mrb[0].mxu0 %v41
  %v114 = vpop.f32.mrb[0].mxu0
  %v115 = vadd.f32 %v34, %v114
  %v116 = vpop.f32.mrb[0].mxu0
  %117 = vdwg.mxu0
  %v118 = vld [vmem:[%s3] sm:$0xff]
  %v119 = vld [vmem:[%s3 + $0x8] sm:$0xff]
  %v120 = vadd.f32 %v110, %v118
  %v121 = vadd.f32 %v115, %v119
  %v122 = vsel %vm36, %v120, 0.0
  %123 = vadd.xlane.f32.xlu0 %v122
  %v124 = vpop.xlane.xlu0 %123
  %v125 = vsel %vm36, %v121, 0.0
  %126 = vadd.xlane.f32.xlu0 %v125
  %v127 = vpop.xlane.xlu0 %126
  %v128 = vrcp.pop 32.0
  %v129 = vmul.f32 %v124, %v128
  %v130 = vmul.f32 %v127, %v128
  %v131 = vsub.f32 %v120, %v129
  %v132 = vsub.f32 %v121, %v130
  %v133 = vmul.f32 %v131, %v131
  %v134 = vmul.f32 %v132, %v132
  %v135 = vsel %vm36, %v133, 0.0
  %136 = vadd.xlane.f32.xlu0 %v135
  %v137 = vpop.xlane.xlu0 %136
  %v138 = vsel %vm36, %v134, 0.0
  %139 = vadd.xlane.f32.xlu0 %v138
  %v140 = vpop.xlane.xlu0 %139
  %v141 = vmul.f32 %v137, %v128
  %v142 = vmul.f32 %v140, %v128
  %v143 = vadd.f32 %v141, 1e-05
  %v144 = vadd.f32 %v142, 1e-05
  %v145 = vrsqrt.pop %v143
  %v146 = vrsqrt.pop %v144
  %v147 = vmul.f32 %v131, %v145
  %v148 = vmul.f32 %v132, %v146
  %v149 = vld [vmem:[%s4] sm:$0x1]
  %v151 = vlaneseq
  %v152 = vshrl.u32 %v151, 7
  %v153 = vsub.s32 0, %v152
  %v154 = vrot.slane %v149, %v153
  %v156 = vmul.f32 %v147, %v154
  %v157 = vmul.f32 %v148, %v154
  %v158 = vld [vmem:[%s5] sm:$0x1]
  %v160 = vlaneseq
  %v161 = vshrl.u32 %v160, 7
  %v162 = vsub.s32 0, %v161
  %v163 = vrot.slane %v158, %v162
  %v165 = vadd.f32 %v156, %v163
  %v166 = vadd.f32 %v157, %v163
  %167 = vst.msk [vmem:[%s6] sm:$0xff] %vm36, %v165
  %168 = vst.msk [vmem:[%s6 + $0x8] sm:$0xff] %vm36, %v166
  // Predicated region
  $region26: #{_lambda_.19} parent=0 // pred_check
    _
  $region27: #{_lambda_.19} parent=0 // pred_check_branch
    %170 = sbr.rel (0) target = $region29
  $region28: #{_lambda_.19} parent=0 // pred_region
    _
  $region29: #{_lambda_.19} parent=0 // pred_fallthru
    _
  // Predicated region
  $region30: #{_lambda_.19} parent=0 // pred_check
    _
  $region31: #{_lambda_.19} parent=0 // pred_check_branch
    %172 = sbr.rel (0) target = $region33
  $region32: #{_lambda_.19} parent=0 // pred_region
    _
  $region33: #{_lambda_.19} parent=0 // pred_fallthru
    _

// kernel: _lambda_.24
$region0: #{_lambda_.24}
  #allocation0 [shape = 'u32[]', space=smem, size = 0x4, offset = 0x4, fixed_abs, tag = 'smem constant byte address 0x4 - core index']
  #allocation1 [shape = 'u32[144,128]{1,0:T(1,128)}', space=vmem, size = 0x12000, scoped, tag = 'internal scratch']
  %s0 = inlined_call_operand.vmem [shape: f32[16,32], index: 0, kind: input, shape index: {}]
  %s1 = inlined_call_operand.vmem [shape: f32[32,64], index: 1, kind: input, shape index: {}]
  %s2 = inlined_call_operand.vmem [shape: f32[1,64], index: 2, kind: input, shape index: {}]
  %s3 = inlined_call_operand.vmem [shape: f32[64,32], index: 3, kind: input, shape index: {}]
  %s4 = inlined_call_operand.vmem [shape: f32[1,32], index: 4, kind: input, shape index: {}]
  %s5 = inlined_call_operand.vmem [shape: f32[1,32], index: 5, kind: input, shape index: {}]
  %s6 = inlined_call_operand.vmem [shape: f32[1,32], index: 6, kind: input, shape index: {}]
  %s7 = inlined_call_operand.vmem [shape: f32[16,32], index: 7, kind: output, shape index: {}]
  %s8 = sld [smem:[#allocation0]]
  $region38: #{_lambda_.24} parent=0
    _
  %s10 = ssub.s32 1, %s8
  %s11 = scalar_select 0, %s10, %s8
  // Predicated region
  $region2: #{_lambda_.24} parent=0 // pred_check
    _
  $region3: #{_lambda_.24} parent=0 // pred_check_branch
    %13 = sbr.rel (0) target = $region5
  $region4: #{_lambda_.24} parent=0 // pred_region
    _
  $region5: #{_lambda_.24} parent=0 // pred_fallthru
    _
  // Predicated region
  $region6: #{_lambda_.24} parent=0 // pred_check
    _
  $region7: #{_lambda_.24} parent=0 // pred_check_branch
    %15 = sbr.rel (0) target = $region9
  $region8: #{_lambda_.24} parent=0 // pred_region
    _
  $region9: #{_lambda_.24} parent=0 // pred_fallthru
    _
  // Predicated region
  $region10: #{_lambda_.24} parent=0 // pred_check
    _
  $region11: #{_lambda_.24} parent=0 // pred_check_branch
    %17 = sbr.rel (0) target = $region13
  $region12: #{_lambda_.24} parent=0 // pred_region
    _
  $region13: #{_lambda_.24} parent=0 // pred_fallthru
    _
  // Predicated region
  $region14: #{_lambda_.24} parent=0 // pred_check
    _
  $region15: #{_lambda_.24} parent=0 // pred_check_branch
    %19 = sbr.rel (0) target = $region17
  $region16: #{_lambda_.24} parent=0 // pred_region
    _
  $region17: #{_lambda_.24} parent=0 // pred_fallthru
    _
  // Predicated region
  $region18: #{_lambda_.24} parent=0 // pred_check
    _
  $region19: #{_lambda_.24} parent=0 // pred_check_branch
    %21 = sbr.rel (0) target = $region21
  $region20: #{_lambda_.24} parent=0 // pred_region
    _
  $region21: #{_lambda_.24} parent=0 // pred_fallthru
    _
  // Predicated region
  $region22: #{_lambda_.24} parent=0 // pred_check
    _
  $region23: #{_lambda_.24} parent=0 // pred_check_branch
    %23 = sbr.rel (0) target = $region25
  $region24: #{_lambda_.24} parent=0 // pred_region
    _
  $region25: #{_lambda_.24} parent=0 // pred_fallthru
    _
  // Predicated region
  $region26: #{_lambda_.24} parent=0 // pred_check
    _
  $region27: #{_lambda_.24} parent=0 // pred_check_branch
    %25 = sbr.rel (0) target = $region29
  $region28: #{_lambda_.24} parent=0 // pred_region
    _
  $region29: #{_lambda_.24} parent=0 // pred_fallthru
    _
  %v26 = vld [vmem:[%s0] sm:$0xff]
  %v27 = vld [vmem:[%s0 + $0x8] sm:$0xff]
  %v28 = vld [vmem:[%s1] sm:$0xff]
  %v29 = vld [vmem:[%s1 + $0x8] sm:$0xff]
  %v30 = vld [vmem:[%s1 + $0x10] sm:$0xff]
  %v31 = vld [vmem:[%s1 + $0x18] sm:$0xff]
  %v32 = vld [vmem:[%s2] sm:$0x1]
  %v34 = vlaneseq
  %v35 = vshrl.u32 %v34, 7
  %v36 = vsub.s32 0, %v35
  %v37 = vrot.slane %v32, %v36
  %vm39 = vcmask 261120
  %v41 = vsel %vm39, %v26, 0
  %v44 = vsel %vm39, %v27, 0
  %46 = vmatprep.subr.mxu0 0.0
  %47 = vmatpush1.msra.mxu0 %v28
  %48 = vmatprep.subr.mxu0 0.0
  %49 = vmatpush1.msra.mxu0 %v29
  %50 = vmatprep.subr.mxu0 0.0
  %51 = vmatpush1.msra.mxu0 %v30
  %52 = vmatprep.subr.mxu0 0.0
  %53 = vmatpush1.msra.mxu0 %v31
  %54 = vmatprep.subr.mxu0 0.0
  %55 = vmatpush1.msra.mxu0 0.0
  %56 = vmatprep.subr.mxu0 0.0
  %57 = vmatpush1.msra.mxu0 0.0
  %58 = vmatprep.subr.mxu0 0.0
  %59 = vmatpush1.msra.mxu0 0.0
  %60 = vmatprep.subr.mxu0 0.0
  %61 = vmatpush1.msra.mxu0 0.0
  %62 = vmatprep.subr.mxu0 0.0
  %63 = vmatpush1.msra.mxu0 0.0
  %64 = vmatprep.subr.mxu0 0.0
  %65 = vmatpush1.msra.mxu0 0.0
  %66 = vmatprep.subr.mxu0 0.0
  %67 = vmatpush1.msra.mxu0 0.0
  %68 = vmatprep.subr.mxu0 0.0
  %69 = vmatpush1.msra.mxu0 0.0
  %70 = vmatprep.subr.mxu0 0.0
  %71 = vmatpush1.msra.mxu0 0.0
  %72 = vmatprep.subr.mxu0 0.0
  %73 = vmatpush1.msra.mxu0 0.0
  %74 = vmatprep.subr.mxu0 0.0
  %75 = vmatpush1.msra.mxu0 0.0
  %76 = vmatprep.subr.mxu0 0.0
  %77 = vmatpush1.msra.mxu0 0.0
  %78 = vmatprep.subr.mxu0 0.0
  %79 = vmatpush1.msra.mxu0 0.0
  %80 = vmatprep.subr.mxu0 0.0
  %81 = vmatpush1.msra.mxu0 0.0
  %82 = vmatprep.subr.mxu0 0.0
  %83 = vmatpush1.msra.mxu0 0.0
  %84 = vmatprep.subr.mxu0 0.0
  %85 = vmatpush1.msra.mxu0 0.0
  %86 = vmatprep.subr.mxu0 0.0
  %87 = vmatpush1.msra.mxu0 0.0
  %88 = vmatprep.subr.mxu0 0.0
  %89 = vmatpush1.msra.mxu0 0.0
  %90 = vmatprep.subr.mxu0 0.0
  %91 = vmatpush1.msra.mxu0 0.0
  %92 = vmatprep.subr.mxu0 0.0
  %93 = vmatpush1.msra.mxu0 0.0
  %94 = vmatprep.subr.mxu0 0.0
  %95 = vmatpush1.msra.mxu0 0.0
  %96 = vmatprep.subr.mxu0 0.0
  %97 = vmatpush1.msra.mxu0 0.0
  %98 = vmatprep.subr.mxu0 0.0
  %99 = vmatpush1.msra.mxu0 0.0
  %100 = vmatprep.subr.mxu0 0.0
  %101 = vmatpush1.msra.mxu0 0.0
  %102 = vmatprep.subr.mxu0 0.0
  %103 = vmatpush1.msra.mxu0 0.0
  %104 = vmatprep.subr.mxu0 0.0
  %105 = vmatpush1.msra.mxu0 0.0
  %106 = vmatprep.subr.mxu0 0.0
  %107 = vmatpush1.msra.mxu0 0.0
  %108 = vmatprep.subr.mxu0 0.0
  %109 = vmatpush1.msra.mxu0 0.0
  %110 = vmatprep.mubr.f32.mxu0 0.0
  %111 = vmatmul.mubr.f32.gmra.mrb[0].mxu0 %v41
  %v112 = vpop.f32.mrb[0].mxu0
  %v113 = vadd.f32 %v37, %v112
  %v114 = vpop.f32.mrb[0].mxu0
  %115 = vmatprep.mubr.f32.mxu0 0.0
  %116 = vmatmul.mubr.f32.gmra.mrb[0].mxu0 %v44
  %v117 = vpop.f32.mrb[0].mxu0
  %v118 = vadd.f32 %v37, %v117
  %v119 = vpop.f32.mrb[0].mxu0
  %120 = vdwg.mxu0
  %v121 = vmax.f32 %v113, 0.0
  %v122 = vmax.f32 %v118, 0.0
  %v123 = vld [vmem:[%s3] sm:$0xff]
  %v124 = vld [vmem:[%s3 + $0x8] sm:$0xff]
  %v125 = vld [vmem:[%s3 + $0x10] sm:$0xff]
  %v126 = vld [vmem:[%s3 + $0x18] sm:$0xff]
  %v127 = vld [vmem:[%s3 + $0x20] sm:$0xff]
  %v128 = vld [vmem:[%s3 + $0x28] sm:$0xff]
  %v129 = vld [vmem:[%s3 + $0x30] sm:$0xff]
  %v130 = vld [vmem:[%s3 + $0x38] sm:$0xff]
  %v131 = vld [vmem:[%s4] sm:$0x1]
  %v133 = vlaneseq
  %v134 = vshrl.u32 %v133, 7
  %v135 = vsub.s32 0, %v134
  %v136 = vrot.slane %v131, %v135
  %vm138 = vcmask 523264
  %v140 = vsel %vm138, %v121, 0
  %v143 = vsel %vm138, %v122, 0
  %145 = vmatprep.subr.mxu0 0.0
  %146 = vmatpush1.msra.mxu0 %v123
  %147 = vmatprep.subr.mxu0 0.0
  %148 = vmatpush1.msra.mxu0 %v124
  %149 = vmatprep.subr.mxu0 0.0
  %150 = vmatpush1.msra.mxu0 %v125
  %151 = vmatprep.subr.mxu0 0.0
  %152 = vmatpush1.msra.mxu0 %v126
  %153 = vmatprep.subr.mxu0 0.0
  %154 = vmatpush1.msra.mxu0 %v127
  %155 = vmatprep.subr.mxu0 0.0
  %156 = vmatpush1.msra.mxu0 %v128
  %157 = vmatprep.subr.mxu0 0.0
  %158 = vmatpush1.msra.mxu0 %v129
  %159 = vmatprep.subr.mxu0 0.0
  %160 = vmatpush1.msra.mxu0 %v130
  %161 = vmatprep.subr.mxu0 0.0
  %162 = vmatpush1.msra.mxu0 0.0
  %163 = vmatprep.subr.mxu0 0.0
  %164 = vmatpush1.msra.mxu0 0.0
  %165 = vmatprep.subr.mxu0 0.0
  %166 = vmatpush1.msra.mxu0 0.0
  %167 = vmatprep.subr.mxu0 0.0
  %168 = vmatpush1.msra.mxu0 0.0
  %169 = vmatprep.subr.mxu0 0.0
  %170 = vmatpush1.msra.mxu0 0.0
  %171 = vmatprep.subr.mxu0 0.0
  %172 = vmatpush1.msra.mxu0 0.0
  %173 = vmatprep.subr.mxu0 0.0
  %174 = vmatpush1.msra.mxu0 0.0
  %175 = vmatprep.subr.mxu0 0.0
  %176 = vmatpush1.msra.mxu0 0.0
  %177 = vmatprep.subr.mxu0 0.0
  %178 = vmatpush1.msra.mxu0 0.0
  %179 = vmatprep.subr.mxu0 0.0
  %180 = vmatpush1.msra.mxu0 0.0
  %181 = vmatprep.subr.mxu0 0.0
  %182 = vmatpush1.msra.mxu0 0.0
  %183 = vmatprep.subr.mxu0 0.0
  %184 = vmatpush1.msra.mxu0 0.0
  %185 = vmatprep.subr.mxu0 0.0
  %186 = vmatpush1.msra.mxu0 0.0
  %187 = vmatprep.subr.mxu0 0.0
  %188 = vmatpush1.msra.mxu0 0.0
  %189 = vmatprep.subr.mxu0 0.0
  %190 = vmatpush1.msra.mxu0 0.0
  %191 = vmatprep.subr.mxu0 0.0
  %192 = vmatpush1.msra.mxu0 0.0
  %193 = vmatprep.subr.mxu0 0.0
  %194 = vmatpush1.msra.mxu0 0.0
  %195 = vmatprep.subr.mxu0 0.0
  %196 = vmatpush1.msra.mxu0 0.0
  %197 = vmatprep.subr.mxu0 0.0
  %198 = vmatpush1.msra.mxu0 0.0
  %199 = vmatprep.subr.mxu0 0.0
  %200 = vmatpush1.msra.mxu0 0.0
  %201 = vmatprep.subr.mxu0 0.0
  %202 = vmatpush1.msra.mxu0 0.0
  %203 = vmatprep.subr.mxu0 0.0
  %204 = vmatpush1.msra.mxu0 0.0
  %205 = vmatprep.subr.mxu0 0.0
  %206 = vmatpush1.msra.mxu0 0.0
  %207 = vmatprep.subr.mxu0 0.0
  %208 = vmatpush1.msra.mxu0 0.0
  %209 = vmatprep.mubr.f32.mxu0 0.0
  %210 = vmatmul.mubr.f32.gmra.mrb[0].mxu0 %v140
  %v211 = vpop.f32.mrb[0].mxu0
  %v212 = vadd.f32 %v136, %v211
  %v213 = vpop.f32.mrb[0].mxu0
  %214 = vmatprep.mubr.f32.mxu0 0.0
  %215 = vmatmul.mubr.f32.gmra.mrb[0].mxu0 %v143
  %v216 = vpop.f32.mrb[0].mxu0
  %v217 = vadd.f32 %v136, %v216
  %v218 = vpop.f32.mrb[0].mxu0
  %219 = vdwg.mxu0
  %v220 = vadd.f32 %v212, %v26
  %v221 = vadd.f32 %v217, %v27
  %v222 = vsel %vm39, %v220, 0.0
  %223 = vadd.xlane.f32.xlu0 %v222
  %v224 = vpop.xlane.xlu0 %223
  %v225 = vsel %vm39, %v221, 0.0
  %226 = vadd.xlane.f32.xlu0 %v225
  %v227 = vpop.xlane.xlu0 %226
  %v228 = vrcp.pop 32.0
  %v229 = vmul.f32 %v224, %v228
  %v230 = vmul.f32 %v227, %v228
  %v231 = vsub.f32 %v220, %v229
  %v232 = vsub.f32 %v221, %v230
  %v233 = vmul.f32 %v231, %v231
  %v234 = vmul.f32 %v232, %v232
  %v235 = vsel %vm39, %v233, 0.0
  %236 = vadd.xlane.f32.xlu0 %v235
  %v237 = vpop.xlane.xlu0 %236
  %v238 = vsel %vm39, %v234, 0.0
  %239 = vadd.xlane.f32.xlu0 %v238
  %v240 = vpop.xlane.xlu0 %239
  %v241 = vmul.f32 %v237, %v228
  %v242 = vmul.f32 %v240, %v228
  %v243 = vadd.f32 %v241, 1e-05
  %v244 = vadd.f32 %v242, 1e-05
  %v245 = vrsqrt.pop %v243
  %v246 = vrsqrt.pop %v244
  %v247 = vmul.f32 %v231, %v245
  %v248 = vmul.f32 %v232, %v246
  %v249 = vld [vmem:[%s5] sm:$0x1]
  %v251 = vlaneseq
  %v252 = vshrl.u32 %v251, 7
  %v253 = vsub.s32 0, %v252
  %v254 = vrot.slane %v249, %v253
  %v256 = vmul.f32 %v247, %v254
  %v257 = vmul.f32 %v248, %v254
  %v258 = vld [vmem:[%s6] sm:$0x1]
  %v260 = vlaneseq
  %v261 = vshrl.u32 %v260, 7
  %v262 = vsub.s32 0, %v261
  %v263 = vrot.slane %v258, %v262
  %v265 = vadd.f32 %v256, %v263
  %v266 = vadd.f32 %v257, %v263
  %267 = vst.msk [vmem:[%s7] sm:$0xff] %vm39, %v265
  %268 = vst.msk [vmem:[%s7 + $0x8] sm:$0xff] %vm39, %v266
  // Predicated region
  $region30: #{_lambda_.24} parent=0 // pred_check
    _
  $region31: #{_lambda_.24} parent=0 // pred_check_branch
    %270 = sbr.rel (0) target = $region33
  $region32: #{_lambda_.24} parent=0 // pred_region
    _
  $region33: #{_lambda_.24} parent=0 // pred_fallthru
    _
  // Predicated region
  $region34: #{_lambda_.24} parent=0 // pred_check
    _
  $region35: #{_lambda_.24} parent=0 // pred_check_branch
    %272 = sbr.rel (0) target = $region37
  $region36: #{_lambda_.24} parent=0 // pred_region
    _
  $region37: #{_lambda_.24} parent=0 // pred_fallthru
    _

// kernel: _lambda_.21
$region0: #{_lambda_.21}
  #allocation0 [shape = 'u32[]', space=smem, size = 0x4, offset = 0x4, fixed_abs, tag = 'smem constant byte address 0x4 - core index']
  #allocation1 [shape = 'u32[144,128]{1,0:T(1,128)}', space=vmem, size = 0x12000, scoped, tag = 'internal scratch']
  #allocation2 [shape = 'f32[16,64]{1,0:T(8,128)}', space=vmem, size = 0x2000, scoped, tag = 'scratch operand']
  %s0 = inlined_call_operand.vmem [shape: f32[16,32], index: 0, kind: input, shape index: {}]
  %s1 = inlined_call_operand.vmem [shape: f32[32,64], index: 1, kind: input, shape index: {}]
  %s2 = inlined_call_operand.vmem [shape: f32[1,64], index: 2, kind: input, shape index: {}]
  %s3 = inlined_call_operand.vmem [shape: f32[16,64], index: 3, kind: output, shape index: {}]
  %s4 = sld [smem:[#allocation0]]
  $region30: #{_lambda_.21} parent=0
    _
  %s6 = ssub.s32 1, %s4
  %s7 = scalar_select 0, %s6, %s4
  // Predicated region
  $region2: #{_lambda_.21} parent=0 // pred_check
    _
  $region3: #{_lambda_.21} parent=0 // pred_check_branch
    %9 = sbr.rel (0) target = $region5
  $region4: #{_lambda_.21} parent=0 // pred_region
    _
  $region5: #{_lambda_.21} parent=0 // pred_fallthru
    _
  // Predicated region
  $region6: #{_lambda_.21} parent=0 // pred_check
    _
  $region7: #{_lambda_.21} parent=0 // pred_check_branch
    %11 = sbr.rel (0) target = $region9
  $region8: #{_lambda_.21} parent=0 // pred_region
    _
  $region9: #{_lambda_.21} parent=0 // pred_fallthru
    _
  // Predicated region
  $region10: #{_lambda_.21} parent=0 // pred_check
    _
  $region11: #{_lambda_.21} parent=0 // pred_check_branch
    %13 = sbr.rel (0) target = $region13
  $region12: #{_lambda_.21} parent=0 // pred_region
    _
  $region13: #{_lambda_.21} parent=0 // pred_fallthru
    _
  %p14 = scmp.eq.s32.totalorder 0, 0
  // Predicated region
  $region14: #{_lambda_.21} parent=0 // pred_check
    %p15 = pneg %p14
  $region15: #{_lambda_.21} parent=0 // pred_check_branch
    %17 = sbr.rel (%p15) target = $region17
  $region16: #{_lambda_.21} parent=0 // pred_region
    %vm18 = vcmask 523264
    %19 = vst.msk [vmem:[#allocation2] sm:$0xff] %vm18, 0.0
    %20 = vst.msk [vmem:[#allocation2 + $0x8] sm:$0xff] %vm18, 0.0
  $region17: #{_lambda_.21} parent=0 // pred_fallthru
    _
  %v21 = vld [vmem:[#allocation2] sm:$0xff]
  %v22 = vld [vmem:[#allocation2 + $0x8] sm:$0xff]
  %v23 = vld [vmem:[%s0] sm:$0xff]
  %v24 = vld [vmem:[%s0 + $0x8] sm:$0xff]
  %v25 = vld [vmem:[%s1] sm:$0xff]
  %v26 = vld [vmem:[%s1 + $0x8] sm:$0xff]
  %v27 = vld [vmem:[%s1 + $0x10] sm:$0xff]
  %v28 = vld [vmem:[%s1 + $0x18] sm:$0xff]
  %vm29 = vcmask 261120
  %v31 = vsel %vm29, %v23, 0
  %v34 = vsel %vm29, %v24, 0
  %36 = vmatprep.subr.mxu0 0.0
  %37 = vmatpush1.msra.mxu0 %v25
  %38 = vmatprep.subr.mxu0 0.0
  %39 = vmatpush1.msra.mxu0 %v26
  %40 = vmatprep.subr.mxu0 0.0
  %41 = vmatpush1.msra.mxu0 %v27
  %42 = vmatprep.subr.mxu0 0.0
  %43 = vmatpush1.msra.mxu0 %v28
  %44 = vmatprep.subr.mxu0 0.0
  %45 = vmatpush1.msra.mxu0 0.0
  %46 = vmatprep.subr.mxu0 0.0
  %47 = vmatpush1.msra.mxu0 0.0
  %48 = vmatprep.subr.mxu0 0.0
  %49 = vmatpush1.msra.mxu0 0.0
  %50 = vmatprep.subr.mxu0 0.0
  %51 = vmatpush1.msra.mxu0 0.0
  %52 = vmatprep.subr.mxu0 0.0
  %53 = vmatpush1.msra.mxu0 0.0
  %54 = vmatprep.subr.mxu0 0.0
  %55 = vmatpush1.msra.mxu0 0.0
  %56 = vmatprep.subr.mxu0 0.0
  %57 = vmatpush1.msra.mxu0 0.0
  %58 = vmatprep.subr.mxu0 0.0
  %59 = vmatpush1.msra.mxu0 0.0
  %60 = vmatprep.subr.mxu0 0.0
  %61 = vmatpush1.msra.mxu0 0.0
  %62 = vmatprep.subr.mxu0 0.0
  %63 = vmatpush1.msra.mxu0 0.0
  %64 = vmatprep.subr.mxu0 0.0
  %65 = vmatpush1.msra.mxu0 0.0
  %66 = vmatprep.subr.mxu0 0.0
  %67 = vmatpush1.msra.mxu0 0.0
  %68 = vmatprep.subr.mxu0 0.0
  %69 = vmatpush1.msra.mxu0 0.0
  %70 = vmatprep.subr.mxu0 0.0
  %71 = vmatpush1.msra.mxu0 0.0
  %72 = vmatprep.subr.mxu0 0.0
  %73 = vmatpush1.msra.mxu0 0.0
  %74 = vmatprep.subr.mxu0 0.0
  %75 = vmatpush1.msra.mxu0 0.0
  %76 = vmatprep.subr.mxu0 0.0
  %77 = vmatpush1.msra.mxu0 0.0
  %78 = vmatprep.subr.mxu0 0.0
  %79 = vmatpush1.msra.mxu0 0.0
  %80 = vmatprep.subr.mxu0 0.0
  %81 = vmatpush1.msra.mxu0 0.0
  %82 = vmatprep.subr.mxu0 0.0
  %83 = vmatpush1.msra.mxu0 0.0
  %84 = vmatprep.subr.mxu0 0.0
  %85 = vmatpush1.msra.mxu0 0.0
  %86 = vmatprep.subr.mxu0 0.0
  %87 = vmatpush1.msra.mxu0 0.0
  %88 = vmatprep.subr.mxu0 0.0
  %89 = vmatpush1.msra.mxu0 0.0
  %90 = vmatprep.subr.mxu0 0.0
  %91 = vmatpush1.msra.mxu0 0.0
  %92 = vmatprep.subr.mxu0 0.0
  %93 = vmatpush1.msra.mxu0 0.0
  %94 = vmatprep.subr.mxu0 0.0
  %95 = vmatpush1.msra.mxu0 0.0
  %96 = vmatprep.subr.mxu0 0.0
  %97 = vmatpush1.msra.mxu0 0.0
  %98 = vmatprep.subr.mxu0 0.0
  %99 = vmatpush1.msra.mxu0 0.0
  %100 = vmatprep.mubr.f32.mxu0 0.0
  %101 = vmatmul.mubr.f32.gmra.mrb[0].mxu0 %v31
  %v102 = vpop.f32.mrb[0].mxu0
  %v103 = vadd.f32 0.0, %v102
  %v104 = vpop.f32.mrb[0].mxu0
  %105 = vmatprep.mubr.f32.mxu0 0.0
  %106 = vmatmul.mubr.f32.gmra.mrb[0].mxu0 %v34
  %v107 = vpop.f32.mrb[0].mxu0
  %v108 = vadd.f32 0.0, %v107
  %v109 = vpop.f32.mrb[0].mxu0
  %110 = vdwg.mxu0
  %v111 = vadd.f32 %v21, %v103
  %v112 = vadd.f32 %v22, %v108
  %vm113 = vcmask 523264
  %114 = vst.msk [vmem:[#allocation2] sm:$0xff] %vm113, %v111
  %115 = vst.msk [vmem:[#allocation2 + $0x8] sm:$0xff] %vm113, %v112
  // Predicated region
  $region18: #{_lambda_.21} parent=0 // pred_check
    %p116 = pneg %p14
  $region19: #{_lambda_.21} parent=0 // pred_check_branch
    %118 = sbr.rel (%p116) target = $region21
  $region20: #{_lambda_.21} parent=0 // pred_region
    %v119 = vld [vmem:[#allocation2] sm:$0xff]
    %v120 = vld [vmem:[#allocation2 + $0x8] sm:$0xff]
    %v121 = vld [vmem:[%s2] sm:$0x1]
    %v123 = vlaneseq
    %v124 = vshrl.u32 %v123, 7
    %v125 = vsub.s32 0, %v124
    %v126 = vrot.slane %v121, %v125
    %v128 = vadd.f32 %v119, %v126
    %v129 = vadd.f32 %v120, %v126
    %130 = vst.msk [vmem:[%s3] sm:$0xff] %vm113, %v128
    %131 = vst.msk [vmem:[%s3 + $0x8] sm:$0xff] %vm113, %v129
  $region21: #{_lambda_.21} parent=0 // pred_fallthru
    _
  // Predicated region
  $region22: #{_lambda_.21} parent=0 // pred_check
    _
  $region23: #{_lambda_.21} parent=0 // pred_check_branch
    %133 = sbr.rel (0) target = $region25
  $region24: #{_lambda_.21} parent=0 // pred_region
    _
  $region25: #{_lambda_.21} parent=0 // pred_fallthru
    _
  // Predicated region
  $region26: #{_lambda_.21} parent=0 // pred_check
    _
  $region27: #{_lambda_.21} parent=0 // pred_check_branch
    %135 = sbr.rel (0) target = $region29
  $region28: #{_lambda_.21} parent=0 // pred_region
    _
  $region29: #{_lambda_.21} parent=0 // pred_fallthru
    _

// kernel: _lambda_.33
$region0: #{_lambda_.33}
  #allocation0 [shape = 'u32[]', space=smem, size = 0x4, offset = 0x4, fixed_abs, tag = 'smem constant byte address 0x4 - core index']
  #allocation1 [shape = 'u32[144,128]{1,0:T(1,128)}', space=vmem, size = 0x12000, scoped, tag = 'internal scratch']
  %s0 = inlined_call_operand.vmem [shape: f32[16,32], index: 0, kind: input, shape index: {}]
  %s1 = inlined_call_operand.vmem [shape: f32[1,32], index: 1, kind: input, shape index: {}]
  %s2 = inlined_call_operand.vmem [shape: f32[1,32], index: 2, kind: input, shape index: {}]
  %s3 = inlined_call_operand.hbm [shape: f32[16,32], index: 3, kind: output, shape index: {}]
  %s4 = sld [smem:[#allocation0]]
  $region22: #{_lambda_.33} parent=0
    _
  %s6 = ssub.s32 1, %s4
  %s7 = scalar_select 0, %s6, %s4
  $region1: #{_lambda_.33} parent=0
    #allocation2 [shape = 'u8[8192]{0}', space=vmem, size = 0x2000, scoped, tag = 'output window, operand 0, single buffered']
    #allocation3 [shape = 's32[1]{0}', space=sflag, size = 0x4, scoped, tag = 'scoped memory for _lambda_.33']
    %8 = vsyncpa [#allocation3], 0
    // Predicated region
    $region2: #{_lambda_.33} parent=1 // pred_check
      _
    $region3: #{_lambda_.33} parent=1 // pred_check_branch
      %10 = sbr.rel (0) target = $region5
    $region4: #{_lambda_.33} parent=1 // pred_region
      _
    $region5: #{_lambda_.33} parent=1 // pred_fallthru
      _
    // Predicated region
    $region6: #{_lambda_.33} parent=1 // pred_check
      _
    $region7: #{_lambda_.33} parent=1 // pred_check_branch
      %12 = sbr.rel (0) target = $region9
    $region8: #{_lambda_.33} parent=1 // pred_region
      _
    $region9: #{_lambda_.33} parent=1 // pred_fallthru
      _
    // Predicated region
    $region10: #{_lambda_.33} parent=1 // pred_check
      _
    $region11: #{_lambda_.33} parent=1 // pred_check_branch
      %14 = sbr.rel (0) target = $region13
    $region12: #{_lambda_.33} parent=1 // pred_region
      _
    $region13: #{_lambda_.33} parent=1 // pred_fallthru
      _
    %v15 = vld [vmem:[%s0] sm:$0xff]
    %v16 = vld [vmem:[%s0 + $0x8] sm:$0xff]
    %vm17 = vcmask 261120
    %v18 = vsel %vm17, %v15, 0.0
    %19 = vadd.xlane.f32.xlu0 %v18
    %v20 = vpop.xlane.xlu0 %19
    %v21 = vsel %vm17, %v16, 0.0
    %22 = vadd.xlane.f32.xlu0 %v21
    %v23 = vpop.xlane.xlu0 %22
    %v24 = vrcp.pop 32.0
    %v25 = vmul.f32 %v20, %v24
    %v26 = vmul.f32 %v23, %v24
    %v27 = vsub.f32 %v15, %v25
    %v28 = vsub.f32 %v16, %v26
    %v29 = vmul.f32 %v27, %v27
    %v30 = vmul.f32 %v28, %v28
    %v31 = vsel %vm17, %v29, 0.0
    %32 = vadd.xlane.f32.xlu0 %v31
    %v33 = vpop.xlane.xlu0 %32
    %v34 = vsel %vm17, %v30, 0.0
    %35 = vadd.xlane.f32.xlu0 %v34
    %v36 = vpop.xlane.xlu0 %35
    %v37 = vmul.f32 %v33, %v24
    %v38 = vmul.f32 %v36, %v24
    %v39 = vadd.f32 %v37, 1e-05
    %v40 = vadd.f32 %v38, 1e-05
    %v41 = vrsqrt.pop %v39
    %v42 = vrsqrt.pop %v40
    %v43 = vmul.f32 %v27, %v41
    %v44 = vmul.f32 %v28, %v42
    %v45 = vld [vmem:[%s1] sm:$0x1]
    %v47 = vlaneseq
    %v48 = vshrl.u32 %v47, 7
    %v49 = vsub.s32 0, %v48
    %v50 = vrot.slane %v45, %v49
    %v52 = vmul.f32 %v43, %v50
    %v53 = vmul.f32 %v44, %v50
    %v54 = vld [vmem:[%s2] sm:$0x1]
    %v56 = vlaneseq
    %v57 = vshrl.u32 %v56, 7
    %v58 = vsub.s32 0, %v57
    %v59 = vrot.slane %v54, %v58
    %v61 = vadd.f32 %v52, %v59
    %v62 = vadd.f32 %v53, %v59
    %63 = vst.msk [vmem:[#allocation2] sm:$0xff] %vm17, %v61
    %64 = vst.msk [vmem:[#allocation2 + $0x8] sm:$0xff] %vm17, %v62
    // Predicated region
    $region14: #{_lambda_.33} parent=1 // pred_check
      _
    $region15: #{_lambda_.33} parent=1 // pred_check_branch
      %66 = sbr.rel (0) target = $region17
    $region16: #{_lambda_.33} parent=1 // pred_region
      %s68 = ssub.s32 256, 256
      %69 = vsyncadd [#allocation3], %s68
      %s70 = sshll.u32 [#allocation2], 4
      %s71 = int_to_ptr.vmem [resolvable:$true] %s70
      %76 = dma.vmem_to_hbm [thread:$0]  %s71, 256, %s3, [#allocation3], 128, 128, 8
    $region17: #{_lambda_.33} parent=1 // pred_fallthru
      _
    // Predicated region
    $region18: #{_lambda_.33} parent=1 // pred_check
      _
    $region19: #{_lambda_.33} parent=1 // pred_check_branch
      %78 = sbr.rel (0) target = $region21
    $region20: #{_lambda_.33} parent=1 // pred_region
      %79 = dma.done [#allocation3], 256
    $region21: #{_lambda_.33} parent=1 // pred_fallthru
      _
    %80 = vsyncpa [#allocation3], 1

// kernel: _lambda_.22
$region0: #{_lambda_.22}
  #allocation0 [shape = 'u32[]', space=smem, size = 0x4, offset = 0x4, fixed_abs, tag = 'smem constant byte address 0x4 - core index']
  #allocation1 [shape = 'u32[144,128]{1,0:T(1,128)}', space=vmem, size = 0x12000, scoped, tag = 'internal scratch']
  %s0 = inlined_call_operand.vmem [shape: f32[8,8,8], index: 0, kind: input, shape index: {}]
  %s1 = inlined_call_operand.vmem [shape: f32[8,8,8], index: 1, kind: input, shape index: {}]
  %s2 = inlined_call_operand.vmem [shape: f32[8,8,8], index: 2, kind: input, shape index: {}]
  %s3 = inlined_call_operand.vmem [shape: f32[8,8,8], index: 3, kind: output, shape index: {}]
  %s4 = sld [smem:[#allocation0]]
  $region22: #{_lambda_.22} parent=0
    _
  %s6 = ssub.s32 1, %s4
  %s7 = scalar_select 0, %s6, %s4
  // Predicated region
  $region2: #{_lambda_.22} parent=0 // pred_check
    _
  $region3: #{_lambda_.22} parent=0 // pred_check_branch
    %9 = sbr.rel (0) target = $region5
  $region4: #{_lambda_.22} parent=0 // pred_region
    _
  $region5: #{_lambda_.22} parent=0 // pred_fallthru
    _
  // Predicated region
  $region6: #{_lambda_.22} parent=0 // pred_check
    _
  $region7: #{_lambda_.22} parent=0 // pred_check_branch
    %11 = sbr.rel (0) target = $region9
  $region8: #{_lambda_.22} parent=0 // pred_region
    _
  $region9: #{_lambda_.22} parent=0 // pred_fallthru
    _
  // Predicated region
  $region10: #{_lambda_.22} parent=0 // pred_check
    _
  $region11: #{_lambda_.22} parent=0 // pred_check_branch
    %13 = sbr.rel (0) target = $region13
  $region12: #{_lambda_.22} parent=0 // pred_region
    _
  $region13: #{_lambda_.22} parent=0 // pred_fallthru
    _
  %v14 = vld [vmem:[%s0] sm:$0xff]
  %v15 = vld [vmem:[%s0 + $0x8] sm:$0xff]
  %v16 = vld [vmem:[%s0 + $0x10] sm:$0xff]
  %v17 = vld [vmem:[%s0 + $0x18] sm:$0xff]
  %v18 = vld [vmem:[%s0 + $0x20] sm:$0xff]
  %v19 = vld [vmem:[%s0 + $0x28] sm:$0xff]
  %v20 = vld [vmem:[%s0 + $0x30] sm:$0xff]
  %v21 = vld [vmem:[%s0 + $0x38] sm:$0xff]
  %v22 = vmul.f32 %v14, 0.35355338
  %v23 = vmul.f32 %v15, 0.35355338
  %v24 = vmul.f32 %v16, 0.35355338
  %v25 = vmul.f32 %v17, 0.35355338
  %v26 = vmul.f32 %v18, 0.35355338
  %v27 = vmul.f32 %v19, 0.35355338
  %v28 = vmul.f32 %v20, 0.35355338
  %v29 = vmul.f32 %v21, 0.35355338
  %v30 = vld [vmem:[%s1] sm:$0xff]
  %v31 = vld [vmem:[%s1 + $0x8] sm:$0xff]
  %v32 = vld [vmem:[%s1 + $0x10] sm:$0xff]
  %v33 = vld [vmem:[%s1 + $0x18] sm:$0xff]
  %v34 = vld [vmem:[%s1 + $0x20] sm:$0xff]
  %v35 = vld [vmem:[%s1 + $0x28] sm:$0xff]
  %v36 = vld [vmem:[%s1 + $0x30] sm:$0xff]
  %v37 = vld [vmem:[%s1 + $0x38] sm:$0xff]
  %vm38 = vcmask 64512
  %v40 = vsel %vm38, %v22, 0
  %v43 = vsel %vm38, %v30, 0
  %45 = vmatprep.subr.mxu0 0.0
  %46 = vmatpush1.xpose.msra.mxu0 %v43
  %47 = vmatprep.subr.mxu0 0.0
  %48 = vmatpush1.xpose.msra.mxu0 0.0
  %49 = vmatprep.subr.mxu0 0.0
  %50 = vmatpush1.xpose.msra.mxu0 0.0
  %51 = vmatprep.subr.mxu0 0.0
  %52 = vmatpush1.xpose.msra.mxu0 0.0
  %53 = vmatprep.subr.mxu0 0.0
  %54 = vmatpush1.xpose.msra.mxu0 0.0
  %55 = vmatprep.subr.mxu0 0.0
  %56 = vmatpush1.xpose.msra.mxu0 0.0
  %57 = vmatprep.subr.mxu0 0.0
  %58 = vmatpush1.xpose.msra.mxu0 0.0
  %59 = vmatprep.subr.mxu0 0.0
  %60 = vmatpush1.xpose.msra.mxu0 0.0
  %61 = vmatprep.subr.mxu0 0.0
  %62 = vmatpush1.xpose.msra.mxu0 0.0
  %63 = vmatprep.subr.mxu0 0.0
  %64 = vmatpush1.xpose.msra.mxu0 0.0
  %65 = vmatprep.subr.mxu0 0.0
  %66 = vmatpush1.xpose.msra.mxu0 0.0
  %67 = vmatprep.subr.mxu0 0.0
  %68 = vmatpush1.xpose.msra.mxu0 0.0
  %69 = vmatprep.subr.mxu0 0.0
  %70 = vmatpush1.xpose.msra.mxu0 0.0
  %71 = vmatprep.subr.mxu0 0.0
  %72 = vmatpush1.xpose.msra.mxu0 0.0
  %73 = vmatprep.subr.mxu0 0.0
  %74 = vmatpush1.xpose.msra.mxu0 0.0
  %75 = vmatprep.subr.mxu0 0.0
  %76 = vmatpush1.xpose.msra.mxu0 0.0
  %77 = vmatprep.subr.mxu0 0.0
  %78 = vmatpush1.xpose.msra.mxu0 0.0
  %79 = vmatprep.subr.mxu0 0.0
  %80 = vmatpush1.xpose.msra.mxu0 0.0
  %81 = vmatprep.subr.mxu0 0.0
  %82 = vmatpush1.xpose.msra.mxu0 0.0
  %83 = vmatprep.subr.mxu0 0.0
  %84 = vmatpush1.xpose.msra.mxu0 0.0
  %85 = vmatprep.subr.mxu0 0.0
  %86 = vmatpush1.xpose.msra.mxu0 0.0
  %87 = vmatprep.subr.mxu0 0.0
  %88 = vmatpush1.xpose.msra.mxu0 0.0
  %89 = vmatprep.subr.mxu0 0.0
  %90 = vmatpush1.xpose.msra.mxu0 0.0
  %91 = vmatprep.subr.mxu0 0.0
  %92 = vmatpush1.xpose.msra.mxu0 0.0
  %93 = vmatprep.subr.mxu0 0.0
  %94 = vmatpush1.xpose.msra.mxu0 0.0
  %95 = vmatprep.subr.mxu0 0.0
  %96 = vmatpush1.xpose.msra.mxu0 0.0
  %97 = vmatprep.subr.mxu0 0.0
  %98 = vmatpush1.xpose.msra.mxu0 0.0
  %99 = vmatprep.subr.mxu0 0.0
  %100 = vmatpush1.xpose.msra.mxu0 0.0
  %101 = vmatprep.subr.mxu0 0.0
  %102 = vmatpush1.xpose.msra.mxu0 0.0
  %103 = vmatprep.subr.mxu0 0.0
  %104 = vmatpush1.xpose.msra.mxu0 0.0
  %105 = vmatprep.subr.mxu0 0.0
  %106 = vmatpush1.xpose.msra.mxu0 0.0
  %107 = vmatprep.subr.mxu0 0.0
  %108 = vmatpush1.xpose.msra.mxu0 0.0
  %109 = vmatprep.mubr.f32.mxu0 0.0
  %110 = vmatmul.mubr.f32.gmra.mrb[0].mxu0 %v40
  %v111 = vpop.f32.mrb[0].mxu0
  %v112 = vadd.f32 0.0, %v111
  %v113 = vpop.f32.mrb[0].mxu0
  %114 = vdwg.mxu0
  %v116 = vsel %vm38, %v23, 0
  %v119 = vsel %vm38, %v31, 0
  %121 = vmatprep.subr.mxu0 0.0
  %122 = vmatpush1.xpose.msra.mxu0 %v119
  %123 = vmatprep.subr.mxu0 0.0
  %124 = vmatpush1.xpose.msra.mxu0 0.0
  %125 = vmatprep.subr.mxu0 0.0
  %126 = vmatpush1.xpose.msra.mxu0 0.0
  %127 = vmatprep.subr.mxu0 0.0
  %128 = vmatpush1.xpose.msra.mxu0 0.0
  %129 = vmatprep.subr.mxu0 0.0
  %130 = vmatpush1.xpose.msra.mxu0 0.0
  %131 = vmatprep.subr.mxu0 0.0
  %132 = vmatpush1.xpose.msra.mxu0 0.0
  %133 = vmatprep.subr.mxu0 0.0
  %134 = vmatpush1.xpose.msra.mxu0 0.0
  %135 = vmatprep.subr.mxu0 0.0
  %136 = vmatpush1.xpose.msra.mxu0 0.0
  %137 = vmatprep.subr.mxu0 0.0
  %138 = vmatpush1.xpose.msra.mxu0 0.0
  %139 = vmatprep.subr.mxu0 0.0
  %140 = vmatpush1.xpose.msra.mxu0 0.0
  %141 = vmatprep.subr.mxu0 0.0
  %142 = vmatpush1.xpose.msra.mxu0 0.0
  %143 = vmatprep.subr.mxu0 0.0
  %144 = vmatpush1.xpose.msra.mxu0 0.0
  %145 = vmatprep.subr.mxu0 0.0
  %146 = vmatpush1.xpose.msra.mxu0 0.0
  %147 = vmatprep.subr.mxu0 0.0
  %148 = vmatpush1.xpose.msra.mxu0 0.0
  %149 = vmatprep.subr.mxu0 0.0
  %150 = vmatpush1.xpose.msra.mxu0 0.0
  %151 = vmatprep.subr.mxu0 0.0
  %152 = vmatpush1.xpose.msra.mxu0 0.0
  %153 = vmatprep.subr.mxu0 0.0
  %154 = vmatpush1.xpose.msra.mxu0 0.0
  %155 = vmatprep.subr.mxu0 0.0
  %156 = vmatpush1.xpose.msra.mxu0 0.0
  %157 = vmatprep.subr.mxu0 0.0
  %158 = vmatpush1.xpose.msra.mxu0 0.0
  %159 = vmatprep.subr.mxu0 0.0
  %160 = vmatpush1.xpose.msra.mxu0 0.0
  %161 = vmatprep.subr.mxu0 0.0
  %162 = vmatpush1.xpose.msra.mxu0 0.0
  %163 = vmatprep.subr.mxu0 0.0
  %164 = vmatpush1.xpose.msra.mxu0 0.0
  %165 = vmatprep.subr.mxu0 0.0
  %166 = vmatpush1.xpose.msra.mxu0 0.0
  %167 = vmatprep.subr.mxu0 0.0
  %168 = vmatpush1.xpose.msra.mxu0 0.0
  %169 = vmatprep.subr.mxu0 0.0
  %170 = vmatpush1.xpose.msra.mxu0 0.0
  %171 = vmatprep.subr.mxu0 0.0
  %172 = vmatpush1.xpose.msra.mxu0 0.0
  %173 = vmatprep.subr.mxu0 0.0
  %174 = vmatpush1.xpose.msra.mxu0 0.0
  %175 = vmatprep.subr.mxu0 0.0
  %176 = vmatpush1.xpose.msra.mxu0 0.0
  %177 = vmatprep.subr.mxu0 0.0
  %178 = vmatpush1.xpose.msra.mxu0 0.0
  %179 = vmatprep.subr.mxu0 0.0
  %180 = vmatpush1.xpose.msra.mxu0 0.0
  %181 = vmatprep.subr.mxu0 0.0
  %182 = vmatpush1.xpose.msra.mxu0 0.0
  %183 = vmatprep.subr.mxu0 0.0
  %184 = vmatpush1.xpose.msra.mxu0 0.0
  %185 = vmatprep.mubr.f32.mxu0 0.0
  %186 = vmatmul.mubr.f32.gmra.mrb[0].mxu0 %v116
  %v187 = vpop.f32.mrb[0].mxu0
  %v188 = vadd.f32 0.0, %v187
  %v189 = vpop.f32.mrb[0].mxu0
  %190 = vdwg.mxu0
  %v192 = vsel %vm38, %v24, 0
  %v195 = vsel %vm38, %v32, 0
  %197 = vmatprep.subr.mxu0 0.0
  %198 = vmatpush1.xpose.msra.mxu0 %v195
  %199 = vmatprep.subr.mxu0 0.0
  %200 = vmatpush1.xpose.msra.mxu0 0.0
  %201 = vmatprep.subr.mxu0 0.0
  %202 = vmatpush1.xpose.msra.mxu0 0.0
  %203 = vmatprep.subr.mxu0 0.0
  %204 = vmatpush1.xpose.msra.mxu0 0.0
  %205 = vmatprep.subr.mxu0 0.0
  %206 = vmatpush1.xpose.msra.mxu0 0.0
  %207 = vmatprep.subr.mxu0 0.0
  %208 = vmatpush1.xpose.msra.mxu0 0.0
  %209 = vmatprep.subr.mxu0 0.0
  %210 = vmatpush1.xpose.msra.mxu0 0.0
  %211 = vmatprep.subr.mxu0 0.0
  %212 = vmatpush1.xpose.msra.mxu0 0.0
  %213 = vmatprep.subr.mxu0 0.0
  %214 = vmatpush1.xpose.msra.mxu0 0.0
  %215 = vmatprep.subr.mxu0 0.0
  %216 = vmatpush1.xpose.msra.mxu0 0.0
  %217 = vmatprep.subr.mxu0 0.0
  %218 = vmatpush1.xpose.msra.mxu0 0.0
  %219 = vmatprep.subr.mxu0 0.0
  %220 = vmatpush1.xpose.msra.mxu0 0.0
  %221 = vmatprep.subr.mxu0 0.0
  %222 = vmatpush1.xpose.msra.mxu0 0.0
  %223 = vmatprep.subr.mxu0 0.0
  %224 = vmatpush1.xpose.msra.mxu0 0.0
  %225 = vmatprep.subr.mxu0 0.0
  %226 = vmatpush1.xpose.msra.mxu0 0.0
  %227 = vmatprep.subr.mxu0 0.0
  %228 = vmatpush1.xpose.msra.mxu0 0.0
  %229 = vmatprep.subr.mxu0 0.0
  %230 = vmatpush1.xpose.msra.mxu0 0.0
  %231 = vmatprep.subr.mxu0 0.0
  %232 = vmatpush1.xpose.msra.mxu0 0.0
  %233 = vmatprep.subr.mxu0 0.0
  %234 = vmatpush1.xpose.msra.mxu0 0.0
  %235 = vmatprep.subr.mxu0 0.0
  %236 = vmatpush1.xpose.msra.mxu0 0.0
  %237 = vmatprep.subr.mxu0 0.0
  %238 = vmatpush1.xpose.msra.mxu0 0.0
  %239 = vmatprep.subr.mxu0 0.0
  %240 = vmatpush1.xpose.msra.mxu0 0.0
  %241 = vmatprep.subr.mxu0 0.0
  %242 = vmatpush1.xpose.msra.mxu0 0.0
  %243 = vmatprep.subr.mxu0 0.0
  %244 = vmatpush1.xpose.msra.mxu0 0.0
  %245 = vmatprep.subr.mxu0 0.0
  %246 = vmatpush1.xpose.msra.mxu0 0.0
  %247 = vmatprep.subr.mxu0 0.0
  %248 = vmatpush1.xpose.msra.mxu0 0.0
  %249 = vmatprep.subr.mxu0 0.0
  %250 = vmatpush1.xpose.msra.mxu0 0.0
  %251 = vmatprep.subr.mxu0 0.0
  %252 = vmatpush1.xpose.msra.mxu0 0.0
  %253 = vmatprep.subr.mxu0 0.0
  %254 = vmatpush1.xpose.msra.mxu0 0.0
  %255 = vmatprep.subr.mxu0 0.0
  %256 = vmatpush1.xpose.msra.mxu0 0.0
  %257 = vmatprep.subr.mxu0 0.0
  %258 = vmatpush1.xpose.msra.mxu0 0.0
  %259 = vmatprep.subr.mxu0 0.0
  %260 = vmatpush1.xpose.msra.mxu0 0.0
  %261 = vmatprep.mubr.f32.mxu0 0.0
  %262 = vmatmul.mubr.f32.gmra.mrb[0].mxu0 %v192
  %v263 = vpop.f32.mrb[0].mxu0
  %v264 = vadd.f32 0.0, %v263
  %v265 = vpop.f32.mrb[0].mxu0
  %266 = vdwg.mxu0
  %v268 = vsel %vm38, %v25, 0
  %v271 = vsel %vm38, %v33, 0
  %273 = vmatprep.subr.mxu0 0.0
  %274 = vmatpush1.xpose.msra.mxu0 %v271
  %275 = vmatprep.subr.mxu0 0.0
  %276 = vmatpush1.xpose.msra.mxu0 0.0
  %277 = vmatprep.subr.mxu0 0.0
  %278 = vmatpush1.xpose.msra.mxu0 0.0
  %279 = vmatprep.subr.mxu0 0.0
  %280 = vmatpush1.xpose.msra.mxu0 0.0
  %281 = vmatprep.subr.mxu0 0.0
  %282 = vmatpush1.xpose.msra.mxu0 0.0
  %283 = vmatprep.subr.mxu0 0.0
  %284 = vmatpush1.xpose.msra.mxu0 0.0
  %285 = vmatprep.subr.mxu0 0.0
  %286 = vmatpush1.xpose.msra.mxu0 0.0
  %287 = vmatprep.subr.mxu0 0.0
  %288 = vmatpush1.xpose.msra.mxu0 0.0
  %289 = vmatprep.subr.mxu0 0.0
  %290 = vmatpush1.xpose.msra.mxu0 0.0
  %291 = vmatprep.subr.mxu0 0.0
  %292 = vmatpush1.xpose.msra.mxu0 0.0
  %293 = vmatprep.subr.mxu0 0.0
  %294 = vmatpush1.xpose.msra.mxu0 0.0
  %295 = vmatprep.subr.mxu0 0.0
  %296 = vmatpush1.xpose.msra.mxu0 0.0
  %297 = vmatprep.subr.mxu0 0.0
  %298 = vmatpush1.xpose.msra.mxu0 0.0
  %299 = vmatprep.subr.mxu0 0.0
  %300 = vmatpush1.xpose.msra.mxu0 0.0
  %301 = vmatprep.subr.mxu0 0.0
  %302 = vmatpush1.xpose.msra.mxu0 0.0
  %303 = vmatprep.subr.mxu0 0.0
  %304 = vmatpush1.xpose.msra.mxu0 0.0
  %305 = vmatprep.subr.mxu0 0.0
  %306 = vmatpush1.xpose.msra.mxu0 0.0
  %307 = vmatprep.subr.mxu0 0.0
  %308 = vmatpush1.xpose.msra.mxu0 0.0
  %309 = vmatprep.subr.mxu0 0.0
  %310 = vmatpush1.xpose.msra.mxu0 0.0
  %311 = vmatprep.subr.mxu0 0.0
  %312 = vmatpush1.xpose.msra.mxu0 0.0
  %313 = vmatprep.subr.mxu0 0.0
  %314 = vmatpush1.xpose.msra.mxu0 0.0
  %315 = vmatprep.subr.mxu0 0.0
  %316 = vmatpush1.xpose.msra.mxu0 0.0
  %317 = vmatprep.subr.mxu0 0.0
  %318 = vmatpush1.xpose.msra.mxu0 0.0
  %319 = vmatprep.subr.mxu0 0.0
  %320 = vmatpush1.xpose.msra.mxu0 0.0
  %321 = vmatprep.subr.mxu0 0.0
  %322 = vmatpush1.xpose.msra.mxu0 0.0
  %323 = vmatprep.subr.mxu0 0.0
  %324 = vmatpush1.xpose.msra.mxu0 0.0
  %325 = vmatprep.subr.mxu0 0.0
  %326 = vmatpush1.xpose.msra.mxu0 0.0
  %327 = vmatprep.subr.mxu0 0.0
  %328 = vmatpush1.xpose.msra.mxu0 0.0
  %329 = vmatprep.subr.mxu0 0.0
  %330 = vmatpush1.xpose.msra.mxu0 0.0
  %331 = vmatprep.subr.mxu0 0.0
  %332 = vmatpush1.xpose.msra.mxu0 0.0
  %333 = vmatprep.subr.mxu0 0.0
  %334 = vmatpush1.xpose.msra.mxu0 0.0
  %335 = vmatprep.subr.mxu0 0.0
  %336 = vmatpush1.xpose.msra.mxu0 0.0
  %337 = vmatprep.mubr.f32.mxu0 0.0
  %338 = vmatmul.mubr.f32.gmra.mrb[0].mxu0 %v268
  %v339 = vpop.f32.mrb[0].mxu0
  %v340 = vadd.f32 0.0, %v339
  %v341 = vpop.f32.mrb[0].mxu0
  %342 = vdwg.mxu0
  %v344 = vsel %vm38, %v26, 0
  %v347 = vsel %vm38, %v34, 0
  %349 = vmatprep.subr.mxu0 0.0
  %350 = vmatpush1.xpose.msra.mxu0 %v347
  %351 = vmatprep.subr.mxu0 0.0
  %352 = vmatpush1.xpose.msra.mxu0 0.0
  %353 = vmatprep.subr.mxu0 0.0
  %354 = vmatpush1.xpose.msra.mxu0 0.0
  %355 = vmatprep.subr.mxu0 0.0
  %356 = vmatpush1.xpose.msra.mxu0 0.0
  %357 = vmatprep.subr.mxu0 0.0
  %358 = vmatpush1.xpose.msra.mxu0 0.0
  %359 = vmatprep.subr.mxu0 0.0
  %360 = vmatpush1.xpose.msra.mxu0 0.0
  %361 = vmatprep.subr.mxu0 0.0
  %362 = vmatpush1.xpose.msra.mxu0 0.0
  %363 = vmatprep.subr.mxu0 0.0
  %364 = vmatpush1.xpose.msra.mxu0 0.0
  %365 = vmatprep.subr.mxu0 0.0
  %366 = vmatpush1.xpose.msra.mxu0 0.0
  %367 = vmatprep.subr.mxu0 0.0
  %368 = vmatpush1.xpose.msra.mxu0 0.0
  %369 = vmatprep.subr.mxu0 0.0
  %370 = vmatpush1.xpose.msra.mxu0 0.0
  %371 = vmatprep.subr.mxu0 0.0
  %372 = vmatpush1.xpose.msra.mxu0 0.0
  %373 = vmatprep.subr.mxu0 0.0
  %374 = vmatpush1.xpose.msra.mxu0 0.0
  %375 = vmatprep.subr.mxu0 0.0
  %376 = vmatpush1.xpose.msra.mxu0 0.0
  %377 = vmatprep.subr.mxu0 0.0
  %378 = vmatpush1.xpose.msra.mxu0 0.0
  %379 = vmatprep.subr.mxu0 0.0
  %380 = vmatpush1.xpose.msra.mxu0 0.0
  %381 = vmatprep.subr.mxu0 0.0
  %382 = vmatpush1.xpose.msra.mxu0 0.0
  %383 = vmatprep.subr.mxu0 0.0
  %384 = vmatpush1.xpose.msra.mxu0 0.0
  %385 = vmatprep.subr.mxu0 0.0
  %386 = vmatpush1.xpose.msra.mxu0 0.0
  %387 = vmatprep.subr.mxu0 0.0
  %388 = vmatpush1.xpose.msra.mxu0 0.0
  %389 = vmatprep.subr.mxu0 0.0
  %390 = vmatpush1.xpose.msra.mxu0 0.0
  %391 = vmatprep.subr.mxu0 0.0
  %392 = vmatpush1.xpose.msra.mxu0 0.0
  %393 = vmatprep.subr.mxu0 0.0
  %394 = vmatpush1.xpose.msra.mxu0 0.0
  %395 = vmatprep.subr.mxu0 0.0
  %396 = vmatpush1.xpose.msra.mxu0 0.0
  %397 = vmatprep.subr.mxu0 0.0
  %398 = vmatpush1.xpose.msra.mxu0 0.0
  %399 = vmatprep.subr.mxu0 0.0
  %400 = vmatpush1.xpose.msra.mxu0 0.0
  %401 = vmatprep.subr.mxu0 0.0
  %402 = vmatpush1.xpose.msra.mxu0 0.0
  %403 = vmatprep.subr.mxu0 0.0
  %404 = vmatpush1.xpose.msra.mxu0 0.0
  %405 = vmatprep.subr.mxu0 0.0
  %406 = vmatpush1.xpose.msra.mxu0 0.0
  %407 = vmatprep.subr.mxu0 0.0
  %408 = vmatpush1.xpose.msra.mxu0 0.0
  %409 = vmatprep.subr.mxu0 0.0
  %410 = vmatpush1.xpose.msra.mxu0 0.0
  %411 = vmatprep.subr.mxu0 0.0
  %412 = vmatpush1.xpose.msra.mxu0 0.0
  %413 = vmatprep.mubr.f32.mxu0 0.0
  %414 = vmatmul.mubr.f32.gmra.mrb[0].mxu0 %v344
  %v415 = vpop.f32.mrb[0].mxu0
  %v416 = vadd.f32 0.0, %v415
  %v417 = vpop.f32.mrb[0].mxu0
  %418 = vdwg.mxu0
  %v420 = vsel %vm38, %v27, 0
  %v423 = vsel %vm38, %v35, 0
  %425 = vmatprep.subr.mxu0 0.0
  %426 = vmatpush1.xpose.msra.mxu0 %v423
  %427 = vmatprep.subr.mxu0 0.0
  %428 = vmatpush1.xpose.msra.mxu0 0.0
  %429 = vmatprep.subr.mxu0 0.0
  %430 = vmatpush1.xpose.msra.mxu0 0.0
  %431 = vmatprep.subr.mxu0 0.0
  %432 = vmatpush1.xpose.msra.mxu0 0.0
  %433 = vmatprep.subr.mxu0 0.0
  %434 = vmatpush1.xpose.msra.mxu0 0.0
  %435 = vmatprep.subr.mxu0 0.0
  %436 = vmatpush1.xpose.msra.mxu0 0.0
  %437 = vmatprep.subr.mxu0 0.0
  %438 = vmatpush1.xpose.msra.mxu0 0.0
  %439 = vmatprep.subr.mxu0 0.0
  %440 = vmatpush1.xpose.msra.mxu0 0.0
  %441 = vmatprep.subr.mxu0 0.0
  %442 = vmatpush1.xpose.msra.mxu0 0.0
  %443 = vmatprep.subr.mxu0 0.0
  %444 = vmatpush1.xpose.msra.mxu0 0.0
  %445 = vmatprep.subr.mxu0 0.0
  %446 = vmatpush1.xpose.msra.mxu0 0.0
  %447 = vmatprep.subr.mxu0 0.0
  %448 = vmatpush1.xpose.msra.mxu0 0.0
  %449 = vmatprep.subr.mxu0 0.0
  %450 = vmatpush1.xpose.msra.mxu0 0.0
  %451 = vmatprep.subr.mxu0 0.0
  %452 = vmatpush1.xpose.msra.mxu0 0.0
  %453 = vmatprep.subr.mxu0 0.0
  %454 = vmatpush1.xpose.msra.mxu0 0.0
  %455 = vmatprep.subr.mxu0 0.0
  %456 = vmatpush1.xpose.msra.mxu0 0.0
  %457 = vmatprep.subr.mxu0 0.0
  %458 = vmatpush1.xpose.msra.mxu0 0.0
  %459 = vmatprep.subr.mxu0 0.0
  %460 = vmatpush1.xpose.msra.mxu0 0.0
  %461 = vmatprep.subr.mxu0 0.0
  %462 = vmatpush1.xpose.msra.mxu0 0.0
  %463 = vmatprep.subr.mxu0 0.0
  %464 = vmatpush1.xpose.msra.mxu0 0.0
  %465 = vmatprep.subr.mxu0 0.0
  %466 = vmatpush1.xpose.msra.mxu0 0.0
  %467 = vmatprep.subr.mxu0 0.0
  %468 = vmatpush1.xpose.msra.mxu0 0.0
  %469 = vmatprep.subr.mxu0 0.0
  %470 = vmatpush1.xpose.msra.mxu0 0.0
  %471 = vmatprep.subr.mxu0 0.0
  %472 = vmatpush1.xpose.msra.mxu0 0.0
  %473 = vmatprep.subr.mxu0 0.0
  %474 = vmatpush1.xpose.msra.mxu0 0.0
  %475 = vmatprep.subr.mxu0 0.0
  %476 = vmatpush1.xpose.msra.mxu0 0.0
  %477 = vmatprep.subr.mxu0 0.0
  %478 = vmatpush1.xpose.msra.mxu0 0.0
  %479 = vmatprep.subr.mxu0 0.0
  %480 = vmatpush1.xpose.msra.mxu0 0.0
  %481 = vmatprep.subr.mxu0 0.0
  %482 = vmatpush1.xpose.msra.mxu0 0.0
  %483 = vmatprep.subr.mxu0 0.0
  %484 = vmatpush1.xpose.msra.mxu0 0.0
  %485 = vmatprep.subr.mxu0 0.0
  %486 = vmatpush1.xpose.msra.mxu0 0.0
  %487 = vmatprep.subr.mxu0 0.0
  %488 = vmatpush1.xpose.msra.mxu0 0.0
  %489 = vmatprep.mubr.f32.mxu0 0.0
  %490 = vmatmul.mubr.f32.gmra.mrb[0].mxu0 %v420
  %v491 = vpop.f32.mrb[0].mxu0
  %v492 = vadd.f32 0.0, %v491
  %v493 = vpop.f32.mrb[0].mxu0
  %494 = vdwg.mxu0
  %v496 = vsel %vm38, %v28, 0
  %v499 = vsel %vm38, %v36, 0
  %501 = vmatprep.subr.mxu0 0.0
  %502 = vmatpush1.xpose.msra.mxu0 %v499
  %503 = vmatprep.subr.mxu0 0.0
  %504 = vmatpush1.xpose.msra.mxu0 0.0
  %505 = vmatprep.subr.mxu0 0.0
  %506 = vmatpush1.xpose.msra.mxu0 0.0
  %507 = vmatprep.subr.mxu0 0.0
  %508 = vmatpush1.xpose.msra.mxu0 0.0
  %509 = vmatprep.subr.mxu0 0.0
  %510 = vmatpush1.xpose.msra.mxu0 0.0
  %511 = vmatprep.subr.mxu0 0.0
  %512 = vmatpush1.xpose.msra.mxu0 0.0
  %513 = vmatprep.subr.mxu0 0.0
  %514 = vmatpush1.xpose.msra.mxu0 0.0
  %515 = vmatprep.subr.mxu0 0.0
  %516 = vmatpush1.xpose.msra.mxu0 0.0
  %517 = vmatprep.subr.mxu0 0.0
  %518 = vmatpush1.xpose.msra.mxu0 0.0
  %519 = vmatprep.subr.mxu0 0.0
  %520 = vmatpush1.xpose.msra.mxu0 0.0
  %521 = vmatprep.subr.mxu0 0.0
  %522 = vmatpush1.xpose.msra.mxu0 0.0
  %523 = vmatprep.subr.mxu0 0.0
  %524 = vmatpush1.xpose.msra.mxu0 0.0
  %525 = vmatprep.subr.mxu0 0.0
  %526 = vmatpush1.xpose.msra.mxu0 0.0
  %527 = vmatprep.subr.mxu0 0.0
  %528 = vmatpush1.xpose.msra.mxu0 0.0
  %529 = vmatprep.subr.mxu0 0.0
  %530 = vmatpush1.xpose.msra.mxu0 0.0
  %531 = vmatprep.subr.mxu0 0.0
  %532 = vmatpush1.xpose.msra.mxu0 0.0
  %533 = vmatprep.subr.mxu0 0.0
  %534 = vmatpush1.xpose.msra.mxu0 0.0
  %535 = vmatprep.subr.mxu0 0.0
  %536 = vmatpush1.xpose.msra.mxu0 0.0
  %537 = vmatprep.subr.mxu0 0.0
  %538 = vmatpush1.xpose.msra.mxu0 0.0
  %539 = vmatprep.subr.mxu0 0.0
  %540 = vmatpush1.xpose.msra.mxu0 0.0
  %541 = vmatprep.subr.mxu0 0.0
  %542 = vmatpush1.xpose.msra.mxu0 0.0
  %543 = vmatprep.subr.mxu0 0.0
  %544 = vmatpush1.xpose.msra.mxu0 0.0
  %545 = vmatprep.subr.mxu0 0.0
  %546 = vmatpush1.xpose.msra.mxu0 0.0
  %547 = vmatprep.subr.mxu0 0.0
  %548 = vmatpush1.xpose.msra.mxu0 0.0
  %549 = vmatprep.subr.mxu0 0.0
  %550 = vmatpush1.xpose.msra.mxu0 0.0
  %551 = vmatprep.subr.mxu0 0.0
  %552 = vmatpush1.xpose.msra.mxu0 0.0
  %553 = vmatprep.subr.mxu0 0.0
  %554 = vmatpush1.xpose.msra.mxu0 0.0
  %555 = vmatprep.subr.mxu0 0.0
  %556 = vmatpush1.xpose.msra.mxu0 0.0
  %557 = vmatprep.subr.mxu0 0.0
  %558 = vmatpush1.xpose.msra.mxu0 0.0
  %559 = vmatprep.subr.mxu0 0.0
  %560 = vmatpush1.xpose.msra.mxu0 0.0
  %561 = vmatprep.subr.mxu0 0.0
  %562 = vmatpush1.xpose.msra.mxu0 0.0
  %563 = vmatprep.subr.mxu0 0.0
  %564 = vmatpush1.xpose.msra.mxu0 0.0
  %565 = vmatprep.mubr.f32.mxu0 0.0
  %566 = vmatmul.mubr.f32.gmra.mrb[0].mxu0 %v496
  %v567 = vpop.f32.mrb[0].mxu0
  %v568 = vadd.f32 0.0, %v567
  %v569 = vpop.f32.mrb[0].mxu0
  %570 = vdwg.mxu0
  %v572 = vsel %vm38, %v29, 0
  %v575 = vsel %vm38, %v37, 0
  %577 = vmatprep.subr.mxu0 0.0
  %578 = vmatpush1.xpose.msra.mxu0 %v575
  %579 = vmatprep.subr.mxu0 0.0
  %580 = vmatpush1.xpose.msra.mxu0 0.0
  %581 = vmatprep.subr.mxu0 0.0
  %582 = vmatpush1.xpose.msra.mxu0 0.0
  %583 = vmatprep.subr.mxu0 0.0
  %584 = vmatpush1.xpose.msra.mxu0 0.0
  %585 = vmatprep.subr.mxu0 0.0
  %586 = vmatpush1.xpose.msra.mxu0 0.0
  %587 = vmatprep.subr.mxu0 0.0
  %588 = vmatpush1.xpose.msra.mxu0 0.0
  %589 = vmatprep.subr.mxu0 0.0
  %590 = vmatpush1.xpose.msra.mxu0 0.0
  %591 = vmatprep.subr.mxu0 0.0
  %592 = vmatpush1.xpose.msra.mxu0 0.0
  %593 = vmatprep.subr.mxu0 0.0
  %594 = vmatpush1.xpose.msra.mxu0 0.0
  %595 = vmatprep.subr.mxu0 0.0
  %596 = vmatpush1.xpose.msra.mxu0 0.0
  %597 = vmatprep.subr.mxu0 0.0
  %598 = vmatpush1.xpose.msra.mxu0 0.0
  %599 = vmatprep.subr.mxu0 0.0
  %600 = vmatpush1.xpose.msra.mxu0 0.0
  %601 = vmatprep.subr.mxu0 0.0
  %602 = vmatpush1.xpose.msra.mxu0 0.0
  %603 = vmatprep.subr.mxu0 0.0
  %604 = vmatpush1.xpose.msra.mxu0 0.0
  %605 = vmatprep.subr.mxu0 0.0
  %606 = vmatpush1.xpose.msra.mxu0 0.0
  %607 = vmatprep.subr.mxu0 0.0
  %608 = vmatpush1.xpose.msra.mxu0 0.0
  %609 = vmatprep.subr.mxu0 0.0
  %610 = vmatpush1.xpose.msra.mxu0 0.0
  %611 = vmatprep.subr.mxu0 0.0
  %612 = vmatpush1.xpose.msra.mxu0 0.0
  %613 = vmatprep.subr.mxu0 0.0
  %614 = vmatpush1.xpose.msra.mxu0 0.0
  %615 = vmatprep.subr.mxu0 0.0
  %616 = vmatpush1.xpose.msra.mxu0 0.0
  %617 = vmatprep.subr.mxu0 0.0
  %618 = vmatpush1.xpose.msra.mxu0 0.0
  %619 = vmatprep.subr.mxu0 0.0
  %620 = vmatpush1.xpose.msra.mxu0 0.0
  %621 = vmatprep.subr.mxu0 0.0
  %622 = vmatpush1.xpose.msra.mxu0 0.0
  %623 = vmatprep.subr.mxu0 0.0
  %624 = vmatpush1.xpose.msra.mxu0 0.0
  %625 = vmatprep.subr.mxu0 0.0
  %626 = vmatpush1.xpose.msra.mxu0 0.0
  %627 = vmatprep.subr.mxu0 0.0
  %628 = vmatpush1.xpose.msra.mxu0 0.0
  %629 = vmatprep.subr.mxu0 0.0
  %630 = vmatpush1.xpose.msra.mxu0 0.0
  %631 = vmatprep.subr.mxu0 0.0
  %632 = vmatpush1.xpose.msra.mxu0 0.0
  %633 = vmatprep.subr.mxu0 0.0
  %634 = vmatpush1.xpose.msra.mxu0 0.0
  %635 = vmatprep.subr.mxu0 0.0
  %636 = vmatpush1.xpose.msra.mxu0 0.0
  %637 = vmatprep.subr.mxu0 0.0
  %638 = vmatpush1.xpose.msra.mxu0 0.0
  %639 = vmatprep.subr.mxu0 0.0
  %640 = vmatpush1.xpose.msra.mxu0 0.0
  %641 = vmatprep.mubr.f32.mxu0 0.0
  %642 = vmatmul.mubr.f32.gmra.mrb[0].mxu0 %v572
  %v643 = vpop.f32.mrb[0].mxu0
  %v644 = vadd.f32 0.0, %v643
  %v645 = vpop.f32.mrb[0].mxu0
  %646 = vdwg.mxu0
  %v647 = vsel %vm38, %v112, -inf
  %648 = vmax.xlane.f32.xlu0 %v647
  %v649 = vpop.xlane.xlu0 %648
  %v650 = vsel %vm38, %v188, -inf
  %651 = vmax.xlane.f32.xlu0 %v650
  %v652 = vpop.xlane.xlu0 %651
  %v653 = vsel %vm38, %v264, -inf
  %654 = vmax.xlane.f32.xlu0 %v653
  %v655 = vpop.xlane.xlu0 %654
  %v656 = vsel %vm38, %v340, -inf
  %657 = vmax.xlane.f32.xlu0 %v656
  %v658 = vpop.xlane.xlu0 %657
  %v659 = vsel %vm38, %v416, -inf
  %660 = vmax.xlane.f32.xlu0 %v659
  %v661 = vpop.xlane.xlu0 %660
  %v662 = vsel %vm38, %v492, -inf
  %663 = vmax.xlane.f32.xlu0 %v662
  %v664 = vpop.xlane.xlu0 %663
  %v665 = vsel %vm38, %v568, -inf
  %666 = vmax.xlane.f32.xlu0 %v665
  %v667 = vpop.xlane.xlu0 %666
  %v668 = vsel %vm38, %v644, -inf
  %669 = vmax.xlane.f32.xlu0 %v668
  %v670 = vpop.xlane.xlu0 %669
  %v671 = vsub.f32 %v112, %v649
  %v672 = vsub.f32 %v188, %v652
  %v673 = vsub.f32 %v264, %v655
  %v674 = vsub.f32 %v340, %v658
  %v675 = vsub.f32 %v416, %v661
  %v676 = vsub.f32 %v492, %v664
  %v677 = vsub.f32 %v568, %v667
  %v678 = vsub.f32 %v644, %v670
  %v679 = vmul.f32 %v671, 1.442695
  %v680 = vpow.pop %v679
  %v681 = vmul.f32 %v672, 1.442695
  %v682 = vpow.pop %v681
  %v683 = vmul.f32 %v673, 1.442695
  %v684 = vpow.pop %v683
  %v685 = vmul.f32 %v674, 1.442695
  %v686 = vpow.pop %v685
  %v687 = vmul.f32 %v675, 1.442695
  %v688 = vpow.pop %v687
  %v689 = vmul.f32 %v676, 1.442695
  %v690 = vpow.pop %v689
  %v691 = vmul.f32 %v677, 1.442695
  %v692 = vpow.pop %v691
  %v693 = vmul.f32 %v678, 1.442695
  %v694 = vpow.pop %v693
  %v695 = vsel %vm38, %v680, 0.0
  %696 = vadd.xlane.f32.xlu0 %v695
  %v697 = vpop.xlane.xlu0 %696
  %v698 = vsel %vm38, %v682, 0.0
  %699 = vadd.xlane.f32.xlu0 %v698
  %v700 = vpop.xlane.xlu0 %699
  %v701 = vsel %vm38, %v684, 0.0
  %702 = vadd.xlane.f32.xlu0 %v701
  %v703 = vpop.xlane.xlu0 %702
  %v704 = vsel %vm38, %v686, 0.0
  %705 = vadd.xlane.f32.xlu0 %v704
  %v706 = vpop.xlane.xlu0 %705
  %v707 = vsel %vm38, %v688, 0.0
  %708 = vadd.xlane.f32.xlu0 %v707
  %v709 = vpop.xlane.xlu0 %708
  %v710 = vsel %vm38, %v690, 0.0
  %711 = vadd.xlane.f32.xlu0 %v710
  %v712 = vpop.xlane.xlu0 %711
  %v713 = vsel %vm38, %v692, 0.0
  %714 = vadd.xlane.f32.xlu0 %v713
  %v715 = vpop.xlane.xlu0 %714
  %v716 = vsel %vm38, %v694, 0.0
  %717 = vadd.xlane.f32.xlu0 %v716
  %v718 = vpop.xlane.xlu0 %717
  %v719 = vrcp.pop %v697
  %v720 = vrcp.pop %v700
  %v721 = vrcp.pop %v703
  %v722 = vrcp.pop %v706
  %v723 = vrcp.pop %v709
  %v724 = vrcp.pop %v712
  %v725 = vrcp.pop %v715
  %v726 = vrcp.pop %v718
  %v727 = vmul.f32 %v680, %v719
  %v728 = vmul.f32 %v682, %v720
  %v729 = vmul.f32 %v684, %v721
  %v730 = vmul.f32 %v686, %v722
  %v731 = vmul.f32 %v688, %v723
  %v732 = vmul.f32 %v690, %v724
  %v733 = vmul.f32 %v692, %v725
  %v734 = vmul.f32 %v694, %v726
  %v735 = vld [vmem:[%s2] sm:$0xff]
  %v736 = vld [vmem:[%s2 + $0x8] sm:$0xff]
  %v737 = vld [vmem:[%s2 + $0x10] sm:$0xff]
  %v738 = vld [vmem:[%s2 + $0x18] sm:$0xff]
  %v739 = vld [vmem:[%s2 + $0x20] sm:$0xff]
  %v740 = vld [vmem:[%s2 + $0x28] sm:$0xff]
  %v741 = vld [vmem:[%s2 + $0x30] sm:$0xff]
  %v742 = vld [vmem:[%s2 + $0x38] sm:$0xff]
  %v744 = vsel %vm38, %v727, 0
  %746 = vmatprep.subr.mxu0 0.0
  %747 = vmatpush1.msra.mxu0 %v735
  %748 = vmatprep.subr.mxu0 0.0
  %749 = vmatpush1.msra.mxu0 0.0
  %750 = vmatprep.subr.mxu0 0.0
  %751 = vmatpush1.msra.mxu0 0.0
  %752 = vmatprep.subr.mxu0 0.0
  %753 = vmatpush1.msra.mxu0 0.0
  %754 = vmatprep.subr.mxu0 0.0
  %755 = vmatpush1.msra.mxu0 0.0
  %756 = vmatprep.subr.mxu0 0.0
  %757 = vmatpush1.msra.mxu0 0.0
  %758 = vmatprep.subr.mxu0 0.0
  %759 = vmatpush1.msra.mxu0 0.0
  %760 = vmatprep.subr.mxu0 0.0
  %761 = vmatpush1.msra.mxu0 0.0
  %762 = vmatprep.subr.mxu0 0.0
  %763 = vmatpush1.msra.mxu0 0.0
  %764 = vmatprep.subr.mxu0 0.0
  %765 = vmatpush1.msra.mxu0 0.0
  %766 = vmatprep.subr.mxu0 0.0
  %767 = vmatpush1.msra.mxu0 0.0
  %768 = vmatprep.subr.mxu0 0.0
  %769 = vmatpush1.msra.mxu0 0.0
  %770 = vmatprep.subr.mxu0 0.0
  %771 = vmatpush1.msra.mxu0 0.0
  %772 = vmatprep.subr.mxu0 0.0
  %773 = vmatpush1.msra.mxu0 0.0
  %774 = vmatprep.subr.mxu0 0.0
  %775 = vmatpush1.msra.mxu0 0.0
  %776 = vmatprep.subr.mxu0 0.0
  %777 = vmatpush1.msra.mxu0 0.0
  %778 = vmatprep.subr.mxu0 0.0
  %779 = vmatpush1.msra.mxu0 0.0
  %780 = vmatprep.subr.mxu0 0.0
  %781 = vmatpush1.msra.mxu0 0.0
  %782 = vmatprep.subr.mxu0 0.0
  %783 = vmatpush1.msra.mxu0 0.0
  %784 = vmatprep.subr.mxu0 0.0
  %785 = vmatpush1.msra.mxu0 0.0
  %786 = vmatprep.subr.mxu0 0.0
  %787 = vmatpush1.msra.mxu0 0.0
  %788 = vmatprep.subr.mxu0 0.0
  %789 = vmatpush1.msra.mxu0 0.0
  %790 = vmatprep.subr.mxu0 0.0
  %791 = vmatpush1.msra.mxu0 0.0
  %792 = vmatprep.subr.mxu0 0.0
  %793 = vmatpush1.msra.mxu0 0.0
  %794 = vmatprep.subr.mxu0 0.0
  %795 = vmatpush1.msra.mxu0 0.0
  %796 = vmatprep.subr.mxu0 0.0
  %797 = vmatpush1.msra.mxu0 0.0
  %798 = vmatprep.subr.mxu0 0.0
  %799 = vmatpush1.msra.mxu0 0.0
  %800 = vmatprep.subr.mxu0 0.0
  %801 = vmatpush1.msra.mxu0 0.0
  %802 = vmatprep.subr.mxu0 0.0
  %803 = vmatpush1.msra.mxu0 0.0
  %804 = vmatprep.subr.mxu0 0.0
  %805 = vmatpush1.msra.mxu0 0.0
  %806 = vmatprep.subr.mxu0 0.0
  %807 = vmatpush1.msra.mxu0 0.0
  %808 = vmatprep.subr.mxu0 0.0
  %809 = vmatpush1.msra.mxu0 0.0
  %810 = vmatprep.mubr.f32.mxu0 0.0
  %811 = vmatmul.mubr.f32.gmra.mrb[0].mxu0 %v744
  %v812 = vpop.f32.mrb[0].mxu0
  %v813 = vadd.f32 0.0, %v812
  %v814 = vpop.f32.mrb[0].mxu0
  %815 = vdwg.mxu0
  %v817 = vsel %vm38, %v728, 0
  %819 = vmatprep.subr.mxu0 0.0
  %820 = vmatpush1.msra.mxu0 %v736
  %821 = vmatprep.subr.mxu0 0.0
  %822 = vmatpush1.msra.mxu0 0.0
  %823 = vmatprep.subr.mxu0 0.0
  %824 = vmatpush1.msra.mxu0 0.0
  %825 = vmatprep.subr.mxu0 0.0
  %826 = vmatpush1.msra.mxu0 0.0
  %827 = vmatprep.subr.mxu0 0.0
  %828 = vmatpush1.msra.mxu0 0.0
  %829 = vmatprep.subr.mxu0 0.0
  %830 = vmatpush1.msra.mxu0 0.0
  %831 = vmatprep.subr.mxu0 0.0
  %832 = vmatpush1.msra.mxu0 0.0
  %833 = vmatprep.subr.mxu0 0.0
  %834 = vmatpush1.msra.mxu0 0.0
  %835 = vmatprep.subr.mxu0 0.0
  %836 = vmatpush1.msra.mxu0 0.0
  %837 = vmatprep.subr.mxu0 0.0
  %838 = vmatpush1.msra.mxu0 0.0
  %839 = vmatprep.subr.mxu0 0.0
  %840 = vmatpush1.msra.mxu0 0.0
  %841 = vmatprep.subr.mxu0 0.0
  %842 = vmatpush1.msra.mxu0 0.0
  %843 = vmatprep.subr.mxu0 0.0
  %844 = vmatpush1.msra.mxu0 0.0
  %845 = vmatprep.subr.mxu0 0.0
  %846 = vmatpush1.msra.mxu0 0.0
  %847 = vmatprep.subr.mxu0 0.0
  %848 = vmatpush1.msra.mxu0 0.0
  %849 = vmatprep.subr.mxu0 0.0
  %850 = vmatpush1.msra.mxu0 0.0
  %851 = vmatprep.subr.mxu0 0.0
  %852 = vmatpush1.msra.mxu0 0.0
  %853 = vmatprep.subr.mxu0 0.0
  %854 = vmatpush1.msra.mxu0 0.0
  %855 = vmatprep.subr.mxu0 0.0
  %856 = vmatpush1.msra.mxu0 0.0
  %857 = vmatprep.subr.mxu0 0.0
  %858 = vmatpush1.msra.mxu0 0.0
  %859 = vmatprep.subr.mxu0 0.0
  %860 = vmatpush1.msra.mxu0 0.0
  %861 = vmatprep.subr.mxu0 0.0
  %862 = vmatpush1.msra.mxu0 0.0
  %863 = vmatprep.subr.mxu0 0.0
  %864 = vmatpush1.msra.mxu0 0.0
  %865 = vmatprep.subr.mxu0 0.0
  %866 = vmatpush1.msra.mxu0 0.0
  %867 = vmatprep.subr.mxu0 0.0
  %868 = vmatpush1.msra.mxu0 0.0
  %869 = vmatprep.subr.mxu0 0.0
  %870 = vmatpush1.msra.mxu0 0.0
  %871 = vmatprep.subr.mxu0 0.0
  %872 = vmatpush1.msra.mxu0 0.0
  %873 = vmatprep.subr.mxu0 0.0
  %874 = vmatpush1.msra.mxu0 0.0
  %875 = vmatprep.subr.mxu0 0.0
  %876 = vmatpush1.msra.mxu0 0.0
  %877 = vmatprep.subr.mxu0 0.0
  %878 = vmatpush1.msra.mxu0 0.0
  %879 = vmatprep.subr.mxu0 0.0
  %880 = vmatpush1.msra.mxu0 0.0
  %881 = vmatprep.subr.mxu0 0.0
  %882 = vmatpush1.msra.mxu0 0.0
  %883 = vmatprep.mubr.f32.mxu0 0.0
  %884 = vmatmul.mubr.f32.gmra.mrb[0].mxu0 %v817
  %v885 = vpop.f32.mrb[0].mxu0
  %v886 = vadd.f32 0.0, %v885
  %v887 = vpop.f32.mrb[0].mxu0
  %888 = vdwg.mxu0
  %v890 = vsel %vm38, %v729, 0
  %892 = vmatprep.subr.mxu0 0.0
  %893 = vmatpush1.msra.mxu0 %v737
  %894 = vmatprep.subr.mxu0 0.0
  %895 = vmatpush1.msra.mxu0 0.0
  %896 = vmatprep.subr.mxu0 0.0
  %897 = vmatpush1.msra.mxu0 0.0
  %898 = vmatprep.subr.mxu0 0.0
  %899 = vmatpush1.msra.mxu0 0.0
  %900 = vmatprep.subr.mxu0 0.0
  %901 = vmatpush1.msra.mxu0 0.0
  %902 = vmatprep.subr.mxu0 0.0
  %903 = vmatpush1.msra.mxu0 0.0
  %904 = vmatprep.subr.mxu0 0.0
  %905 = vmatpush1.msra.mxu0 0.0
  %906 = vmatprep.subr.mxu0 0.0
  %907 = vmatpush1.msra.mxu0 0.0
  %908 = vmatprep.subr.mxu0 0.0
  %909 = vmatpush1.msra.mxu0 0.0
  %910 = vmatprep.subr.mxu0 0.0
  %911 = vmatpush1.msra.mxu0 0.0
  %912 = vmatprep.subr.mxu0 0.0
  %913 = vmatpush1.msra.mxu0 0.0
  %914 = vmatprep.subr.mxu0 0.0
  %915 = vmatpush1.msra.mxu0 0.0
  %916 = vmatprep.subr.mxu0 0.0
  %917 = vmatpush1.msra.mxu0 0.0
  %918 = vmatprep.subr.mxu0 0.0
  %919 = vmatpush1.msra.mxu0 0.0
  %920 = vmatprep.subr.mxu0 0.0
  %921 = vmatpush1.msra.mxu0 0.0
  %922 = vmatprep.subr.mxu0 0.0
  %923 = vmatpush1.msra.mxu0 0.0
  %924 = vmatprep.subr.mxu0 0.0
  %925 = vmatpush1.msra.mxu0 0.0
  %926 = vmatprep.subr.mxu0 0.0
  %927 = vmatpush1.msra.mxu0 0.0
  %928 = vmatprep.subr.mxu0 0.0
  %929 = vmatpush1.msra.mxu0 0.0
  %930 = vmatprep.subr.mxu0 0.0
  %931 = vmatpush1.msra.mxu0 0.0
  %932 = vmatprep.subr.mxu0 0.0
  %933 = vmatpush1.msra.mxu0 0.0
  %934 = vmatprep.subr.mxu0 0.0
  %935 = vmatpush1.msra.mxu0 0.0
  %936 = vmatprep.subr.mxu0 0.0
  %937 = vmatpush1.msra.mxu0 0.0
  %938 = vmatprep.subr.mxu0 0.0
  %939 = vmatpush1.msra.mxu0 0.0
  %940 = vmatprep.subr.mxu0 0.0
  %941 = vmatpush1.msra.mxu0 0.0
  %942 = vmatprep.subr.mxu0 0.0
  %943 = vmatpush1.msra.mxu0 0.0
  %944 = vmatprep.subr.mxu0 0.0
  %945 = vmatpush1.msra.mxu0 0.0
  %946 = vmatprep.subr.mxu0 0.0
  %947 = vmatpush1.msra.mxu0 0.0
  %948 = vmatprep.subr.mxu0 0.0
  %949 = vmatpush1.msra.mxu0 0.0
  %950 = vmatprep.subr.mxu0 0.0
  %951 = vmatpush1.msra.mxu0 0.0
  %952 = vmatprep.subr.mxu0 0.0
  %953 = vmatpush1.msra.mxu0 0.0
  %954 = vmatprep.subr.mxu0 0.0
  %955 = vmatpush1.msra.mxu0 0.0
  %956 = vmatprep.mubr.f32.mxu0 0.0
  %957 = vmatmul.mubr.f32.gmra.mrb[0].mxu0 %v890
  %v958 = vpop.f32.mrb[0].mxu0
  %v959 = vadd.f32 0.0, %v958
  %v960 = vpop.f32.mrb[0].mxu0
  %961 = vdwg.mxu0
  %v963 = vsel %vm38, %v730, 0
  %965 = vmatprep.subr.mxu0 0.0
  %966 = vmatpush1.msra.mxu0 %v738
  %967 = vmatprep.subr.mxu0 0.0
  %968 = vmatpush1.msra.mxu0 0.0
  %969 = vmatprep.subr.mxu0 0.0
  %970 = vmatpush1.msra.mxu0 0.0
  %971 = vmatprep.subr.mxu0 0.0
  %972 = vmatpush1.msra.mxu0 0.0
  %973 = vmatprep.subr.mxu0 0.0
  %974 = vmatpush1.msra.mxu0 0.0
  %975 = vmatprep.subr.mxu0 0.0
  %976 = vmatpush1.msra.mxu0 0.0
  %977 = vmatprep.subr.mxu0 0.0
  %978 = vmatpush1.msra.mxu0 0.0
  %979 = vmatprep.subr.mxu0 0.0
  %980 = vmatpush1.msra.mxu0 0.0
  %981 = vmatprep.subr.mxu0 0.0
  %982 = vmatpush1.msra.mxu0 0.0
  %983 = vmatprep.subr.mxu0 0.0
  %984 = vmatpush1.msra.mxu0 0.0
  %985 = vmatprep.subr.mxu0 0.0
  %986 = vmatpush1.msra.mxu0 0.0
  %987 = vmatprep.subr.mxu0 0.0
  %988 = vmatpush1.msra.mxu0 0.0
  %989 = vmatprep.subr.mxu0 0.0
  %990 = vmatpush1.msra.mxu0 0.0
  %991 = vmatprep.subr.mxu0 0.0
  %992 = vmatpush1.msra.mxu0 0.0
  %993 = vmatprep.subr.mxu0 0.0
  %994 = vmatpush1.msra.mxu0 0.0
  %995 = vmatprep.subr.mxu0 0.0
  %996 = vmatpush1.msra.mxu0 0.0
  %997 = vmatprep.subr.mxu0 0.0
  %998 = vmatpush1.msra.mxu0 0.0
  %999 = vmatprep.subr.mxu0 0.0
  %1000 = vmatpush1.msra.mxu0 0.0
  %1001 = vmatprep.subr.mxu0 0.0
  %1002 = vmatpush1.msra.mxu0 0.0
  %1003 = vmatprep.subr.mxu0 0.0
  %1004 = vmatpush1.msra.mxu0 0.0
  %1005 = vmatprep.subr.mxu0 0.0
  %1006 = vmatpush1.msra.mxu0 0.0
  %1007 = vmatprep.subr.mxu0 0.0
  %1008 = vmatpush1.msra.mxu0 0.0
  %1009 = vmatprep.subr.mxu0 0.0
  %1010 = vmatpush1.msra.mxu0 0.0
  %1011 = vmatprep.subr.mxu0 0.0
  %1012 = vmatpush1.msra.mxu0 0.0
  %1013 = vmatprep.subr.mxu0 0.0
  %1014 = vmatpush1.msra.mxu0 0.0
  %1015 = vmatprep.subr.mxu0 0.0
  %1016 = vmatpush1.msra.mxu0 0.0
  %1017 = vmatprep.subr.mxu0 0.0
  %1018 = vmatpush1.msra.mxu0 0.0
  %1019 = vmatprep.subr.mxu0 0.0
  %1020 = vmatpush1.msra.mxu0 0.0
  %1021 = vmatprep.subr.mxu0 0.0
  %1022 = vmatpush1.msra.mxu0 0.0
  %1023 = vmatprep.subr.mxu0 0.0
  %1024 = vmatpush1.msra.mxu0 0.0
  %1025 = vmatprep.subr.mxu0 0.0
  %1026 = vmatpush1.msra.mxu0 0.0
  %1027 = vmatprep.subr.mxu0 0.0
  %1028 = vmatpush1.msra.mxu0 0.0
  %1029 = vmatprep.mubr.f32.mxu0 0.0
  %1030 = vmatmul.mubr.f32.gmra.mrb[0].mxu0 %v963
  %v1031 = vpop.f32.mrb[0].mxu0
  %v1032 = vadd.f32 0.0, %v1031
  %v1033 = vpop.f32.mrb[0].mxu0
  %1034 = vdwg.mxu0
  %v1036 = vsel %vm38, %v731, 0
  %1038 = vmatprep.subr.mxu0 0.0
  %1039 = vmatpush1.msra.mxu0 %v739
  %1040 = vmatprep.subr.mxu0 0.0
  %1041 = vmatpush1.msra.mxu0 0.0
  %1042 = vmatprep.subr.mxu0 0.0
  %1043 = vmatpush1.msra.mxu0 0.0
  %1044 = vmatprep.subr.mxu0 0.0
  %1045 = vmatpush1.msra.mxu0 0.0
  %1046 = vmatprep.subr.mxu0 0.0
  %1047 = vmatpush1.msra.mxu0 0.0
  %1048 = vmatprep.subr.mxu0 0.0
  %1049 = vmatpush1.msra.mxu0 0.0
  %1050 = vmatprep.subr.mxu0 0.0
  %1051 = vmatpush1.msra.mxu0 0.0
  %1052 = vmatprep.subr.mxu0 0.0
  %1053 = vmatpush1.msra.mxu0 0.0
  %1054 = vmatprep.subr.mxu0 0.0
  %1055 = vmatpush1.msra.mxu0 0.0
  %1056 = vmatprep.subr.mxu0 0.0
  %1057 = vmatpush1.msra.mxu0 0.0
  %1058 = vmatprep.subr.mxu0 0.0
  %1059 = vmatpush1.msra.mxu0 0.0
  %1060 = vmatprep.subr.mxu0 0.0
  %1061 = vmatpush1.msra.mxu0 0.0
  %1062 = vmatprep.subr.mxu0 0.0
  %1063 = vmatpush1.msra.mxu0 0.0
  %1064 = vmatprep.subr.mxu0 0.0
  %1065 = vmatpush1.msra.mxu0 0.0
  %1066 = vmatprep.subr.mxu0 0.0
  %1067 = vmatpush1.msra.mxu0 0.0
  %1068 = vmatprep.subr.mxu0 0.0
  %1069 = vmatpush1.msra.mxu0 0.0
  %1070 = vmatprep.subr.mxu0 0.0
  %1071 = vmatpush1.msra.mxu0 0.0
  %1072 = vmatprep.subr.mxu0 0.0
  %1073 = vmatpush1.msra.mxu0 0.0
  %1074 = vmatprep.subr.mxu0 0.0
  %1075 = vmatpush1.msra.mxu0 0.0
  %1076 = vmatprep.subr.mxu0 0.0
  %1077 = vmatpush1.msra.mxu0 0.0
  %1078 = vmatprep.subr.mxu0 0.0
  %1079 = vmatpush1.msra.mxu0 0.0
  %1080 = vmatprep.subr.mxu0 0.0
  %1081 = vmatpush1.msra.mxu0 0.0
  %1082 = vmatprep.subr.mxu0 0.0
  %1083 = vmatpush1.msra.mxu0 0.0
  %1084 = vmatprep.subr.mxu0 0.0
  %1085 = vmatpush1.msra.mxu0 0.0
  %1086 = vmatprep.subr.mxu0 0.0
  %1087 = vmatpush1.msra.mxu0 0.0
  %1088 = vmatprep.subr.mxu0 0.0
  %1089 = vmatpush1.msra.mxu0 0.0
  %1090 = vmatprep.subr.mxu0 0.0
  %1091 = vmatpush1.msra.mxu0 0.0
  %1092 = vmatprep.subr.mxu0 0.0
  %1093 = vmatpush1.msra.mxu0 0.0
  %1094 = vmatprep.subr.mxu0 0.0
  %1095 = vmatpush1.msra.mxu0 0.0
  %1096 = vmatprep.subr.mxu0 0.0
  %1097 = vmatpush1.msra.mxu0 0.0
  %1098 = vmatprep.subr.mxu0 0.0
  %1099 = vmatpush1.msra.mxu0 0.0
  %1100 = vmatprep.subr.mxu0 0.0
  %1101 = vmatpush1.msra.mxu0 0.0
  %1102 = vmatprep.mubr.f32.mxu0 0.0
  %1103 = vmatmul.mubr.f32.gmra.mrb[0].mxu0 %v1036
  %v1104 = vpop.f32.mrb[0].mxu0
  %v1105 = vadd.f32 0.0, %v1104
  %v1106 = vpop.f32.mrb[0].mxu0
  %1107 = vdwg.mxu0
  %v1109 = vsel %vm38, %v732, 0
  %1111 = vmatprep.subr.mxu0 0.0
  %1112 = vmatpush1.msra.mxu0 %v740
  %1113 = vmatprep.subr.mxu0 0.0
  %1114 = vmatpush1.msra.mxu0 0.0
  %1115 = vmatprep.subr.mxu0 0.0
  %1116 = vmatpush1.msra.mxu0 0.0
  %1117 = vmatprep.subr.mxu0 0.0
  %1118 = vmatpush1.msra.mxu0 0.0
  %1119 = vmatprep.subr.mxu0 0.0
  %1120 = vmatpush1.msra.mxu0 0.0
  %1121 = vmatprep.subr.mxu0 0.0
  %1122 = vmatpush1.msra.mxu0 0.0
  %1123 = vmatprep.subr.mxu0 0.0
  %1124 = vmatpush1.msra.mxu0 0.0
  %1125 = vmatprep.subr.mxu0 0.0
  %1126 = vmatpush1.msra.mxu0 0.0
  %1127 = vmatprep.subr.mxu0 0.0
  %1128 = vmatpush1.msra.mxu0 0.0
  %1129 = vmatprep.subr.mxu0 0.0
  %1130 = vmatpush1.msra.mxu0 0.0
  %1131 = vmatprep.subr.mxu0 0.0
  %1132 = vmatpush1.msra.mxu0 0.0
  %1133 = vmatprep.subr.mxu0 0.0
  %1134 = vmatpush1.msra.mxu0 0.0
  %1135 = vmatprep.subr.mxu0 0.0
  %1136 = vmatpush1.msra.mxu0 0.0
  %1137 = vmatprep.subr.mxu0 0.0
  %1138 = vmatpush1.msra.mxu0 0.0
  %1139 = vmatprep.subr.mxu0 0.0
  %1140 = vmatpush1.msra.mxu0 0.0
  %1141 = vmatprep.subr.mxu0 0.0
  %1142 = vmatpush1.msra.mxu0 0.0
  %1143 = vmatprep.subr.mxu0 0.0
  %1144 = vmatpush1.msra.mxu0 0.0
  %1145 = vmatprep.subr.mxu0 0.0
  %1146 = vmatpush1.msra.mxu0 0.0
  %1147 = vmatprep.subr.mxu0 0.0
  %1148 = vmatpush1.msra.mxu0 0.0
  %1149 = vmatprep.subr.mxu0 0.0
  %1150 = vmatpush1.msra.mxu0 0.0
  %1151 = vmatprep.subr.mxu0 0.0
  %1152 = vmatpush1.msra.mxu0 0.0
  %1153 = vmatprep.subr.mxu0 0.0
  %1154 = vmatpush1.msra.mxu0 0.0
  %1155 = vmatprep.subr.mxu0 0.0
  %1156 = vmatpush1.msra.mxu0 0.0
  %1157 = vmatprep.subr.mxu0 0.0
  %1158 = vmatpush1.msra.mxu0 0.0
  %1159 = vmatprep.subr.mxu0 0.0
  %1160 = vmatpush1.msra.mxu0 0.0
  %1161 = vmatprep.subr.mxu0 0.0
  %1162 = vmatpush1.msra.mxu0 0.0
  %1163 = vmatprep.subr.mxu0 0.0
  %1164 = vmatpush1.msra.mxu0 0.0
  %1165 = vmatprep.subr.mxu0 0.0
  %1166 = vmatpush1.msra.mxu0 0.0
  %1167 = vmatprep.subr.mxu0 0.0
  %1168 = vmatpush1.msra.mxu0 0.0
  %1169 = vmatprep.subr.mxu0 0.0
  %1170 = vmatpush1.msra.mxu0 0.0
  %1171 = vmatprep.subr.mxu0 0.0
  %1172 = vmatpush1.msra.mxu0 0.0
  %1173 = vmatprep.subr.mxu0 0.0
  %1174 = vmatpush1.msra.mxu0 0.0
  %1175 = vmatprep.mubr.f32.mxu0 0.0
  %1176 = vmatmul.mubr.f32.gmra.mrb[0].mxu0 %v1109
  %v1177 = vpop.f32.mrb[0].mxu0
  %v1178 = vadd.f32 0.0, %v1177
  %v1179 = vpop.f32.mrb[0].mxu0
  %1180 = vdwg.mxu0
  %v1182 = vsel %vm38, %v733, 0
  %1184 = vmatprep.subr.mxu0 0.0
  %1185 = vmatpush1.msra.mxu0 %v741
  %1186 = vmatprep.subr.mxu0 0.0
  %1187 = vmatpush1.msra.mxu0 0.0
  %1188 = vmatprep.subr.mxu0 0.0
  %1189 = vmatpush1.msra.mxu0 0.0
  %1190 = vmatprep.subr.mxu0 0.0
  %1191 = vmatpush1.msra.mxu0 0.0
  %1192 = vmatprep.subr.mxu0 0.0
  %1193 = vmatpush1.msra.mxu0 0.0
  %1194 = vmatprep.subr.mxu0 0.0
  %1195 = vmatpush1.msra.mxu0 0.0
  %1196 = vmatprep.subr.mxu0 0.0
  %1197 = vmatpush1.msra.mxu0 0.0
  %1198 = vmatprep.subr.mxu0 0.0
  %1199 = vmatpush1.msra.mxu0 0.0
  %1200 = vmatprep.subr.mxu0 0.0
  %1201 = vmatpush1.msra.mxu0 0.0
  %1202 = vmatprep.subr.mxu0 0.0
  %1203 = vmatpush1.msra.mxu0 0.0
  %1204 = vmatprep.subr.mxu0 0.0
  %1205 = vmatpush1.msra.mxu0 0.0
  %1206 = vmatprep.subr.mxu0 0.0
  %1207 = vmatpush1.msra.mxu0 0.0
  %1208 = vmatprep.subr.mxu0 0.0
  %1209 = vmatpush1.msra.mxu0 0.0
  %1210 = vmatprep.subr.mxu0 0.0
  %1211 = vmatpush1.msra.mxu0 0.0
  %1212 = vmatprep.subr.mxu0 0.0
  %1213 = vmatpush1.msra.mxu0 0.0
  %1214 = vmatprep.subr.mxu0 0.0
  %1215 = vmatpush1.msra.mxu0 0.0
  %1216 = vmatprep.subr.mxu0 0.0
  %1217 = vmatpush1.msra.mxu0 0.0
  %1218 = vmatprep.subr.mxu0 0.0
  %1219 = vmatpush1.msra.mxu0 0.0
  %1220 = vmatprep.subr.mxu0 0.0
  %1221 = vmatpush1.msra.mxu0 0.0
  %1222 = vmatprep.subr.mxu0 0.0
  %1223 = vmatpush1.msra.mxu0 0.0
  %1224 = vmatprep.subr.mxu0 0.0
  %1225 = vmatpush1.msra.mxu0 0.0
  %1226 = vmatprep.subr.mxu0 0.0
  %1227 = vmatpush1.msra.mxu0 0.0
  %1228 = vmatprep.subr.mxu0 0.0
  %1229 = vmatpush1.msra.mxu0 0.0
  %1230 = vmatprep.subr.mxu0 0.0
  %1231 = vmatpush1.msra.mxu0 0.0
  %1232 = vmatprep.subr.mxu0 0.0
  %1233 = vmatpush1.msra.mxu0 0.0
  %1234 = vmatprep.subr.mxu0 0.0
  %1235 = vmatpush1.msra.mxu0 0.0
  %1236 = vmatprep.subr.mxu0 0.0
  %1237 = vmatpush1.msra.mxu0 0.0
  %1238 = vmatprep.subr.mxu0 0.0
  %1239 = vmatpush1.msra.mxu0 0.0
  %1240 = vmatprep.subr.mxu0 0.0
  %1241 = vmatpush1.msra.mxu0 0.0
  %1242 = vmatprep.subr.mxu0 0.0
  %1243 = vmatpush1.msra.mxu0 0.0
  %1244 = vmatprep.subr.mxu0 0.0
  %1245 = vmatpush1.msra.mxu0 0.0
  %1246 = vmatprep.subr.mxu0 0.0
  %1247 = vmatpush1.msra.mxu0 0.0
  %1248 = vmatprep.mubr.f32.mxu0 0.0
  %1249 = vmatmul.mubr.f32.gmra.mrb[0].mxu0 %v1182
  %v1250 = vpop.f32.mrb[0].mxu0
  %v1251 = vadd.f32 0.0, %v1250
  %v1252 = vpop.f32.mrb[0].mxu0
  %1253 = vdwg.mxu0
  %v1255 = vsel %vm38, %v734, 0
  %1257 = vmatprep.subr.mxu0 0.0
  %1258 = vmatpush1.msra.mxu0 %v742
  %1259 = vmatprep.subr.mxu0 0.0
  %1260 = vmatpush1.msra.mxu0 0.0
  %1261 = vmatprep.subr.mxu0 0.0
  %1262 = vmatpush1.msra.mxu0 0.0
  %1263 = vmatprep.subr.mxu0 0.0
  %1264 = vmatpush1.msra.mxu0 0.0
  %1265 = vmatprep.subr.mxu0 0.0
  %1266 = vmatpush1.msra.mxu0 0.0
  %1267 = vmatprep.subr.mxu0 0.0
  %1268 = vmatpush1.msra.mxu0 0.0
  %1269 = vmatprep.subr.mxu0 0.0
  %1270 = vmatpush1.msra.mxu0 0.0
  %1271 = vmatprep.subr.mxu0 0.0
  %1272 = vmatpush1.msra.mxu0 0.0
  %1273 = vmatprep.subr.mxu0 0.0
  %1274 = vmatpush1.msra.mxu0 0.0
  %1275 = vmatprep.subr.mxu0 0.0
  %1276 = vmatpush1.msra.mxu0 0.0
  %1277 = vmatprep.subr.mxu0 0.0
  %1278 = vmatpush1.msra.mxu0 0.0
  %1279 = vmatprep.subr.mxu0 0.0
  %1280 = vmatpush1.msra.mxu0 0.0
  %1281 = vmatprep.subr.mxu0 0.0
  %1282 = vmatpush1.msra.mxu0 0.0
  %1283 = vmatprep.subr.mxu0 0.0
  %1284 = vmatpush1.msra.mxu0 0.0
  %1285 = vmatprep.subr.mxu0 0.0
  %1286 = vmatpush1.msra.mxu0 0.0
  %1287 = vmatprep.subr.mxu0 0.0
  %1288 = vmatpush1.msra.mxu0 0.0
  %1289 = vmatprep.subr.mxu0 0.0
  %1290 = vmatpush1.msra.mxu0 0.0
  %1291 = vmatprep.subr.mxu0 0.0
  %1292 = vmatpush1.msra.mxu0 0.0
  %1293 = vmatprep.subr.mxu0 0.0
  %1294 = vmatpush1.msra.mxu0 0.0
  %1295 = vmatprep.subr.mxu0 0.0
  %1296 = vmatpush1.msra.mxu0 0.0
  %1297 = vmatprep.subr.mxu0 0.0
  %1298 = vmatpush1.msra.mxu0 0.0
  %1299 = vmatprep.subr.mxu0 0.0
  %1300 = vmatpush1.msra.mxu0 0.0
  %1301 = vmatprep.subr.mxu0 0.0
  %1302 = vmatpush1.msra.mxu0 0.0
  %1303 = vmatprep.subr.mxu0 0.0
  %1304 = vmatpush1.msra.mxu0 0.0
  %1305 = vmatprep.subr.mxu0 0.0
  %1306 = vmatpush1.msra.mxu0 0.0
  %1307 = vmatprep.subr.mxu0 0.0
  %1308 = vmatpush1.msra.mxu0 0.0
  %1309 = vmatprep.subr.mxu0 0.0
  %1310 = vmatpush1.msra.mxu0 0.0
  %1311 = vmatprep.subr.mxu0 0.0
  %1312 = vmatpush1.msra.mxu0 0.0
  %1313 = vmatprep.subr.mxu0 0.0
  %1314 = vmatpush1.msra.mxu0 0.0
  %1315 = vmatprep.subr.mxu0 0.0
  %1316 = vmatpush1.msra.mxu0 0.0
  %1317 = vmatprep.subr.mxu0 0.0
  %1318 = vmatpush1.msra.mxu0 0.0
  %1319 = vmatprep.subr.mxu0 0.0
  %1320 = vmatpush1.msra.mxu0 0.0
  %1321 = vmatprep.mubr.f32.mxu0 0.0
  %1322 = vmatmul.mubr.f32.gmra.mrb[0].mxu0 %v1255
  %v1323 = vpop.f32.mrb[0].mxu0
  %v1324 = vadd.f32 0.0, %v1323
  %v1325 = vpop.f32.mrb[0].mxu0
  %1326 = vdwg.mxu0
  %1327 = vst.msk [vmem:[%s3] sm:$0xff] %vm38, %v813
  %1328 = vst.msk [vmem:[%s3 + $0x8] sm:$0xff] %vm38, %v886
  %1329 = vst.msk [vmem:[%s3 + $0x10] sm:$0xff] %vm38, %v959
  %1330 = vst.msk [vmem:[%s3 + $0x18] sm:$0xff] %vm38, %v1032
  %1331 = vst.msk [vmem:[%s3 + $0x20] sm:$0xff] %vm38, %v1105
  %1332 = vst.msk [vmem:[%s3 + $0x28] sm:$0xff] %vm38, %v1178
  %1333 = vst.msk [vmem:[%s3 + $0x30] sm:$0xff] %vm38, %v1251
  %1334 = vst.msk [vmem:[%s3 + $0x38] sm:$0xff] %vm38, %v1324
  // Predicated region
  $region14: #{_lambda_.22} parent=0 // pred_check
    _
  $region15: #{_lambda_.22} parent=0 // pred_check_branch
    %1336 = sbr.rel (0) target = $region17
  $region16: #{_lambda_.22} parent=0 // pred_region
    _
  $region17: #{_lambda_.22} parent=0 // pred_fallthru
    _
  // Predicated region
  $region18: #{_lambda_.22} parent=0 // pred_check
    _
  $region19: #{_lambda_.22} parent=0 // pred_check_branch
    %1338 = sbr.rel (0) target = $region21
  $region20: #{_lambda_.22} parent=0 // pred_region
    _
  $region21: #{_lambda_.22} parent=0 // pred_fallthru
    _

</llo_original>
